<compile_context>
chip_gen: v7x
topology: tpu7x:2x2x1
jax: 0.10.0
libtpu: 0.0.40
codegen_flags: <defaults>
</compile_context>

<pallas_src>
import numpy as np
import jax
import jax.numpy as jnp
from jax import lax
from jax.experimental import pallas as pl
from jax.experimental.pallas import tpu as pltpu

# Static geometry implied by the module (28x28 input, latent_dim = 64).
H_IN = 28
H1 = 14            # conv1 output spatial
H2 = 7             # conv2 output spatial
C1 = 32            # conv1 out channels
C2 = 64            # conv2 out channels
PH = 8             # polyphase grid side (padded conv1 output 16x16 -> 4 phases of 8x8)
PROWS = PH * (PH + 1)   # 72 = 8x8 phase grid (flattened) + 8 always-zero pad rows
MPAD = PH * H2          # 56 rows per phase slab / conv2 accumulator (7 valid + 1 pad per 8)


# ----------------------------------------------------------------------------
# Fused encoder kernel: one grid step == one batch element.
# ----------------------------------------------------------------------------
def _encoder_kernel(p1_ref, w1_ref, w2_ref, wl_ref, bl_ref, o_ref,
                    pb0, pb1, pb2, pb3, flat_ref):
    pbufs = [pb0, pb1, pb2, pb3]          # (72, 32) f32 polyphase buffers of conv1 out
    # Zero every iteration (scratch persists across grid steps and across cores).
    for pb in pbufs:
        pb[...] = jnp.zeros_like(pb)

    # ---- conv1 + ReLU: 4 GEMMs (one per output polyphase) -------------------
    p1 = p1_ref[0]                        # (224, 9*Cin) bf16, phase-ordered patches
    w1 = w1_ref[...]                      # (9*Cin, 32)  bf16
    for p in range(4):
        a, b = p // 2, p % 2
        s0 = (1 - a) * 8 + (1 - b)        # contiguous slab offset in the phase buffer
        patches = p1[p * MPAD:(p + 1) * MPAD, :]                     # (56, 9*Cin)
        acc = jnp.dot(patches, w1, preferred_element_type=jnp.float32)
        pbufs[p][s0:s0 + MPAD, :] = jnp.maximum(acc, 0.0)            # (56, 32) f32

    # ---- conv2 + ReLU: in-VMEM im2col via 9 contiguous slab reads -----------
    acc2 = jnp.zeros((MPAD, C2), jnp.float32)
    for kh in range(3):
        for kw in range(3):
            p = 2 * (kh % 2) + (kw % 2)
            s0 = (kh // 2) * 8 + (kw // 2)
            lhs = pbufs[p][s0:s0 + MPAD, :].astype(jnp.bfloat16)     # (56, 32)
            acc2 = acc2 + jnp.dot(lhs, w2_ref[kh * 3 + kw],
                                  preferred_element_type=jnp.float32)
    y2 = jnp.maximum(acc2, 0.0)           # (56, 64) f32; valid rows are t = 8*oh + ow, ow<7

    # ---- flatten the 49 valid rows into a lane-major (1, 3136) vector -------
    # (torch's NCHW .view ordering is pre-folded into the permuted linear weight)
    for oh in range(H2):
        for ow in range(H2):
            t = 8 * oh + ow
            k = H2 * oh + ow
            flat_ref[:, C2 * k:C2 * (k + 1)] = y2[t:t + 1, :]

    # ---- Linear(3136 -> 2*latent) + bias ------------------------------------
    flat = flat_ref[...].astype(jnp.bfloat16)                        # (1, 3136)
    out = jnp.dot(flat, wl_ref[...], preferred_element_type=jnp.float32)
    o_ref[0] = out + bl_ref[...]                                     # (1, 2*latent) f32


# ----------------------------------------------------------------------------
# Static index table: conv1 im2col rows reordered by output polyphase, with an
# all-zero row after every 7 real rows so the GEMM output maps onto contiguous
# 56-row slabs of the padded polyphase buffers.
# ----------------------------------------------------------------------------
def _phase_tables():
    idx = np.zeros((4, MPAD), np.int32)
    msk = np.zeros((4, MPAD, 1), np.float32)
    for a in (0, 1):
        for b in (0, 1):
            p = 2 * a + b
            for q in range(H2):
                for r in range(H2):
                    i = 2 * (q + (1 - a)) + a - 1
                    j = 2 * (r + (1 - b)) + b - 1
                    idx[p, 8 * q + r] = i * H1 + j
                    msk[p, 8 * q + r, 0] = 1.0
    return idx.reshape(-1), msk.reshape(1, 4 * MPAD, 1)


_PHASE_IDX, _PHASE_MSK = _phase_tables()


# ----------------------------------------------------------------------------
# One-time parameter preparation (weight layout permutations, bf16 cast).
# ----------------------------------------------------------------------------
def prepare_params(params):
    cin = params["conv1_w"].shape[1]
    lat2 = params["lin_w"].shape[0]
    w1 = jnp.transpose(params["conv1_w"], (2, 3, 1, 0)).reshape(9 * cin, C1)
    w2 = jnp.transpose(params["conv2_w"], (2, 3, 1, 0)).reshape(9, C1, C2)
    # Fold torch's NCHW flatten (index c*49 + s) into the weight: rows ordered s*64 + c.
    wl = jnp.transpose(params["lin_w"].reshape(lat2, C2, H2 * H2),
                       (2, 1, 0)).reshape(H2 * H2 * C2, lat2)
    return {
        "w1": w1.astype(jnp.bfloat16),
        "w2": w2.astype(jnp.bfloat16),
        "wl": wl.astype(jnp.bfloat16),
        "bl": params["lin_b"].reshape(1, lat2).astype(jnp.float32),
    }


# ----------------------------------------------------------------------------
# Forward pass (PyTorch semantics; input is NCHW like torch).
# ----------------------------------------------------------------------------
@jax.jit
def encoder_forward(prepped, x_nchw):
    B, cin = x_nchw.shape[0], x_nchw.shape[1]
    lat2 = prepped["bl"].shape[1]

    # conv1 im2col on the raw input only (tiny; C_in=1), phase-ordered + padded.
    x = jnp.transpose(x_nchw, (0, 2, 3, 1)).astype(jnp.float32)      # NHWC
    xp = jnp.pad(x, ((0, 0), (1, 1), (1, 1), (0, 0)))
    cols = []
    for kh in range(3):
        for kw in range(3):
            cols.append(xp[:, kh:kh + 2 * H1:2, kw:kw + 2 * H1:2, :])  # (B,14,14,cin)
    patches = jnp.concatenate(cols, axis=-1).reshape(B, H1 * H1, 9 * cin)
    p1 = (patches[:, _PHASE_IDX, :] * _PHASE_MSK).astype(jnp.bfloat16)  # (B,224,9*cin)

    out = pl.pallas_call(
        _encoder_kernel,
        out_shape=jax.ShapeDtypeStruct((B, 1, lat2), jnp.float32),
        grid_spec=pltpu.PrefetchScalarGridSpec(
            num_scalar_prefetch=0,
            grid=(B,),
            in_specs=[
                pl.BlockSpec((1, 4 * MPAD, 9 * cin), lambda b: (b, 0, 0)),
                pl.BlockSpec((9 * cin, C1), lambda b: (0, 0)),
                pl.BlockSpec((9, C1, C2), lambda b: (0, 0, 0)),
                pl.BlockSpec((H2 * H2 * C2, lat2), lambda b: (0, 0)),
                pl.BlockSpec((1, lat2), lambda b: (0, 0)),
            ],
            out_specs=pl.BlockSpec((1, 1, lat2), lambda b: (b, 0, 0)),
            scratch_shapes=[pltpu.VMEM((PROWS, C1), jnp.float32)] * 4
                         + [pltpu.VMEM((1, H2 * H2 * C2), jnp.float32)],
        ),
        compiler_params=pltpu.CompilerParams(
            dimension_semantics=("parallel",)),
    )(p1, prepped["w1"], prepped["w2"], prepped["wl"], prepped["bl"])
    return out.reshape(B, lat2)


# ----------------------------------------------------------------------------
# Reference with matching bf16 casts (pure JAX, for correctness check).
# ----------------------------------------------------------------------------
def encoder_reference(params, x_nchw):
    bf16, f32 = jnp.bfloat16, jnp.float32
    w1 = params["conv1_w"].astype(bf16)
    w2 = params["conv2_w"].astype(bf16)
    wl = params["lin_w"].astype(bf16)
    x = x_nchw.astype(bf16)
    dn = lax.conv_dimension_numbers(x.shape, w1.shape, ("NCHW", "OIHW", "NCHW"))
    y = lax.conv_general_dilated(x, w1, (2, 2), [(1, 1), (1, 1)],
                                 dimension_numbers=dn, preferred_element_type=f32)
    y = jnp.maximum(y, 0.0).astype(bf16)
    dn2 = lax.conv_dimension_numbers(y.shape, w2.shape, ("NCHW", "OIHW", "NCHW"))
    y = lax.conv_general_dilated(y, w2, (2, 2), [(1, 1), (1, 1)],
                                 dimension_numbers=dn2, preferred_element_type=f32)
    y = jnp.maximum(y, 0.0).astype(bf16)
    flat = y.reshape(y.shape[0], -1)       # NCHW flatten == torch .view(-1, 7*7*64)
    return jnp.dot(flat, wl.T, preferred_element_type=f32) + params["lin_b"]


# ----------------------------------------------------------------------------
# Main
# ----------------------------------------------------------------------------
if __name__ == "__main__":
    # 7*7*64 flatten forces a 28x28 spatial input and latent_dim == 64.
    batch, input_channel, latent_dim = 2, 1, 64

    key = jax.random.PRNGKey(0)
    k_x, k_c1, k_c2, k_lw, k_lb = jax.random.split(key, 5)

    x = jax.random.normal(k_x, (batch, input_channel, H_IN, H_IN), jnp.float32)
    params = {
        "conv1_w": jax.random.normal(k_c1, (C1, input_channel, 3, 3), jnp.float32) * 0.1,
        "conv2_w": jax.random.normal(k_c2, (C2, C1, 3, 3), jnp.float32) * 0.05,
        "lin_w":   jax.random.normal(k_lw, (2 * latent_dim, H2 * H2 * C2), jnp.float32) * 0.02,
        "lin_b":   jax.random.normal(k_lb, (2 * latent_dim,), jnp.float32) * 0.01,
    }

    prepped = prepare_params(params)
    out = jax.block_until_ready(encoder_forward(prepped, x))
    assert out.shape == (batch, 2 * latent_dim), out.shape

    ref = jax.block_until_ready(encoder_reference(params, x)).astype(jnp.float32)
    max_err = float(jnp.max(jnp.abs(out - ref)))
    assert jnp.allclose(out, ref, atol=1e-2, rtol=1e-2), max_err

    print("KERNEL_OK")
</pallas_src>

<mosaic_0001>
module attributes {stable_mosaic.version = 11 : i64} {
  func.func @_encoder_kernel(%arg0: i32, %arg1: memref<1x224x9xbf16, #tpu.memory_space<vmem>>, %arg2: memref<9x32xbf16, #tpu.memory_space<vmem>>, %arg3: memref<9x32x64xbf16, #tpu.memory_space<vmem>>, %arg4: memref<3136x128xbf16, #tpu.memory_space<vmem>>, %arg5: memref<1x128xf32, #tpu.memory_space<vmem>>, %arg6: memref<1x1x128xf32, #tpu.memory_space<vmem>>, %arg7: memref<72x32xf32, #tpu.memory_space<vmem>>, %arg8: memref<72x32xf32, #tpu.memory_space<vmem>>, %arg9: memref<72x32xf32, #tpu.memory_space<vmem>>, %arg10: memref<72x32xf32, #tpu.memory_space<vmem>>, %arg11: memref<1x3136xf32, #tpu.memory_space<vmem>>) attributes {dimension_semantics = [#tpu.dimension_semantics<parallel>], iteration_bounds = array<i64: 2>, scalar_prefetch = 0 : i64, scratch_operands = 5 : i64, tpu.core_type = #tpu.core_type<tc>, window_params = [{transform_indices = @transform_0, window_bounds = array<i64: 1, 224, 9>}, {pipeline_mode = #tpu.pipeline_mode<synchronous>, transform_indices = @transform_1, window_bounds = array<i64: 9, 32>}, {pipeline_mode = #tpu.pipeline_mode<synchronous>, transform_indices = @transform_2, window_bounds = array<i64: 9, 32, 64>}, {pipeline_mode = #tpu.pipeline_mode<synchronous>, transform_indices = @transform_3, window_bounds = array<i64: 3136, 128>}, {pipeline_mode = #tpu.pipeline_mode<synchronous>, transform_indices = @transform_4, window_bounds = array<i64: 1, 128>}, {transform_indices = @transform_5, window_bounds = array<i64: 1, 1, 128>}]} {
    %cst = arith.constant 0.000000e+00 : f32
    %0 = vector.broadcast %cst : f32 to vector<72x32xf32>
    %c0 = arith.constant 0 : index
    %c0_0 = arith.constant 0 : index
    %1 = vector.load %arg7[%c0, %c0_0] : memref<72x32xf32, #tpu.memory_space<vmem>>, vector<72x32xf32>
    tpu.vector_store %arg7[%c0, %c0_0], %0 {strides = array<i32>} : memref<72x32xf32, #tpu.memory_space<vmem>>, vector<72x32xf32>,
    %cst_1 = arith.constant 0.000000e+00 : f32
    %2 = vector.broadcast %cst_1 : f32 to vector<72x32xf32>
    %c0_2 = arith.constant 0 : index
    %c0_3 = arith.constant 0 : index
    %3 = vector.load %arg8[%c0_2, %c0_3] : memref<72x32xf32, #tpu.memory_space<vmem>>, vector<72x32xf32>
    tpu.vector_store %arg8[%c0_2, %c0_3], %2 {strides = array<i32>} : memref<72x32xf32, #tpu.memory_space<vmem>>, vector<72x32xf32>,
    %cst_4 = arith.constant 0.000000e+00 : f32
    %4 = vector.broadcast %cst_4 : f32 to vector<72x32xf32>
    %c0_5 = arith.constant 0 : index
    %c0_6 = arith.constant 0 : index
    %5 = vector.load %arg9[%c0_5, %c0_6] : memref<72x32xf32, #tpu.memory_space<vmem>>, vector<72x32xf32>
    tpu.vector_store %arg9[%c0_5, %c0_6], %4 {strides = array<i32>} : memref<72x32xf32, #tpu.memory_space<vmem>>, vector<72x32xf32>,
    %cst_7 = arith.constant 0.000000e+00 : f32
    %6 = vector.broadcast %cst_7 : f32 to vector<72x32xf32>
    %c0_8 = arith.constant 0 : index
    %c0_9 = arith.constant 0 : index
    %7 = vector.load %arg10[%c0_8, %c0_9] : memref<72x32xf32, #tpu.memory_space<vmem>>, vector<72x32xf32>
    tpu.vector_store %arg10[%c0_8, %c0_9], %6 {strides = array<i32>} : memref<72x32xf32, #tpu.memory_space<vmem>>, vector<72x32xf32>,
    %c0_10 = arith.constant 0 : index
    %c0_11 = arith.constant 0 : index
    %c0_12 = arith.constant 0 : index
    %8 = vector.load %arg1[%c0_10, %c0_11, %c0_12] : memref<1x224x9xbf16, #tpu.memory_space<vmem>>, vector<1x224x9xbf16>
    %9 = vector.shape_cast %8 : vector<1x224x9xbf16> to vector<224x9xbf16>
    %c0_13 = arith.constant 0 : index
    %c0_14 = arith.constant 0 : index
    %10 = vector.load %arg2[%c0_13, %c0_14] : memref<9x32xbf16, #tpu.memory_space<vmem>>, vector<9x32xbf16>
    %11 = vector.extract_strided_slice %9 {offsets = [0, 0], sizes = [56, 9], strides = [1, 1]} : vector<224x9xbf16> to vector<56x9xbf16>
    %cst_15 = arith.constant dense<0.000000e+00> : vector<56x32xf32>
    %12 = tpu.matmul %11, %10, %cst_15 {dimension_numbers = #tpu.dot_dimension_numbers<[1], [0], [0], [1], [0, 0, 1, 1], [], []>} : vector<56x9xbf16>, vector<9x32xbf16>, vector<56x32xf32> -> vector<56x32xf32>
    %cst_16 = arith.constant 0.000000e+00 : f32
    %13 = vector.broadcast %cst_16 : f32 to vector<56x32xf32>
    %14 = arith.maximumf %12, %13 : vector<56x32xf32>
    %c9 = arith.constant 9 : index
    %c0_17 = arith.constant 0 : index
    %15 = vector.load %arg7[%c9, %c0_17] : memref<72x32xf32, #tpu.memory_space<vmem>>, vector<56x32xf32>
    tpu.vector_store %arg7[%c9, %c0_17], %14 {strides = array<i32>} : memref<72x32xf32, #tpu.memory_space<vmem>>, vector<56x32xf32>,
    %16 = vector.extract_strided_slice %9 {offsets = [56, 0], sizes = [56, 9], strides = [1, 1]} : vector<224x9xbf16> to vector<56x9xbf16>
    %cst_18 = arith.constant dense<0.000000e+00> : vector<56x32xf32>
    %17 = tpu.matmul %16, %10, %cst_18 {dimension_numbers = #tpu.dot_dimension_numbers<[1], [0], [0], [1], [0, 0, 1, 1], [], []>} : vector<56x9xbf16>, vector<9x32xbf16>, vector<56x32xf32> -> vector<56x32xf32>
    %cst_19 = arith.constant 0.000000e+00 : f32
    %18 = vector.broadcast %cst_19 : f32 to vector<56x32xf32>
    %19 = arith.maximumf %17, %18 : vector<56x32xf32>
    %c8 = arith.constant 8 : index
    %c0_20 = arith.constant 0 : index
    %20 = vector.load %arg8[%c8, %c0_20] : memref<72x32xf32, #tpu.memory_space<vmem>>, vector<56x32xf32>
    tpu.vector_store %arg8[%c8, %c0_20], %19 {strides = array<i32>} : memref<72x32xf32, #tpu.memory_space<vmem>>, vector<56x32xf32>,
    %21 = vector.extract_strided_slice %9 {offsets = [112, 0], sizes = [56, 9], strides = [1, 1]} : vector<224x9xbf16> to vector<56x9xbf16>
    %cst_21 = arith.constant dense<0.000000e+00> : vector<56x32xf32>
    %22 = tpu.matmul %21, %10, %cst_21 {dimension_numbers = #tpu.dot_dimension_numbers<[1], [0], [0], [1], [0, 0, 1, 1], [], []>} : vector<56x9xbf16>, vector<9x32xbf16>, vector<56x32xf32> -> vector<56x32xf32>
    %cst_22 = arith.constant 0.000000e+00 : f32
    %23 = vector.broadcast %cst_22 : f32 to vector<56x32xf32>
    %24 = arith.maximumf %22, %23 : vector<56x32xf32>
    %c1 = arith.constant 1 : index
    %c0_23 = arith.constant 0 : index
    %25 = vector.load %arg9[%c1, %c0_23] : memref<72x32xf32, #tpu.memory_space<vmem>>, vector<56x32xf32>
    tpu.vector_store %arg9[%c1, %c0_23], %24 {strides = array<i32>} : memref<72x32xf32, #tpu.memory_space<vmem>>, vector<56x32xf32>,
    %26 = vector.extract_strided_slice %9 {offsets = [168, 0], sizes = [56, 9], strides = [1, 1]} : vector<224x9xbf16> to vector<56x9xbf16>
    %cst_24 = arith.constant dense<0.000000e+00> : vector<56x32xf32>
    %27 = tpu.matmul %26, %10, %cst_24 {dimension_numbers = #tpu.dot_dimension_numbers<[1], [0], [0], [1], [0, 0, 1, 1], [], []>} : vector<56x9xbf16>, vector<9x32xbf16>, vector<56x32xf32> -> vector<56x32xf32>
    %cst_25 = arith.constant 0.000000e+00 : f32
    %28 = vector.broadcast %cst_25 : f32 to vector<56x32xf32>
    %29 = arith.maximumf %27, %28 : vector<56x32xf32>
    %c0_26 = arith.constant 0 : index
    %c0_27 = arith.constant 0 : index
    %30 = vector.load %arg10[%c0_26, %c0_27] : memref<72x32xf32, #tpu.memory_space<vmem>>, vector<56x32xf32>
    tpu.vector_store %arg10[%c0_26, %c0_27], %29 {strides = array<i32>} : memref<72x32xf32, #tpu.memory_space<vmem>>, vector<56x32xf32>,
    %cst_28 = arith.constant 0.000000e+00 : f32
    %31 = vector.broadcast %cst_28 : f32 to vector<56x64xf32>
    %c0_29 = arith.constant 0 : index
    %c0_30 = arith.constant 0 : index
    %32 = vector.load %arg7[%c0_29, %c0_30] : memref<72x32xf32, #tpu.memory_space<vmem>>, vector<56x32xf32>
    %33 = arith.truncf %32 : vector<56x32xf32> to vector<56x32xbf16>
    %c0_31 = arith.constant 0 : index
    %c0_32 = arith.constant 0 : index
    %c0_33 = arith.constant 0 : index
    %34 = vector.load %arg3[%c0_31, %c0_32, %c0_33] : memref<9x32x64xbf16, #tpu.memory_space<vmem>>, vector<1x32x64xbf16>
    %35 = vector.shape_cast %34 : vector<1x32x64xbf16> to vector<32x64xbf16>
    %cst_34 = arith.constant dense<0.000000e+00> : vector<56x64xf32>
    %36 = tpu.matmul %33, %35, %cst_34 {dimension_numbers = #tpu.dot_dimension_numbers<[1], [0], [0], [1], [0, 0, 1, 1], [], []>} : vector<56x32xbf16>, vector<32x64xbf16>, vector<56x64xf32> -> vector<56x64xf32>
    %37 = arith.addf %31, %36 : vector<56x64xf32>
    %c0_35 = arith.constant 0 : index
    %c0_36 = arith.constant 0 : index
    %38 = vector.load %arg8[%c0_35, %c0_36] : memref<72x32xf32, #tpu.memory_space<vmem>>, vector<56x32xf32>
    %39 = arith.truncf %38 : vector<56x32xf32> to vector<56x32xbf16>
    %c1_37 = arith.constant 1 : index
    %c0_38 = arith.constant 0 : index
    %c0_39 = arith.constant 0 : index
    %40 = vector.load %arg3[%c1_37, %c0_38, %c0_39] : memref<9x32x64xbf16, #tpu.memory_space<vmem>>, vector<1x32x64xbf16>
    %41 = vector.shape_cast %40 : vector<1x32x64xbf16> to vector<32x64xbf16>
    %cst_40 = arith.constant dense<0.000000e+00> : vector<56x64xf32>
    %42 = tpu.matmul %39, %41, %cst_40 {dimension_numbers = #tpu.dot_dimension_numbers<[1], [0], [0], [1], [0, 0, 1, 1], [], []>} : vector<56x32xbf16>, vector<32x64xbf16>, vector<56x64xf32> -> vector<56x64xf32>
    %43 = arith.addf %37, %42 : vector<56x64xf32>
    %c1_41 = arith.constant 1 : index
    %c0_42 = arith.constant 0 : index
    %44 = vector.load %arg7[%c1_41, %c0_42] : memref<72x32xf32, #tpu.memory_space<vmem>>, vector<56x32xf32>
    %45 = arith.truncf %44 : vector<56x32xf32> to vector<56x32xbf16>
    %c2 = arith.constant 2 : index
    %c0_43 = arith.constant 0 : index
    %c0_44 = arith.constant 0 : index
    %46 = vector.load %arg3[%c2, %c0_43, %c0_44] : memref<9x32x64xbf16, #tpu.memory_space<vmem>>, vector<1x32x64xbf16>
    %47 = vector.shape_cast %46 : vector<1x32x64xbf16> to vector<32x64xbf16>
    %cst_45 = arith.constant dense<0.000000e+00> : vector<56x64xf32>
    %48 = tpu.matmul %45, %47, %cst_45 {dimension_numbers = #tpu.dot_dimension_numbers<[1], [0], [0], [1], [0, 0, 1, 1], [], []>} : vector<56x32xbf16>, vector<32x64xbf16>, vector<56x64xf32> -> vector<56x64xf32>
    %49 = arith.addf %43, %48 : vector<56x64xf32>
    %c0_46 = arith.constant 0 : index
    %c0_47 = arith.constant 0 : index
    %50 = vector.load %arg9[%c0_46, %c0_47] : memref<72x32xf32, #tpu.memory_space<vmem>>, vector<56x32xf32>
    %51 = arith.truncf %50 : vector<56x32xf32> to vector<56x32xbf16>
    %c3 = arith.constant 3 : index
    %c0_48 = arith.constant 0 : index
    %c0_49 = arith.constant 0 : index
    %52 = vector.load %arg3[%c3, %c0_48, %c0_49] : memref<9x32x64xbf16, #tpu.memory_space<vmem>>, vector<1x32x64xbf16>
    %53 = vector.shape_cast %52 : vector<1x32x64xbf16> to vector<32x64xbf16>
    %cst_50 = arith.constant dense<0.000000e+00> : vector<56x64xf32>
    %54 = tpu.matmul %51, %53, %cst_50 {dimension_numbers = #tpu.dot_dimension_numbers<[1], [0], [0], [1], [0, 0, 1, 1], [], []>} : vector<56x32xbf16>, vector<32x64xbf16>, vector<56x64xf32> -> vector<56x64xf32>
    %55 = arith.addf %49, %54 : vector<56x64xf32>
    %c0_51 = arith.constant 0 : index
    %c0_52 = arith.constant 0 : index
    %56 = vector.load %arg10[%c0_51, %c0_52] : memref<72x32xf32, #tpu.memory_space<vmem>>, vector<56x32xf32>
    %57 = arith.truncf %56 : vector<56x32xf32> to vector<56x32xbf16>
    %c4 = arith.constant 4 : index
    %c0_53 = arith.constant 0 : index
    %c0_54 = arith.constant 0 : index
    %58 = vector.load %arg3[%c4, %c0_53, %c0_54] : memref<9x32x64xbf16, #tpu.memory_space<vmem>>, vector<1x32x64xbf16>
    %59 = vector.shape_cast %58 : vector<1x32x64xbf16> to vector<32x64xbf16>
    %cst_55 = arith.constant dense<0.000000e+00> : vector<56x64xf32>
    %60 = tpu.matmul %57, %59, %cst_55 {dimension_numbers = #tpu.dot_dimension_numbers<[1], [0], [0], [1], [0, 0, 1, 1], [], []>} : vector<56x32xbf16>, vector<32x64xbf16>, vector<56x64xf32> -> vector<56x64xf32>
    %61 = arith.addf %55, %60 : vector<56x64xf32>
    %c1_56 = arith.constant 1 : index
    %c0_57 = arith.constant 0 : index
    %62 = vector.load %arg9[%c1_56, %c0_57] : memref<72x32xf32, #tpu.memory_space<vmem>>, vector<56x32xf32>
    %63 = arith.truncf %62 : vector<56x32xf32> to vector<56x32xbf16>
    %c5 = arith.constant 5 : index
    %c0_58 = arith.constant 0 : index
    %c0_59 = arith.constant 0 : index
    %64 = vector.load %arg3[%c5, %c0_58, %c0_59] : memref<9x32x64xbf16, #tpu.memory_space<vmem>>, vector<1x32x64xbf16>
    %65 = vector.shape_cast %64 : vector<1x32x64xbf16> to vector<32x64xbf16>
    %cst_60 = arith.constant dense<0.000000e+00> : vector<56x64xf32>
    %66 = tpu.matmul %63, %65, %cst_60 {dimension_numbers = #tpu.dot_dimension_numbers<[1], [0], [0], [1], [0, 0, 1, 1], [], []>} : vector<56x32xbf16>, vector<32x64xbf16>, vector<56x64xf32> -> vector<56x64xf32>
    %67 = arith.addf %61, %66 : vector<56x64xf32>
    %c8_61 = arith.constant 8 : index
    %c0_62 = arith.constant 0 : index
    %68 = vector.load %arg7[%c8_61, %c0_62] : memref<72x32xf32, #tpu.memory_space<vmem>>, vector<56x32xf32>
    %69 = arith.truncf %68 : vector<56x32xf32> to vector<56x32xbf16>
    %c6 = arith.constant 6 : index
    %c0_63 = arith.constant 0 : index
    %c0_64 = arith.constant 0 : index
    %70 = vector.load %arg3[%c6, %c0_63, %c0_64] : memref<9x32x64xbf16, #tpu.memory_space<vmem>>, vector<1x32x64xbf16>
    %71 = vector.shape_cast %70 : vector<1x32x64xbf16> to vector<32x64xbf16>
    %cst_65 = arith.constant dense<0.000000e+00> : vector<56x64xf32>
    %72 = tpu.matmul %69, %71, %cst_65 {dimension_numbers = #tpu.dot_dimension_numbers<[1], [0], [0], [1], [0, 0, 1, 1], [], []>} : vector<56x32xbf16>, vector<32x64xbf16>, vector<56x64xf32> -> vector<56x64xf32>
    %73 = arith.addf %67, %72 : vector<56x64xf32>
    %c8_66 = arith.constant 8 : index
    %c0_67 = arith.constant 0 : index
    %74 = vector.load %arg8[%c8_66, %c0_67] : memref<72x32xf32, #tpu.memory_space<vmem>>, vector<56x32xf32>
    %75 = arith.truncf %74 : vector<56x32xf32> to vector<56x32xbf16>
    %c7 = arith.constant 7 : index
    %c0_68 = arith.constant 0 : index
    %c0_69 = arith.constant 0 : index
    %76 = vector.load %arg3[%c7, %c0_68, %c0_69] : memref<9x32x64xbf16, #tpu.memory_space<vmem>>, vector<1x32x64xbf16>
    %77 = vector.shape_cast %76 : vector<1x32x64xbf16> to vector<32x64xbf16>
    %cst_70 = arith.constant dense<0.000000e+00> : vector<56x64xf32>
    %78 = tpu.matmul %75, %77, %cst_70 {dimension_numbers = #tpu.dot_dimension_numbers<[1], [0], [0], [1], [0, 0, 1, 1], [], []>} : vector<56x32xbf16>, vector<32x64xbf16>, vector<56x64xf32> -> vector<56x64xf32>
    %79 = arith.addf %73, %78 : vector<56x64xf32>
    %c9_71 = arith.constant 9 : index
    %c0_72 = arith.constant 0 : index
    %80 = vector.load %arg7[%c9_71, %c0_72] : memref<72x32xf32, #tpu.memory_space<vmem>>, vector<56x32xf32>
    %81 = arith.truncf %80 : vector<56x32xf32> to vector<56x32xbf16>
    %c8_73 = arith.constant 8 : index
    %c0_74 = arith.constant 0 : index
    %c0_75 = arith.constant 0 : index
    %82 = vector.load %arg3[%c8_73, %c0_74, %c0_75] : memref<9x32x64xbf16, #tpu.memory_space<vmem>>, vector<1x32x64xbf16>
    %83 = vector.shape_cast %82 : vector<1x32x64xbf16> to vector<32x64xbf16>
    %cst_76 = arith.constant dense<0.000000e+00> : vector<56x64xf32>
    %84 = tpu.matmul %81, %83, %cst_76 {dimension_numbers = #tpu.dot_dimension_numbers<[1], [0], [0], [1], [0, 0, 1, 1], [], []>} : vector<56x32xbf16>, vector<32x64xbf16>, vector<56x64xf32> -> vector<56x64xf32>
    %85 = arith.addf %79, %84 : vector<56x64xf32>
    %cst_77 = arith.constant 0.000000e+00 : f32
    %86 = vector.broadcast %cst_77 : f32 to vector<56x64xf32>
    %87 = arith.maximumf %85, %86 : vector<56x64xf32>
    %88 = vector.extract_strided_slice %87 {offsets = [0, 0], sizes = [1, 64], strides = [1, 1]} : vector<56x64xf32> to vector<1x64xf32>
    %c0_78 = arith.constant 0 : index
    %c0_79 = arith.constant 0 : index
    %89 = vector.load %arg11[%c0_78, %c0_79] : memref<1x3136xf32, #tpu.memory_space<vmem>>, vector<1x64xf32>
    tpu.vector_store %arg11[%c0_78, %c0_79], %88 {strides = array<i32>} : memref<1x3136xf32, #tpu.memory_space<vmem>>, vector<1x64xf32>,
    %90 = vector.extract_strided_slice %87 {offsets = [1, 0], sizes = [1, 64], strides = [1, 1]} : vector<56x64xf32> to vector<1x64xf32>
    %c0_80 = arith.constant 0 : index
    %c64 = arith.constant 64 : index
    %91 = vector.load %arg11[%c0_80, %c64] : memref<1x3136xf32, #tpu.memory_space<vmem>>, vector<1x64xf32>
    tpu.vector_store %arg11[%c0_80, %c64], %90 {strides = array<i32>} : memref<1x3136xf32, #tpu.memory_space<vmem>>, vector<1x64xf32>,
    %92 = vector.extract_strided_slice %87 {offsets = [2, 0], sizes = [1, 64], strides = [1, 1]} : vector<56x64xf32> to vector<1x64xf32>
    %c0_81 = arith.constant 0 : index
    %c128 = arith.constant 128 : index
    %93 = vector.load %arg11[%c0_81, %c128] : memref<1x3136xf32, #tpu.memory_space<vmem>>, vector<1x64xf32>
    tpu.vector_store %arg11[%c0_81, %c128], %92 {strides = array<i32>} : memref<1x3136xf32, #tpu.memory_space<vmem>>, vector<1x64xf32>,
    %94 = vector.extract_strided_slice %87 {offsets = [3, 0], sizes = [1, 64], strides = [1, 1]} : vector<56x64xf32> to vector<1x64xf32>
    %c0_82 = arith.constant 0 : index
    %c192 = arith.constant 192 : index
    %95 = vector.load %arg11[%c0_82, %c192] : memref<1x3136xf32, #tpu.memory_space<vmem>>, vector<1x64xf32>
    tpu.vector_store %arg11[%c0_82, %c192], %94 {strides = array<i32>} : memref<1x3136xf32, #tpu.memory_space<vmem>>, vector<1x64xf32>,
    %96 = vector.extract_strided_slice %87 {offsets = [4, 0], sizes = [1, 64], strides = [1, 1]} : vector<56x64xf32> to vector<1x64xf32>
    %c0_83 = arith.constant 0 : index
    %c256 = arith.constant 256 : index
    %97 = vector.load %arg11[%c0_83, %c256] : memref<1x3136xf32, #tpu.memory_space<vmem>>, vector<1x64xf32>
    tpu.vector_store %arg11[%c0_83, %c256], %96 {strides = array<i32>} : memref<1x3136xf32, #tpu.memory_space<vmem>>, vector<1x64xf32>,
    %98 = vector.extract_strided_slice %87 {offsets = [5, 0], sizes = [1, 64], strides = [1, 1]} : vector<56x64xf32> to vector<1x64xf32>
    %c0_84 = arith.constant 0 : index
    %c320 = arith.constant 320 : index
    %99 = vector.load %arg11[%c0_84, %c320] : memref<1x3136xf32, #tpu.memory_space<vmem>>, vector<1x64xf32>
    tpu.vector_store %arg11[%c0_84, %c320], %98 {strides = array<i32>} : memref<1x3136xf32, #tpu.memory_space<vmem>>, vector<1x64xf32>,
    %100 = vector.extract_strided_slice %87 {offsets = [6, 0], sizes = [1, 64], strides = [1, 1]} : vector<56x64xf32> to vector<1x64xf32>
    %c0_85 = arith.constant 0 : index
    %c384 = arith.constant 384 : index
    %101 = vector.load %arg11[%c0_85, %c384] : memref<1x3136xf32, #tpu.memory_space<vmem>>, vector<1x64xf32>
    tpu.vector_store %arg11[%c0_85, %c384], %100 {strides = array<i32>} : memref<1x3136xf32, #tpu.memory_space<vmem>>, vector<1x64xf32>,
    %102 = vector.extract_strided_slice %87 {offsets = [8, 0], sizes = [1, 64], strides = [1, 1]} : vector<56x64xf32> to vector<1x64xf32>
    %c0_86 = arith.constant 0 : index
    %c448 = arith.constant 448 : index
    %103 = vector.load %arg11[%c0_86, %c448] : memref<1x3136xf32, #tpu.memory_space<vmem>>, vector<1x64xf32>
    tpu.vector_store %arg11[%c0_86, %c448], %102 {strides = array<i32>} : memref<1x3136xf32, #tpu.memory_space<vmem>>, vector<1x64xf32>,
    %104 = vector.extract_strided_slice %87 {offsets = [9, 0], sizes = [1, 64], strides = [1, 1]} : vector<56x64xf32> to vector<1x64xf32>
    %c0_87 = arith.constant 0 : index
    %c512 = arith.constant 512 : index
    %105 = vector.load %arg11[%c0_87, %c512] : memref<1x3136xf32, #tpu.memory_space<vmem>>, vector<1x64xf32>
    tpu.vector_store %arg11[%c0_87, %c512], %104 {strides = array<i32>} : memref<1x3136xf32, #tpu.memory_space<vmem>>, vector<1x64xf32>,
    %106 = vector.extract_strided_slice %87 {offsets = [10, 0], sizes = [1, 64], strides = [1, 1]} : vector<56x64xf32> to vector<1x64xf32>
    %c0_88 = arith.constant 0 : index
    %c576 = arith.constant 576 : index
    %107 = vector.load %arg11[%c0_88, %c576] : memref<1x3136xf32, #tpu.memory_space<vmem>>, vector<1x64xf32>
    tpu.vector_store %arg11[%c0_88, %c576], %106 {strides = array<i32>} : memref<1x3136xf32, #tpu.memory_space<vmem>>, vector<1x64xf32>,
    %108 = vector.extract_strided_slice %87 {offsets = [11, 0], sizes = [1, 64], strides = [1, 1]} : vector<56x64xf32> to vector<1x64xf32>
    %c0_89 = arith.constant 0 : index
    %c640 = arith.constant 640 : index
    %109 = vector.load %arg11[%c0_89, %c640] : memref<1x3136xf32, #tpu.memory_space<vmem>>, vector<1x64xf32>
    tpu.vector_store %arg11[%c0_89, %c640], %108 {strides = array<i32>} : memref<1x3136xf32, #tpu.memory_space<vmem>>, vector<1x64xf32>,
    %110 = vector.extract_strided_slice %87 {offsets = [12, 0], sizes = [1, 64], strides = [1, 1]} : vector<56x64xf32> to vector<1x64xf32>
    %c0_90 = arith.constant 0 : index
    %c704 = arith.constant 704 : index
    %111 = vector.load %arg11[%c0_90, %c704] : memref<1x3136xf32, #tpu.memory_space<vmem>>, vector<1x64xf32>
    tpu.vector_store %arg11[%c0_90, %c704], %110 {strides = array<i32>} : memref<1x3136xf32, #tpu.memory_space<vmem>>, vector<1x64xf32>,
    %112 = vector.extract_strided_slice %87 {offsets = [13, 0], sizes = [1, 64], strides = [1, 1]} : vector<56x64xf32> to vector<1x64xf32>
    %c0_91 = arith.constant 0 : index
    %c768 = arith.constant 768 : index
    %113 = vector.load %arg11[%c0_91, %c768] : memref<1x3136xf32, #tpu.memory_space<vmem>>, vector<1x64xf32>
    tpu.vector_store %arg11[%c0_91, %c768], %112 {strides = array<i32>} : memref<1x3136xf32, #tpu.memory_space<vmem>>, vector<1x64xf32>,
    %114 = vector.extract_strided_slice %87 {offsets = [14, 0], sizes = [1, 64], strides = [1, 1]} : vector<56x64xf32> to vector<1x64xf32>
    %c0_92 = arith.constant 0 : index
    %c832 = arith.constant 832 : index
    %115 = vector.load %arg11[%c0_92, %c832] : memref<1x3136xf32, #tpu.memory_space<vmem>>, vector<1x64xf32>
    tpu.vector_store %arg11[%c0_92, %c832], %114 {strides = array<i32>} : memref<1x3136xf32, #tpu.memory_space<vmem>>, vector<1x64xf32>,
    %116 = vector.extract_strided_slice %87 {offsets = [16, 0], sizes = [1, 64], strides = [1, 1]} : vector<56x64xf32> to vector<1x64xf32>
    %c0_93 = arith.constant 0 : index
    %c896 = arith.constant 896 : index
    %117 = vector.load %arg11[%c0_93, %c896] : memref<1x3136xf32, #tpu.memory_space<vmem>>, vector<1x64xf32>
    tpu.vector_store %arg11[%c0_93, %c896], %116 {strides = array<i32>} : memref<1x3136xf32, #tpu.memory_space<vmem>>, vector<1x64xf32>,
    %118 = vector.extract_strided_slice %87 {offsets = [17, 0], sizes = [1, 64], strides = [1, 1]} : vector<56x64xf32> to vector<1x64xf32>
    %c0_94 = arith.constant 0 : index
    %c960 = arith.constant 960 : index
    %119 = vector.load %arg11[%c0_94, %c960] : memref<1x3136xf32, #tpu.memory_space<vmem>>, vector<1x64xf32>
    tpu.vector_store %arg11[%c0_94, %c960], %118 {strides = array<i32>} : memref<1x3136xf32, #tpu.memory_space<vmem>>, vector<1x64xf32>,
    %120 = vector.extract_strided_slice %87 {offsets = [18, 0], sizes = [1, 64], strides = [1, 1]} : vector<56x64xf32> to vector<1x64xf32>
    %c0_95 = arith.constant 0 : index
    %c1024 = arith.constant 1024 : index
    %121 = vector.load %arg11[%c0_95, %c1024] : memref<1x3136xf32, #tpu.memory_space<vmem>>, vector<1x64xf32>
    tpu.vector_store %arg11[%c0_95, %c1024], %120 {strides = array<i32>} : memref<1x3136xf32, #tpu.memory_space<vmem>>, vector<1x64xf32>,
    %122 = vector.extract_strided_slice %87 {offsets = [19, 0], sizes = [1, 64], strides = [1, 1]} : vector<56x64xf32> to vector<1x64xf32>
    %c0_96 = arith.constant 0 : index
    %c1088 = arith.constant 1088 : index
    %123 = vector.load %arg11[%c0_96, %c1088] : memref<1x3136xf32, #tpu.memory_space<vmem>>, vector<1x64xf32>
    tpu.vector_store %arg11[%c0_96, %c1088], %122 {strides = array<i32>} : memref<1x3136xf32, #tpu.memory_space<vmem>>, vector<1x64xf32>,
    %124 = vector.extract_strided_slice %87 {offsets = [20, 0], sizes = [1, 64], strides = [1, 1]} : vector<56x64xf32> to vector<1x64xf32>
    %c0_97 = arith.constant 0 : index
    %c1152 = arith.constant 1152 : index
    %125 = vector.load %arg11[%c0_97, %c1152] : memref<1x3136xf32, #tpu.memory_space<vmem>>, vector<1x64xf32>
    tpu.vector_store %arg11[%c0_97, %c1152], %124 {strides = array<i32>} : memref<1x3136xf32, #tpu.memory_space<vmem>>, vector<1x64xf32>,
    %126 = vector.extract_strided_slice %87 {offsets = [21, 0], sizes = [1, 64], strides = [1, 1]} : vector<56x64xf32> to vector<1x64xf32>
    %c0_98 = arith.constant 0 : index
    %c1216 = arith.constant 1216 : index
    %127 = vector.load %arg11[%c0_98, %c1216] : memref<1x3136xf32, #tpu.memory_space<vmem>>, vector<1x64xf32>
    tpu.vector_store %arg11[%c0_98, %c1216], %126 {strides = array<i32>} : memref<1x3136xf32, #tpu.memory_space<vmem>>, vector<1x64xf32>,
    %128 = vector.extract_strided_slice %87 {offsets = [22, 0], sizes = [1, 64], strides = [1, 1]} : vector<56x64xf32> to vector<1x64xf32>
    %c0_99 = arith.constant 0 : index
    %c1280 = arith.constant 1280 : index
    %129 = vector.load %arg11[%c0_99, %c1280] : memref<1x3136xf32, #tpu.memory_space<vmem>>, vector<1x64xf32>
    tpu.vector_store %arg11[%c0_99, %c1280], %128 {strides = array<i32>} : memref<1x3136xf32, #tpu.memory_space<vmem>>, vector<1x64xf32>,
    %130 = vector.extract_strided_slice %87 {offsets = [24, 0], sizes = [1, 64], strides = [1, 1]} : vector<56x64xf32> to vector<1x64xf32>
    %c0_100 = arith.constant 0 : index
    %c1344 = arith.constant 1344 : index
    %131 = vector.load %arg11[%c0_100, %c1344] : memref<1x3136xf32, #tpu.memory_space<vmem>>, vector<1x64xf32>
    tpu.vector_store %arg11[%c0_100, %c1344], %130 {strides = array<i32>} : memref<1x3136xf32, #tpu.memory_space<vmem>>, vector<1x64xf32>,
    %132 = vector.extract_strided_slice %87 {offsets = [25, 0], sizes = [1, 64], strides = [1, 1]} : vector<56x64xf32> to vector<1x64xf32>
    %c0_101 = arith.constant 0 : index
    %c1408 = arith.constant 1408 : index
    %133 = vector.load %arg11[%c0_101, %c1408] : memref<1x3136xf32, #tpu.memory_space<vmem>>, vector<1x64xf32>
    tpu.vector_store %arg11[%c0_101, %c1408], %132 {strides = array<i32>} : memref<1x3136xf32, #tpu.memory_space<vmem>>, vector<1x64xf32>,
    %134 = vector.extract_strided_slice %87 {offsets = [26, 0], sizes = [1, 64], strides = [1, 1]} : vector<56x64xf32> to vector<1x64xf32>
    %c0_102 = arith.constant 0 : index
    %c1472 = arith.constant 1472 : index
    %135 = vector.load %arg11[%c0_102, %c1472] : memref<1x3136xf32, #tpu.memory_space<vmem>>, vector<1x64xf32>
    tpu.vector_store %arg11[%c0_102, %c1472], %134 {strides = array<i32>} : memref<1x3136xf32, #tpu.memory_space<vmem>>, vector<1x64xf32>,
    %136 = vector.extract_strided_slice %87 {offsets = [27, 0], sizes = [1, 64], strides = [1, 1]} : vector<56x64xf32> to vector<1x64xf32>
    %c0_103 = arith.constant 0 : index
    %c1536 = arith.constant 1536 : index
    %137 = vector.load %arg11[%c0_103, %c1536] : memref<1x3136xf32, #tpu.memory_space<vmem>>, vector<1x64xf32>
    tpu.vector_store %arg11[%c0_103, %c1536], %136 {strides = array<i32>} : memref<1x3136xf32, #tpu.memory_space<vmem>>, vector<1x64xf32>,
    %138 = vector.extract_strided_slice %87 {offsets = [28, 0], sizes = [1, 64], strides = [1, 1]} : vector<56x64xf32> to vector<1x64xf32>
    %c0_104 = arith.constant 0 : index
    %c1600 = arith.constant 1600 : index
    %139 = vector.load %arg11[%c0_104, %c1600] : memref<1x3136xf32, #tpu.memory_space<vmem>>, vector<1x64xf32>
    tpu.vector_store %arg11[%c0_104, %c1600], %138 {strides = array<i32>} : memref<1x3136xf32, #tpu.memory_space<vmem>>, vector<1x64xf32>,
    %140 = vector.extract_strided_slice %87 {offsets = [29, 0], sizes = [1, 64], strides = [1, 1]} : vector<56x64xf32> to vector<1x64xf32>
    %c0_105 = arith.constant 0 : index
    %c1664 = arith.constant 1664 : index
    %141 = vector.load %arg11[%c0_105, %c1664] : memref<1x3136xf32, #tpu.memory_space<vmem>>, vector<1x64xf32>
    tpu.vector_store %arg11[%c0_105, %c1664], %140 {strides = array<i32>} : memref<1x3136xf32, #tpu.memory_space<vmem>>, vector<1x64xf32>,
    %142 = vector.extract_strided_slice %87 {offsets = [30, 0], sizes = [1, 64], strides = [1, 1]} : vector<56x64xf32> to vector<1x64xf32>
    %c0_106 = arith.constant 0 : index
    %c1728 = arith.constant 1728 : index
    %143 = vector.load %arg11[%c0_106, %c1728] : memref<1x3136xf32, #tpu.memory_space<vmem>>, vector<1x64xf32>
    tpu.vector_store %arg11[%c0_106, %c1728], %142 {strides = array<i32>} : memref<1x3136xf32, #tpu.memory_space<vmem>>, vector<1x64xf32>,
    %144 = vector.extract_strided_slice %87 {offsets = [32, 0], sizes = [1, 64], strides = [1, 1]} : vector<56x64xf32> to vector<1x64xf32>
    %c0_107 = arith.constant 0 : index
    %c1792 = arith.constant 1792 : index
    %145 = vector.load %arg11[%c0_107, %c1792] : memref<1x3136xf32, #tpu.memory_space<vmem>>, vector<1x64xf32>
    tpu.vector_store %arg11[%c0_107, %c1792], %144 {strides = array<i32>} : memref<1x3136xf32, #tpu.memory_space<vmem>>, vector<1x64xf32>,
    %146 = vector.extract_strided_slice %87 {offsets = [33, 0], sizes = [1, 64], strides = [1, 1]} : vector<56x64xf32> to vector<1x64xf32>
    %c0_108 = arith.constant 0 : index
    %c1856 = arith.constant 1856 : index
    %147 = vector.load %arg11[%c0_108, %c1856] : memref<1x3136xf32, #tpu.memory_space<vmem>>, vector<1x64xf32>
    tpu.vector_store %arg11[%c0_108, %c1856], %146 {strides = array<i32>} : memref<1x3136xf32, #tpu.memory_space<vmem>>, vector<1x64xf32>,
    %148 = vector.extract_strided_slice %87 {offsets = [34, 0], sizes = [1, 64], strides = [1, 1]} : vector<56x64xf32> to vector<1x64xf32>
    %c0_109 = arith.constant 0 : index
    %c1920 = arith.constant 1920 : index
    %149 = vector.load %arg11[%c0_109, %c1920] : memref<1x3136xf32, #tpu.memory_space<vmem>>, vector<1x64xf32>
    tpu.vector_store %arg11[%c0_109, %c1920], %148 {strides = array<i32>} : memref<1x3136xf32, #tpu.memory_space<vmem>>, vector<1x64xf32>,
    %150 = vector.extract_strided_slice %87 {offsets = [35, 0], sizes = [1, 64], strides = [1, 1]} : vector<56x64xf32> to vector<1x64xf32>
    %c0_110 = arith.constant 0 : index
    %c1984 = arith.constant 1984 : index
    %151 = vector.load %arg11[%c0_110, %c1984] : memref<1x3136xf32, #tpu.memory_space<vmem>>, vector<1x64xf32>
    tpu.vector_store %arg11[%c0_110, %c1984], %150 {strides = array<i32>} : memref<1x3136xf32, #tpu.memory_space<vmem>>, vector<1x64xf32>,
    %152 = vector.extract_strided_slice %87 {offsets = [36, 0], sizes = [1, 64], strides = [1, 1]} : vector<56x64xf32> to vector<1x64xf32>
    %c0_111 = arith.constant 0 : index
    %c2048 = arith.constant 2048 : index
    %153 = vector.load %arg11[%c0_111, %c2048] : memref<1x3136xf32, #tpu.memory_space<vmem>>, vector<1x64xf32>
    tpu.vector_store %arg11[%c0_111, %c2048], %152 {strides = array<i32>} : memref<1x3136xf32, #tpu.memory_space<vmem>>, vector<1x64xf32>,
    %154 = vector.extract_strided_slice %87 {offsets = [37, 0], sizes = [1, 64], strides = [1, 1]} : vector<56x64xf32> to vector<1x64xf32>
    %c0_112 = arith.constant 0 : index
    %c2112 = arith.constant 2112 : index
    %155 = vector.load %arg11[%c0_112, %c2112] : memref<1x3136xf32, #tpu.memory_space<vmem>>, vector<1x64xf32>
    tpu.vector_store %arg11[%c0_112, %c2112], %154 {strides = array<i32>} : memref<1x3136xf32, #tpu.memory_space<vmem>>, vector<1x64xf32>,
    %156 = vector.extract_strided_slice %87 {offsets = [38, 0], sizes = [1, 64], strides = [1, 1]} : vector<56x64xf32> to vector<1x64xf32>
    %c0_113 = arith.constant 0 : index
    %c2176 = arith.constant 2176 : index
    %157 = vector.load %arg11[%c0_113, %c2176] : memref<1x3136xf32, #tpu.memory_space<vmem>>, vector<1x64xf32>
    tpu.vector_store %arg11[%c0_113, %c2176], %156 {strides = array<i32>} : memref<1x3136xf32, #tpu.memory_space<vmem>>, vector<1x64xf32>,
    %158 = vector.extract_strided_slice %87 {offsets = [40, 0], sizes = [1, 64], strides = [1, 1]} : vector<56x64xf32> to vector<1x64xf32>
    %c0_114 = arith.constant 0 : index
    %c2240 = arith.constant 2240 : index
    %159 = vector.load %arg11[%c0_114, %c2240] : memref<1x3136xf32, #tpu.memory_space<vmem>>, vector<1x64xf32>
    tpu.vector_store %arg11[%c0_114, %c2240], %158 {strides = array<i32>} : memref<1x3136xf32, #tpu.memory_space<vmem>>, vector<1x64xf32>,
    %160 = vector.extract_strided_slice %87 {offsets = [41, 0], sizes = [1, 64], strides = [1, 1]} : vector<56x64xf32> to vector<1x64xf32>
    %c0_115 = arith.constant 0 : index
    %c2304 = arith.constant 2304 : index
    %161 = vector.load %arg11[%c0_115, %c2304] : memref<1x3136xf32, #tpu.memory_space<vmem>>, vector<1x64xf32>
    tpu.vector_store %arg11[%c0_115, %c2304], %160 {strides = array<i32>} : memref<1x3136xf32, #tpu.memory_space<vmem>>, vector<1x64xf32>,
    %162 = vector.extract_strided_slice %87 {offsets = [42, 0], sizes = [1, 64], strides = [1, 1]} : vector<56x64xf32> to vector<1x64xf32>
    %c0_116 = arith.constant 0 : index
    %c2368 = arith.constant 2368 : index
    %163 = vector.load %arg11[%c0_116, %c2368] : memref<1x3136xf32, #tpu.memory_space<vmem>>, vector<1x64xf32>
    tpu.vector_store %arg11[%c0_116, %c2368], %162 {strides = array<i32>} : memref<1x3136xf32, #tpu.memory_space<vmem>>, vector<1x64xf32>,
    %164 = vector.extract_strided_slice %87 {offsets = [43, 0], sizes = [1, 64], strides = [1, 1]} : vector<56x64xf32> to vector<1x64xf32>
    %c0_117 = arith.constant 0 : index
    %c2432 = arith.constant 2432 : index
    %165 = vector.load %arg11[%c0_117, %c2432] : memref<1x3136xf32, #tpu.memory_space<vmem>>, vector<1x64xf32>
    tpu.vector_store %arg11[%c0_117, %c2432], %164 {strides = array<i32>} : memref<1x3136xf32, #tpu.memory_space<vmem>>, vector<1x64xf32>,
    %166 = vector.extract_strided_slice %87 {offsets = [44, 0], sizes = [1, 64], strides = [1, 1]} : vector<56x64xf32> to vector<1x64xf32>
    %c0_118 = arith.constant 0 : index
    %c2496 = arith.constant 2496 : index
    %167 = vector.load %arg11[%c0_118, %c2496] : memref<1x3136xf32, #tpu.memory_space<vmem>>, vector<1x64xf32>
    tpu.vector_store %arg11[%c0_118, %c2496], %166 {strides = array<i32>} : memref<1x3136xf32, #tpu.memory_space<vmem>>, vector<1x64xf32>,
    %168 = vector.extract_strided_slice %87 {offsets = [45, 0], sizes = [1, 64], strides = [1, 1]} : vector<56x64xf32> to vector<1x64xf32>
    %c0_119 = arith.constant 0 : index
    %c2560 = arith.constant 2560 : index
    %169 = vector.load %arg11[%c0_119, %c2560] : memref<1x3136xf32, #tpu.memory_space<vmem>>, vector<1x64xf32>
    tpu.vector_store %arg11[%c0_119, %c2560], %168 {strides = array<i32>} : memref<1x3136xf32, #tpu.memory_space<vmem>>, vector<1x64xf32>,
    %170 = vector.extract_strided_slice %87 {offsets = [46, 0], sizes = [1, 64], strides = [1, 1]} : vector<56x64xf32> to vector<1x64xf32>
    %c0_120 = arith.constant 0 : index
    %c2624 = arith.constant 2624 : index
    %171 = vector.load %arg11[%c0_120, %c2624] : memref<1x3136xf32, #tpu.memory_space<vmem>>, vector<1x64xf32>
    tpu.vector_store %arg11[%c0_120, %c2624], %170 {strides = array<i32>} : memref<1x3136xf32, #tpu.memory_space<vmem>>, vector<1x64xf32>,
    %172 = vector.extract_strided_slice %87 {offsets = [48, 0], sizes = [1, 64], strides = [1, 1]} : vector<56x64xf32> to vector<1x64xf32>
    %c0_121 = arith.constant 0 : index
    %c2688 = arith.constant 2688 : index
    %173 = vector.load %arg11[%c0_121, %c2688] : memref<1x3136xf32, #tpu.memory_space<vmem>>, vector<1x64xf32>
    tpu.vector_store %arg11[%c0_121, %c2688], %172 {strides = array<i32>} : memref<1x3136xf32, #tpu.memory_space<vmem>>, vector<1x64xf32>,
    %174 = vector.extract_strided_slice %87 {offsets = [49, 0], sizes = [1, 64], strides = [1, 1]} : vector<56x64xf32> to vector<1x64xf32>
    %c0_122 = arith.constant 0 : index
    %c2752 = arith.constant 2752 : index
    %175 = vector.load %arg11[%c0_122, %c2752] : memref<1x3136xf32, #tpu.memory_space<vmem>>, vector<1x64xf32>
    tpu.vector_store %arg11[%c0_122, %c2752], %174 {strides = array<i32>} : memref<1x3136xf32, #tpu.memory_space<vmem>>, vector<1x64xf32>,
    %176 = vector.extract_strided_slice %87 {offsets = [50, 0], sizes = [1, 64], strides = [1, 1]} : vector<56x64xf32> to vector<1x64xf32>
    %c0_123 = arith.constant 0 : index
    %c2816 = arith.constant 2816 : index
    %177 = vector.load %arg11[%c0_123, %c2816] : memref<1x3136xf32, #tpu.memory_space<vmem>>, vector<1x64xf32>
    tpu.vector_store %arg11[%c0_123, %c2816], %176 {strides = array<i32>} : memref<1x3136xf32, #tpu.memory_space<vmem>>, vector<1x64xf32>,
    %178 = vector.extract_strided_slice %87 {offsets = [51, 0], sizes = [1, 64], strides = [1, 1]} : vector<56x64xf32> to vector<1x64xf32>
    %c0_124 = arith.constant 0 : index
    %c2880 = arith.constant 2880 : index
    %179 = vector.load %arg11[%c0_124, %c2880] : memref<1x3136xf32, #tpu.memory_space<vmem>>, vector<1x64xf32>
    tpu.vector_store %arg11[%c0_124, %c2880], %178 {strides = array<i32>} : memref<1x3136xf32, #tpu.memory_space<vmem>>, vector<1x64xf32>,
    %180 = vector.extract_strided_slice %87 {offsets = [52, 0], sizes = [1, 64], strides = [1, 1]} : vector<56x64xf32> to vector<1x64xf32>
    %c0_125 = arith.constant 0 : index
    %c2944 = arith.constant 2944 : index
    %181 = vector.load %arg11[%c0_125, %c2944] : memref<1x3136xf32, #tpu.memory_space<vmem>>, vector<1x64xf32>
    tpu.vector_store %arg11[%c0_125, %c2944], %180 {strides = array<i32>} : memref<1x3136xf32, #tpu.memory_space<vmem>>, vector<1x64xf32>,
    %182 = vector.extract_strided_slice %87 {offsets = [53, 0], sizes = [1, 64], strides = [1, 1]} : vector<56x64xf32> to vector<1x64xf32>
    %c0_126 = arith.constant 0 : index
    %c3008 = arith.constant 3008 : index
    %183 = vector.load %arg11[%c0_126, %c3008] : memref<1x3136xf32, #tpu.memory_space<vmem>>, vector<1x64xf32>
    tpu.vector_store %arg11[%c0_126, %c3008], %182 {strides = array<i32>} : memref<1x3136xf32, #tpu.memory_space<vmem>>, vector<1x64xf32>,
    %184 = vector.extract_strided_slice %87 {offsets = [54, 0], sizes = [1, 64], strides = [1, 1]} : vector<56x64xf32> to vector<1x64xf32>
    %c0_127 = arith.constant 0 : index
    %c3072 = arith.constant 3072 : index
    %185 = vector.load %arg11[%c0_127, %c3072] : memref<1x3136xf32, #tpu.memory_space<vmem>>, vector<1x64xf32>
    tpu.vector_store %arg11[%c0_127, %c3072], %184 {strides = array<i32>} : memref<1x3136xf32, #tpu.memory_space<vmem>>, vector<1x64xf32>,
    %c0_128 = arith.constant 0 : index
    %c0_129 = arith.constant 0 : index
    %186 = vector.load %arg11[%c0_128, %c0_129] : memref<1x3136xf32, #tpu.memory_space<vmem>>, vector<1x3136xf32>
    %187 = arith.truncf %186 : vector<1x3136xf32> to vector<1x3136xbf16>
    %c0_130 = arith.constant 0 : index
    %c0_131 = arith.constant 0 : index
    %188 = vector.load %arg4[%c0_130, %c0_131] : memref<3136x128xbf16, #tpu.memory_space<vmem>>, vector<3136x128xbf16>
    %cst_132 = arith.constant dense<0.000000e+00> : vector<1x128xf32>
    %189 = tpu.matmul %187, %188, %cst_132 {dimension_numbers = #tpu.dot_dimension_numbers<[1], [0], [0], [1], [0, 0, 1, 1], [], []>} : vector<1x3136xbf16>, vector<3136x128xbf16>, vector<1x128xf32> -> vector<1x128xf32>
    %c0_133 = arith.constant 0 : index
    %c0_134 = arith.constant 0 : index
    %190 = vector.load %arg5[%c0_133, %c0_134] : memref<1x128xf32, #tpu.memory_space<vmem>>, vector<1x128xf32>
    %191 = arith.addf %189, %190 : vector<1x128xf32>
    %c0_135 = arith.constant 0 : index
    %c0_136 = arith.constant 0 : index
    %c0_137 = arith.constant 0 : index
    %192 = vector.load %arg6[%c0_135, %c0_136, %c0_137] : memref<1x1x128xf32, #tpu.memory_space<vmem>>, vector<1x1x128xf32>
    %193 = vector.shape_cast %192 : vector<1x1x128xf32> to vector<1x128xf32>
    %194 = vector.shape_cast %191 : vector<1x128xf32> to vector<1x1x128xf32>
    tpu.vector_store %arg6[%c0_135, %c0_136, %c0_137], %194 {strides = array<i32>} : memref<1x1x128xf32, #tpu.memory_space<vmem>>, vector<1x1x128xf32>,
    return
  }
  func.func @transform_0(%arg0: i32) -> (i32, i32, i32) {
    %c0_i32 = arith.constant 0 : i32
    %c0_i32_0 = arith.constant 0 : i32
    %c0_i32_1 = arith.constant 0 : i32
    return %arg0, %c0_i32, %c0_i32_0 : i32, i32, i32
  }
  func.func @transform_1(%arg0: i32) -> (i32, i32) {
    %c0_i32 = arith.constant 0 : i32
    %c0_i32_0 = arith.constant 0 : i32
    %c0_i32_1 = arith.constant 0 : i32
    return %c0_i32, %c0_i32_0 : i32, i32
  }
  func.func @transform_2(%arg0: i32) -> (i32, i32, i32) {
    %c0_i32 = arith.constant 0 : i32
    %c0_i32_0 = arith.constant 0 : i32
    %c0_i32_1 = arith.constant 0 : i32
    %c0_i32_2 = arith.constant 0 : i32
    return %c0_i32, %c0_i32_0, %c0_i32_1 : i32, i32, i32
  }
  func.func @transform_3(%arg0: i32) -> (i32, i32) {
    %c0_i32 = arith.constant 0 : i32
    %c0_i32_0 = arith.constant 0 : i32
    %c0_i32_1 = arith.constant 0 : i32
    return %c0_i32, %c0_i32_0 : i32, i32
  }
  func.func @transform_4(%arg0: i32) -> (i32, i32) {
    %c0_i32 = arith.constant 0 : i32
    %c0_i32_0 = arith.constant 0 : i32
    %c0_i32_1 = arith.constant 0 : i32
    return %c0_i32, %c0_i32_0 : i32, i32
  }
  func.func @transform_5(%arg0: i32) -> (i32, i32, i32) {
    %c0_i32 = arith.constant 0 : i32
    %c0_i32_0 = arith.constant 0 : i32
    %c0_i32_1 = arith.constant 0 : i32
    return %arg0, %c0_i32, %c0_i32_0 : i32, i32, i32
  }
}

</mosaic_0001>

<llo_original>
// kernel: encoder_forward.1
$region0: #{encoder_forward.1}
  #allocation0 [shape = 'u32[]', space=smem, size = 0x4, offset = 0x4, fixed_abs, tag = 'smem constant byte address 0x4 - core index']
  #allocation1 [shape = 'u32[144,128]{1,0:T(1,128)}', space=vmem, size = 0x12000, scoped, tag = 'internal scratch']
  #allocation2 [shape = 'f32[72,32]{1,0:T(8,128)}', space=vmem, size = 0x9000, scoped, tag = 'scratch operand']
  #allocation3 [shape = 'f32[72,32]{1,0:T(8,128)}', space=vmem, size = 0x9000, scoped, tag = 'scratch operand']
  #allocation4 [shape = 'f32[72,32]{1,0:T(8,128)}', space=vmem, size = 0x9000, scoped, tag = 'scratch operand']
  #allocation5 [shape = 'f32[72,32]{1,0:T(8,128)}', space=vmem, size = 0x9000, scoped, tag = 'scratch operand']
  #allocation6 [shape = 'f32[1,3136]{1,0:T(1,128)}', space=vmem, size = 0x3200, scoped, tag = 'scratch operand']
  %s0 = inlined_call_operand.vmem [shape: bf16[2,224,9], index: 0, kind: input, shape index: {}]
  %s1 = inlined_call_operand.vmem [shape: bf16[9,32], index: 1, kind: input, shape index: {}]
  %s2 = inlined_call_operand.vmem [shape: bf16[9,32,64], index: 2, kind: input, shape index: {}]
  %s3 = inlined_call_operand.vmem [shape: bf16[3136,128], index: 3, kind: input, shape index: {}]
  %s4 = inlined_call_operand.vmem [shape: f32[1,128], index: 4, kind: input, shape index: {}]
  %s5 = inlined_call_operand.hbm [shape: f32[2,1,128], index: 5, kind: output, shape index: {}]
  %s6 = sld [smem:[#allocation0]]
  $region53: #{encoder_forward.1} parent=0
    _
  %s8 = ssub.s32 1, %s6
  %s9 = scalar_select 0, %s8, %s6
  $region1: #{encoder_forward.1} parent=0
    #allocation7 [shape = 'u8[1024]{0}', space=vmem, size = 0x400, scoped, tag = 'output window, operand 0']
    #allocation8 [shape = 's32[2]{0}', space=sflag, size = 0x8, scoped, tag = 'scoped memory for encoder_forward.1']
    %10 = vsyncpa [#allocation8], 0
    %s11 = scalar_lea.sflag [#allocation8], 1
    %12 = vsyncpa %s11, 0
    loop: start=0, step=1, limit=4
    $region2: #{encoder_forward.1} parent=1 // loop_pre_header
      _
    $region3: #{encoder_forward.1} parent=1 // loop_header
      %s14 = sphi 0, %s18
      %p15 = scmp.ge.s32.totalorder %s14, 4
      %s24 = sphi 0, %s26
      %s27 = sphi 0, %s24
      %s28 = sphi 0, %s27
      %s44 = sphi 0, %s28
      %s48 = sphi 0, %s48
      %s50 = sphi 0, %s48
      %s51 = sphi 0, %s50
      %s65 = sphi 0, %s51
      %s69 = sphi 0, %s69
      %s71 = sphi 0, %s69
      %s72 = sphi 0, %s71
      %s86 = sphi 0, %s72
      %s90 = sphi 0, %s90
      %s92 = sphi 0, %s90
      %s93 = sphi 0, %s92
      %s107 = sphi 0, %s93
      %s111 = sphi 0, %s111
      %s113 = sphi 0, %s111
      %s114 = sphi 0, %s113
      %s128 = sphi 0, %s114
      %s134 = sphi 0, %s136
      %s137 = sphi 0, %s134
      %s138 = sphi 0, %s137
      %s154 = sphi 0, %s138
    $region4: #{encoder_forward.1} parent=1 // loop_header_branch
      %17 = sbr.rel (%p15) target = $region8
    $region5: #{encoder_forward.1} parent=1 // loop_body
      %s19 = ssub.s32 %s14, 1
      %s20 = ssub.s32 %s14, 2
      %s21 = sadd.s32 %s14, 1
      %s22 = ssub.s32 %s14, %s21
      %p23 = scmp.eq.s32.totalorder %s22, 0
      %s25 = sadd.s32 %s24, 1
      %s26 = scalar_select %p23, %s24, %s25
      %p29 = pneg %p23
      %p30 = scmp.eq.s32.totalorder %s14, 1
      %p31 = por %p29, %p30
      %p32 = scmp.ne.s32.totalorder %s24, %s27
      %p33 = scmp.eq.s32.totalorder %s14, 0
      %p34 = por %p32, %p33
      %p35 = scmp.ne.s32.totalorder %s24, %s27
      %p36 = scmp.eq.s32.totalorder %s19, 1
      %p37 = por %p35, %p36
      %p38 = scmp.ne.s32.totalorder %s27, %s28
      %p39 = scmp.eq.s32.totalorder %s19, 0
      %p40 = por %p38, %p39
      %p41 = scmp.ne.s32.totalorder %s27, %s28
      %p42 = scmp.eq.s32.totalorder %s20, 1
      %p43 = por %p41, %p42
      %p45 = scmp.ne.s32.totalorder %s28, %s44
      %p46 = scmp.eq.s32.totalorder %s20, 0
      %p47 = por %p45, %p46
      %s49 = sadd.s32 %s48, 1
      %p52 = scmp.eq.s32.totalorder %s14, 1
      %p53 = scmp.ne.s32.totalorder %s48, %s50
      %p54 = scmp.eq.s32.totalorder %s14, 0
      %p55 = por %p53, %p54
      %p56 = scmp.ne.s32.totalorder %s48, %s50
      %p57 = scmp.eq.s32.totalorder %s19, 1
      %p58 = por %p56, %p57
      %p59 = scmp.ne.s32.totalorder %s50, %s51
      %p60 = scmp.eq.s32.totalorder %s19, 0
      %p61 = por %p59, %p60
      %p62 = scmp.ne.s32.totalorder %s50, %s51
      %p63 = scmp.eq.s32.totalorder %s20, 1
      %p64 = por %p62, %p63
      %p66 = scmp.ne.s32.totalorder %s51, %s65
      %p67 = scmp.eq.s32.totalorder %s20, 0
      %p68 = por %p66, %p67
      %s70 = sadd.s32 %s69, 1
      %p73 = scmp.eq.s32.totalorder %s14, 1
      %p74 = scmp.ne.s32.totalorder %s69, %s71
      %p75 = scmp.eq.s32.totalorder %s14, 0
      %p76 = por %p74, %p75
      %p77 = scmp.ne.s32.totalorder %s69, %s71
      %p78 = scmp.eq.s32.totalorder %s19, 1
      %p79 = por %p77, %p78
      %p80 = scmp.ne.s32.totalorder %s71, %s72
      %p81 = scmp.eq.s32.totalorder %s19, 0
      %p82 = por %p80, %p81
      %p83 = scmp.ne.s32.totalorder %s71, %s72
      %p84 = scmp.eq.s32.totalorder %s20, 1
      %p85 = por %p83, %p84
      %p87 = scmp.ne.s32.totalorder %s72, %s86
      %p88 = scmp.eq.s32.totalorder %s20, 0
      %p89 = por %p87, %p88
      %s91 = sadd.s32 %s90, 1
      %p94 = scmp.eq.s32.totalorder %s14, 1
      %p95 = scmp.ne.s32.totalorder %s90, %s92
      %p96 = scmp.eq.s32.totalorder %s14, 0
      %p97 = por %p95, %p96
      %p98 = scmp.ne.s32.totalorder %s90, %s92
      %p99 = scmp.eq.s32.totalorder %s19, 1
      %p100 = por %p98, %p99
      %p101 = scmp.ne.s32.totalorder %s92, %s93
      %p102 = scmp.eq.s32.totalorder %s19, 0
      %p103 = por %p101, %p102
      %p104 = scmp.ne.s32.totalorder %s92, %s93
      %p105 = scmp.eq.s32.totalorder %s20, 1
      %p106 = por %p104, %p105
      %p108 = scmp.ne.s32.totalorder %s93, %s107
      %p109 = scmp.eq.s32.totalorder %s20, 0
      %p110 = por %p108, %p109
      %s112 = sadd.s32 %s111, 1
      %p115 = scmp.eq.s32.totalorder %s14, 1
      %p116 = scmp.ne.s32.totalorder %s111, %s113
      %p117 = scmp.eq.s32.totalorder %s14, 0
      %p118 = por %p116, %p117
      %p119 = scmp.ne.s32.totalorder %s111, %s113
      %p120 = scmp.eq.s32.totalorder %s19, 1
      %p121 = por %p119, %p120
      %p122 = scmp.ne.s32.totalorder %s113, %s114
      %p123 = scmp.eq.s32.totalorder %s19, 0
      %p124 = por %p122, %p123
      %p125 = scmp.ne.s32.totalorder %s113, %s114
      %p126 = scmp.eq.s32.totalorder %s20, 1
      %p127 = por %p125, %p126
      %p129 = scmp.ne.s32.totalorder %s114, %s128
      %p130 = scmp.eq.s32.totalorder %s20, 0
      %p131 = por %p129, %p130
      %s132 = ssub.s32 %s14, %s21
      %p133 = scmp.eq.s32.totalorder %s132, 0
      %s135 = sadd.s32 %s134, 1
      %s136 = scalar_select %p133, %s134, %s135
      %p139 = pneg %p133
      %p140 = scmp.eq.s32.totalorder %s14, 1
      %p141 = por %p139, %p140
      %p142 = scmp.ne.s32.totalorder %s134, %s137
      %p143 = scmp.eq.s32.totalorder %s14, 0
      %p144 = por %p142, %p143
      %p145 = scmp.ne.s32.totalorder %s134, %s137
      %p146 = scmp.eq.s32.totalorder %s19, 1
      %p147 = por %p145, %p146
      %p148 = scmp.ne.s32.totalorder %s137, %s138
      %p149 = scmp.eq.s32.totalorder %s19, 0
      %p150 = por %p148, %p149
      %p151 = scmp.ne.s32.totalorder %s137, %s138
      %p152 = scmp.eq.s32.totalorder %s20, 1
      %p153 = por %p151, %p152
      %p155 = scmp.ne.s32.totalorder %s138, %s154
      %p156 = scmp.eq.s32.totalorder %s20, 0
      %p157 = por %p155, %p156
      %p158 = scmp.le.s32.totalorder 1, %s14
      %p159 = scmp.lt.s32.totalorder %s14, 3
      %p160 = pnand %p158, %p159
      %p161 = pneg %p160
      // Predicated region
      $region9: #{encoder_forward.1} parent=5 // pred_check
        _
      $region10: #{encoder_forward.1} parent=5 // pred_check_branch
        %163 = sbr.rel (%p160) target = $region12
      $region11: #{encoder_forward.1} parent=5 // pred_region
        %s164 = ssub.s32 %s14, 1
        // Predicated region
        $region13: #{encoder_forward.1} parent=11 // pred_check
          %p165 = pneg %p61
        $region14: #{encoder_forward.1} parent=11 // pred_check_branch
          %167 = sbr.rel (%p165) target = $region16
        $region15: #{encoder_forward.1} parent=11 // pred_region
          _
        $region16: #{encoder_forward.1} parent=11 // pred_fallthru
          _
        // Predicated region
        $region17: #{encoder_forward.1} parent=11 // pred_check
          %p168 = pneg %p82
        $region18: #{encoder_forward.1} parent=11 // pred_check_branch
          %170 = sbr.rel (%p168) target = $region20
        $region19: #{encoder_forward.1} parent=11 // pred_region
          _
        $region20: #{encoder_forward.1} parent=11 // pred_fallthru
          _
        // Predicated region
        $region21: #{encoder_forward.1} parent=11 // pred_check
          %p171 = pneg %p103
        $region22: #{encoder_forward.1} parent=11 // pred_check_branch
          %173 = sbr.rel (%p171) target = $region24
        $region23: #{encoder_forward.1} parent=11 // pred_region
          _
        $region24: #{encoder_forward.1} parent=11 // pred_fallthru
          _
        // Predicated region
        $region25: #{encoder_forward.1} parent=11 // pred_check
          %p174 = pneg %p124
        $region26: #{encoder_forward.1} parent=11 // pred_check_branch
          %176 = sbr.rel (%p174) target = $region28
        $region27: #{encoder_forward.1} parent=11 // pred_region
          _
        $region28: #{encoder_forward.1} parent=11 // pred_fallthru
          _
      $region12: #{encoder_forward.1} parent=5 // pred_fallthru
        _
      %p177 = scmp.lt.s32.totalorder %s14, 2
      // Predicated region
      $region29: #{encoder_forward.1} parent=5 // pred_check
        %p178 = pneg %p177
      $region30: #{encoder_forward.1} parent=5 // pred_check_branch
        %180 = sbr.rel (%p178) target = $region32
      $region31: #{encoder_forward.1} parent=5 // pred_region
        // Predicated region
        $region33: #{encoder_forward.1} parent=31 // pred_check
          %p181 = pneg %p34
        $region34: #{encoder_forward.1} parent=31 // pred_check_branch
          %183 = sbr.rel (%p181) target = $region36
        $region35: #{encoder_forward.1} parent=31 // pred_region
          %p184 = scmp.lt.s32.totalorder %s14, 1
          %s185 = scalar_select %p184, %s14, 1
          %s186 = smul.addr %s185, 28
          %s187 = smul.addr %s186, 4
          %s188 = scalar_lea.vmem %s0, %s187
        $region36: #{encoder_forward.1} parent=31 // pred_fallthru
          _
      $region32: #{encoder_forward.1} parent=5 // pred_fallthru
        _
      %p189 = scmp.le.s32.totalorder 1, %s14
      %p190 = scmp.lt.s32.totalorder %s14, 3
      %p191 = pnand %p189, %p190
      %p192 = pneg %p191
      // Predicated region
      $region37: #{encoder_forward.1} parent=5 // pred_check
        _
      $region38: #{encoder_forward.1} parent=5 // pred_check_branch
        %194 = sbr.rel (%p191) target = $region40
      $region39: #{encoder_forward.1} parent=5 // pred_region
        %s195 = ssub.s32 %s14, 1
        %p196 = scmp.lt.s32.totalorder %s19, 1
        %s197 = scalar_select %p196, %s19, 1
        %s198 = smul.addr %s197, 28
        %s199 = smul.addr %s198, 4
        %s200 = scalar_lea.vmem %s0, %s199
        %p201 = pneg %p40
        %p202 = pneg %p37
        %p203 = pneg %p61
        %p204 = pneg %p58
        %p205 = pneg %p82
        %p206 = pneg %p79
        %p207 = pneg %p103
        %p208 = pneg %p100
        %p209 = pneg %p124
        %p210 = pneg %p121
        %p211 = pneg %p150
        %p212 = pneg %p147
        %s213 = sand.u32 %s137, 1
        %s214 = scalar_lea.sflag [#allocation8], %s213
        %s215 = sand.u32 %s137, 1
        %s216 = scalar_lea.vmem [#allocation7], %s215
        %p217 = scmp.lt.s32.totalorder %s19, 1
        %s218 = scalar_select %p217, %s19, 1
        %s219 = smul.addr %s218, 28
        %s220 = smul.addr %s219, 4
        %s221 = scalar_lea.vmem %s0, %s220
        %vm223 = vcmask 261120
        %224 = vst.msk [vmem:[#allocation2] sm:$0xff] %vm223, 0.0
        %225 = vst.msk [vmem:[#allocation2 + $0x8] sm:$0xff] %vm223, 0.0
        %226 = vst.msk [vmem:[#allocation2 + $0x10] sm:$0xff] %vm223, 0.0
        %227 = vst.msk [vmem:[#allocation2 + $0x18] sm:$0xff] %vm223, 0.0
        %228 = vst.msk [vmem:[#allocation2 + $0x20] sm:$0xff] %vm223, 0.0
        %229 = vst.msk [vmem:[#allocation2 + $0x28] sm:$0xff] %vm223, 0.0
        %230 = vst.msk [vmem:[#allocation2 + $0x30] sm:$0xff] %vm223, 0.0
        %231 = vst.msk [vmem:[#allocation2 + $0x38] sm:$0xff] %vm223, 0.0
        %232 = vst.msk [vmem:[#allocation2 + $0x40] sm:$0xff] %vm223, 0.0
        %233 = vst.msk [vmem:[#allocation3] sm:$0xff] %vm223, 0.0
        %234 = vst.msk [vmem:[#allocation3 + $0x8] sm:$0xff] %vm223, 0.0
        %235 = vst.msk [vmem:[#allocation3 + $0x10] sm:$0xff] %vm223, 0.0
        %236 = vst.msk [vmem:[#allocation3 + $0x18] sm:$0xff] %vm223, 0.0
        %237 = vst.msk [vmem:[#allocation3 + $0x20] sm:$0xff] %vm223, 0.0
        %238 = vst.msk [vmem:[#allocation3 + $0x28] sm:$0xff] %vm223, 0.0
        %239 = vst.msk [vmem:[#allocation3 + $0x30] sm:$0xff] %vm223, 0.0
        %240 = vst.msk [vmem:[#allocation3 + $0x38] sm:$0xff] %vm223, 0.0
        %241 = vst.msk [vmem:[#allocation3 + $0x40] sm:$0xff] %vm223, 0.0
        %242 = vst.msk [vmem:[#allocation4] sm:$0xff] %vm223, 0.0
        %243 = vst.msk [vmem:[#allocation4 + $0x8] sm:$0xff] %vm223, 0.0
        %244 = vst.msk [vmem:[#allocation4 + $0x10] sm:$0xff] %vm223, 0.0
        %245 = vst.msk [vmem:[#allocation4 + $0x18] sm:$0xff] %vm223, 0.0
        %246 = vst.msk [vmem:[#allocation4 + $0x20] sm:$0xff] %vm223, 0.0
        %247 = vst.msk [vmem:[#allocation4 + $0x28] sm:$0xff] %vm223, 0.0
        %248 = vst.msk [vmem:[#allocation4 + $0x30] sm:$0xff] %vm223, 0.0
        %249 = vst.msk [vmem:[#allocation4 + $0x38] sm:$0xff] %vm223, 0.0
        %250 = vst.msk [vmem:[#allocation4 + $0x40] sm:$0xff] %vm223, 0.0
        %251 = vst.msk [vmem:[#allocation5] sm:$0xff] %vm223, 0.0
        %252 = vst.msk [vmem:[#allocation5 + $0x8] sm:$0xff] %vm223, 0.0
        %253 = vst.msk [vmem:[#allocation5 + $0x10] sm:$0xff] %vm223, 0.0
        %254 = vst.msk [vmem:[#allocation5 + $0x18] sm:$0xff] %vm223, 0.0
        %255 = vst.msk [vmem:[#allocation5 + $0x20] sm:$0xff] %vm223, 0.0
        %256 = vst.msk [vmem:[#allocation5 + $0x28] sm:$0xff] %vm223, 0.0
        %257 = vst.msk [vmem:[#allocation5 + $0x30] sm:$0xff] %vm223, 0.0
        %258 = vst.msk [vmem:[#allocation5 + $0x38] sm:$0xff] %vm223, 0.0
        %259 = vst.msk [vmem:[#allocation5 + $0x40] sm:$0xff] %vm223, 0.0
        %v260 = vld [vmem:[%s221] sm:$0xf]
        %v261 = vld [vmem:[%s221 + $0x4] sm:$0xf]
        %v262 = vld [vmem:[%s221 + $0x8] sm:$0xf]
        %v263 = vld [vmem:[%s221 + $0xc] sm:$0xf]
        %v264 = vld [vmem:[%s221 + $0x10] sm:$0xf]
        %v265 = vld [vmem:[%s221 + $0x14] sm:$0xf]
        %v266 = vld [vmem:[%s221 + $0x18] sm:$0xf]
        %v267 = vld [vmem:[%s221 + $0x1c] sm:$0xf]
        %v268 = vld [vmem:[%s221 + $0x20] sm:$0xf]
        %v269 = vld [vmem:[%s221 + $0x24] sm:$0xf]
        %v270 = vld [vmem:[%s221 + $0x28] sm:$0xf]
        %v271 = vld [vmem:[%s221 + $0x2c] sm:$0xf]
        %v272 = vld [vmem:[%s221 + $0x30] sm:$0xf]
        %v273 = vld [vmem:[%s221 + $0x34] sm:$0xf]
        %v274 = vld [vmem:[%s221 + $0x38] sm:$0xf]
        %v275 = vld [vmem:[%s221 + $0x3c] sm:$0xf]
        %v276 = vld [vmem:[%s221 + $0x40] sm:$0xf]
        %v277 = vld [vmem:[%s221 + $0x44] sm:$0xf]
        %v278 = vld [vmem:[%s221 + $0x48] sm:$0xf]
        %v279 = vld [vmem:[%s221 + $0x4c] sm:$0xf]
        %v280 = vld [vmem:[%s221 + $0x50] sm:$0xf]
        %v281 = vld [vmem:[%s221 + $0x54] sm:$0xf]
        %v282 = vld [vmem:[%s221 + $0x58] sm:$0xf]
        %v283 = vld [vmem:[%s221 + $0x5c] sm:$0xf]
        %v284 = vld [vmem:[%s221 + $0x60] sm:$0xf]
        %v285 = vld [vmem:[%s221 + $0x64] sm:$0xf]
        %v286 = vld [vmem:[%s221 + $0x68] sm:$0xf]
        %v287 = vld [vmem:[%s221 + $0x6c] sm:$0xf]
        %v288 = vld [vmem:[%s1] sm:$0xf]
        %v289 = vld [vmem:[%s1 + $0x4] sm:$0x1]
        %v297 = vunpack.c.l.b16 %v260
        %v298 = vunpack.c.l.b16 %v261
        %v299 = vunpack.c.l.b16 %v262
        %v300 = vunpack.c.l.b16 %v263
        %v301 = vunpack.c.l.b16 %v264
        %v302 = vunpack.c.l.b16 %v265
        %v303 = vunpack.c.l.b16 %v266
        %v304 = vpack.c.b16 %v298, %v297
        %v305 = vpack.c.b16 %v300, %v299
        %v306 = vpack.c.b16 %v302, %v301
        %v307 = vpack.c.b16 %v303, %v303
        %v310 = vunpack.c.l.b16 %v288
        %v311 = vunpack.c.l.b16 %v289
        %v312 = vpack.c.b16 %v311, %v310
        %vm313 = vcmask 72704
        %v315 = vsel %vm313, %v304, 0
        %v318 = vsel %vm313, %v305, 0
        %v321 = vsel %vm313, %v306, 0
        %v324 = vsel %vm313, %v307, 0
        %vm326 = vcmask 1043456
        %vm327 = vcmask 1044480
        %v328 = vsel %vm326, 4294967295, 65535
        %v329 = vsel %vm327, %v328, 0
        %v331 = vand.u32 %v312, %v329
        %333 = vmatprep.subr.bf16.mxu0 0
        %334 = vmatpush1.bf16.msra.mxu0 %v331
        %335 = vmatprep.subr.bf16.mxu0 0
        %336 = vmatpush1.bf16.msra.mxu0 0
        %337 = vmatprep.subr.bf16.mxu0 0
        %338 = vmatpush1.bf16.msra.mxu0 0
        %339 = vmatprep.subr.bf16.mxu0 0
        %340 = vmatpush1.bf16.msra.mxu0 0
        %341 = vmatprep.subr.bf16.mxu0 0
        %342 = vmatpush1.bf16.msra.mxu0 0
        %343 = vmatprep.subr.bf16.mxu0 0
        %344 = vmatpush1.bf16.msra.mxu0 0
        %345 = vmatprep.subr.bf16.mxu0 0
        %346 = vmatpush1.bf16.msra.mxu0 0
        %347 = vmatprep.subr.bf16.mxu0 0
        %348 = vmatpush1.bf16.msra.mxu0 0
        %349 = vmatprep.subr.bf16.mxu0 0
        %350 = vmatpush1.bf16.msra.mxu0 0
        %351 = vmatprep.subr.bf16.mxu0 0
        %352 = vmatpush1.bf16.msra.mxu0 0
        %353 = vmatprep.subr.bf16.mxu0 0
        %354 = vmatpush1.bf16.msra.mxu0 0
        %355 = vmatprep.subr.bf16.mxu0 0
        %356 = vmatpush1.bf16.msra.mxu0 0
        %357 = vmatprep.subr.bf16.mxu0 0
        %358 = vmatpush1.bf16.msra.mxu0 0
        %359 = vmatprep.subr.bf16.mxu0 0
        %360 = vmatpush1.bf16.msra.mxu0 0
        %361 = vmatprep.subr.bf16.mxu0 0
        %362 = vmatpush1.bf16.msra.mxu0 0
        %363 = vmatprep.subr.bf16.mxu0 0
        %364 = vmatpush1.bf16.msra.mxu0 0
        %365 = vmatprep.mubr.bf16.mxu0 0
        %366 = vmatmul.mubr.bf16.gmra.mrb[0].mxu0 %v315
        %v367 = vpop.f32.mrb[0].mxu0
        %v368 = vadd.f32 0.0, %v367
        %v369 = vpop.f32.mrb[0].mxu0
        %v370 = vpop.f32.mrb[0].mxu0
        %v371 = vadd.f32 0.0, %v370
        %v372 = vpop.f32.mrb[0].mxu0
        %373 = vmatprep.mubr.bf16.mxu0 0
        %374 = vmatmul.mubr.bf16.gmra.mrb[0].mxu0 %v318
        %v375 = vpop.f32.mrb[0].mxu0
        %v376 = vadd.f32 0.0, %v375
        %v377 = vpop.f32.mrb[0].mxu0
        %v378 = vpop.f32.mrb[0].mxu0
        %v379 = vadd.f32 0.0, %v378
        %v380 = vpop.f32.mrb[0].mxu0
        %381 = vmatprep.mubr.bf16.mxu0 0
        %382 = vmatmul.mubr.bf16.gmra.mrb[0].mxu0 %v321
        %v383 = vpop.f32.mrb[0].mxu0
        %v384 = vadd.f32 0.0, %v383
        %v385 = vpop.f32.mrb[0].mxu0
        %v386 = vpop.f32.mrb[0].mxu0
        %v387 = vadd.f32 0.0, %v386
        %v388 = vpop.f32.mrb[0].mxu0
        %389 = vmatprep.mubr.bf16.mxu0 0
        %390 = vmatmul.mubr.bf16.gmra.mrb[0].mxu0 %v324
        %v391 = vpop.f32.mrb[0].mxu0
        %v392 = vadd.f32 0.0, %v391
        %v393 = vpop.f32.mrb[0].mxu0
        %v394 = vpop.f32.mrb[0].mxu0
        %v395 = vpop.f32.mrb[0].mxu0
        %396 = vdwg.mxu0
        %v397 = vmax.f32 %v368, 0.0
        %v398 = vmax.f32 %v371, 0.0
        %v399 = vmax.f32 %v376, 0.0
        %v400 = vmax.f32 %v379, 0.0
        %v401 = vmax.f32 %v384, 0.0
        %v402 = vmax.f32 %v387, 0.0
        %v403 = vmax.f32 %v392, 0.0
        %404 = vst.msk [vmem:[#allocation2 + $0x9] sm:$0xff] %vm223, %v397
        %405 = vst.msk [vmem:[#allocation2 + $0x11] sm:$0xff] %vm223, %v398
        %406 = vst.msk [vmem:[#allocation2 + $0x19] sm:$0xff] %vm223, %v399
        %407 = vst.msk [vmem:[#allocation2 + $0x21] sm:$0xff] %vm223, %v400
        %408 = vst.msk [vmem:[#allocation2 + $0x29] sm:$0xff] %vm223, %v401
        %409 = vst.msk [vmem:[#allocation2 + $0x31] sm:$0xff] %vm223, %v402
        %410 = vst.msk [vmem:[#allocation2 + $0x39] sm:$0xff] %vm223, %v403
        %v418 = vunpack.c.l.b16 %v267
        %v419 = vunpack.c.l.b16 %v268
        %v420 = vunpack.c.l.b16 %v269
        %v421 = vunpack.c.l.b16 %v270
        %v422 = vunpack.c.l.b16 %v271
        %v423 = vunpack.c.l.b16 %v272
        %v424 = vunpack.c.l.b16 %v273
        %v425 = vpack.c.b16 %v419, %v418
        %v426 = vpack.c.b16 %v421, %v420
        %v427 = vpack.c.b16 %v423, %v422
        %v428 = vpack.c.b16 %v424, %v424
        %v430 = vsel %vm313, %v425, 0
        %v433 = vsel %vm313, %v426, 0
        %v436 = vsel %vm313, %v427, 0
        %v439 = vsel %vm313, %v428, 0
        %441 = vmatprep.subr.bf16.mxu0 0
        %442 = vmatpush1.bf16.msra.mxu0 %v331
        %443 = vmatprep.subr.bf16.mxu0 0
        %444 = vmatpush1.bf16.msra.mxu0 0
        %445 = vmatprep.subr.bf16.mxu0 0
        %446 = vmatpush1.bf16.msra.mxu0 0
        %447 = vmatprep.subr.bf16.mxu0 0
        %448 = vmatpush1.bf16.msra.mxu0 0
        %449 = vmatprep.subr.bf16.mxu0 0
        %450 = vmatpush1.bf16.msra.mxu0 0
        %451 = vmatprep.subr.bf16.mxu0 0
        %452 = vmatpush1.bf16.msra.mxu0 0
        %453 = vmatprep.subr.bf16.mxu0 0
        %454 = vmatpush1.bf16.msra.mxu0 0
        %455 = vmatprep.subr.bf16.mxu0 0
        %456 = vmatpush1.bf16.msra.mxu0 0
        %457 = vmatprep.subr.bf16.mxu0 0
        %458 = vmatpush1.bf16.msra.mxu0 0
        %459 = vmatprep.subr.bf16.mxu0 0
        %460 = vmatpush1.bf16.msra.mxu0 0
        %461 = vmatprep.subr.bf16.mxu0 0
        %462 = vmatpush1.bf16.msra.mxu0 0
        %463 = vmatprep.subr.bf16.mxu0 0
        %464 = vmatpush1.bf16.msra.mxu0 0
        %465 = vmatprep.subr.bf16.mxu0 0
        %466 = vmatpush1.bf16.msra.mxu0 0
        %467 = vmatprep.subr.bf16.mxu0 0
        %468 = vmatpush1.bf16.msra.mxu0 0
        %469 = vmatprep.subr.bf16.mxu0 0
        %470 = vmatpush1.bf16.msra.mxu0 0
        %471 = vmatprep.subr.bf16.mxu0 0
        %472 = vmatpush1.bf16.msra.mxu0 0
        %473 = vmatprep.mubr.bf16.mxu0 0
        %474 = vmatmul.mubr.bf16.gmra.mrb[0].mxu0 %v430
        %v475 = vpop.f32.mrb[0].mxu0
        %v476 = vadd.f32 0.0, %v475
        %v477 = vpop.f32.mrb[0].mxu0
        %v478 = vpop.f32.mrb[0].mxu0
        %v479 = vadd.f32 0.0, %v478
        %v480 = vpop.f32.mrb[0].mxu0
        %481 = vmatprep.mubr.bf16.mxu0 0
        %482 = vmatmul.mubr.bf16.gmra.mrb[0].mxu0 %v433
        %v483 = vpop.f32.mrb[0].mxu0
        %v484 = vadd.f32 0.0, %v483
        %v485 = vpop.f32.mrb[0].mxu0
        %v486 = vpop.f32.mrb[0].mxu0
        %v487 = vadd.f32 0.0, %v486
        %v488 = vpop.f32.mrb[0].mxu0
        %489 = vmatprep.mubr.bf16.mxu0 0
        %490 = vmatmul.mubr.bf16.gmra.mrb[0].mxu0 %v436
        %v491 = vpop.f32.mrb[0].mxu0
        %v492 = vadd.f32 0.0, %v491
        %v493 = vpop.f32.mrb[0].mxu0
        %v494 = vpop.f32.mrb[0].mxu0
        %v495 = vadd.f32 0.0, %v494
        %v496 = vpop.f32.mrb[0].mxu0
        %497 = vmatprep.mubr.bf16.mxu0 0
        %498 = vmatmul.mubr.bf16.gmra.mrb[0].mxu0 %v439
        %v499 = vpop.f32.mrb[0].mxu0
        %v500 = vadd.f32 0.0, %v499
        %v501 = vpop.f32.mrb[0].mxu0
        %v502 = vpop.f32.mrb[0].mxu0
        %v503 = vpop.f32.mrb[0].mxu0
        %504 = vdwg.mxu0
        %v505 = vmax.f32 %v476, 0.0
        %v506 = vmax.f32 %v479, 0.0
        %v507 = vmax.f32 %v484, 0.0
        %v508 = vmax.f32 %v487, 0.0
        %v509 = vmax.f32 %v492, 0.0
        %v510 = vmax.f32 %v495, 0.0
        %v511 = vmax.f32 %v500, 0.0
        %512 = vst.msk [vmem:[#allocation3 + $0x8] sm:$0xff] %vm223, %v505
        %513 = vst.msk [vmem:[#allocation3 + $0x10] sm:$0xff] %vm223, %v506
        %514 = vst.msk [vmem:[#allocation3 + $0x18] sm:$0xff] %vm223, %v507
        %515 = vst.msk [vmem:[#allocation3 + $0x20] sm:$0xff] %vm223, %v508
        %516 = vst.msk [vmem:[#allocation3 + $0x28] sm:$0xff] %vm223, %v509
        %517 = vst.msk [vmem:[#allocation3 + $0x30] sm:$0xff] %vm223, %v510
        %518 = vst.msk [vmem:[#allocation3 + $0x38] sm:$0xff] %vm223, %v511
        %v526 = vunpack.c.l.b16 %v274
        %v527 = vunpack.c.l.b16 %v275
        %v528 = vunpack.c.l.b16 %v276
        %v529 = vunpack.c.l.b16 %v277
        %v530 = vunpack.c.l.b16 %v278
        %v531 = vunpack.c.l.b16 %v279
        %v532 = vunpack.c.l.b16 %v280
        %v533 = vpack.c.b16 %v527, %v526
        %v534 = vpack.c.b16 %v529, %v528
        %v535 = vpack.c.b16 %v531, %v530
        %v536 = vpack.c.b16 %v532, %v532
        %v538 = vsel %vm313, %v533, 0
        %v541 = vsel %vm313, %v534, 0
        %v544 = vsel %vm313, %v535, 0
        %v547 = vsel %vm313, %v536, 0
        %549 = vmatprep.subr.bf16.mxu0 0
        %550 = vmatpush1.bf16.msra.mxu0 %v331
        %551 = vmatprep.subr.bf16.mxu0 0
        %552 = vmatpush1.bf16.msra.mxu0 0
        %553 = vmatprep.subr.bf16.mxu0 0
        %554 = vmatpush1.bf16.msra.mxu0 0
        %555 = vmatprep.subr.bf16.mxu0 0
        %556 = vmatpush1.bf16.msra.mxu0 0
        %557 = vmatprep.subr.bf16.mxu0 0
        %558 = vmatpush1.bf16.msra.mxu0 0
        %559 = vmatprep.subr.bf16.mxu0 0
        %560 = vmatpush1.bf16.msra.mxu0 0
        %561 = vmatprep.subr.bf16.mxu0 0
        %562 = vmatpush1.bf16.msra.mxu0 0
        %563 = vmatprep.subr.bf16.mxu0 0
        %564 = vmatpush1.bf16.msra.mxu0 0
        %565 = vmatprep.subr.bf16.mxu0 0
        %566 = vmatpush1.bf16.msra.mxu0 0
        %567 = vmatprep.subr.bf16.mxu0 0
        %568 = vmatpush1.bf16.msra.mxu0 0
        %569 = vmatprep.subr.bf16.mxu0 0
        %570 = vmatpush1.bf16.msra.mxu0 0
        %571 = vmatprep.subr.bf16.mxu0 0
        %572 = vmatpush1.bf16.msra.mxu0 0
        %573 = vmatprep.subr.bf16.mxu0 0
        %574 = vmatpush1.bf16.msra.mxu0 0
        %575 = vmatprep.subr.bf16.mxu0 0
        %576 = vmatpush1.bf16.msra.mxu0 0
        %577 = vmatprep.subr.bf16.mxu0 0
        %578 = vmatpush1.bf16.msra.mxu0 0
        %579 = vmatprep.subr.bf16.mxu0 0
        %580 = vmatpush1.bf16.msra.mxu0 0
        %581 = vmatprep.mubr.bf16.mxu0 0
        %582 = vmatmul.mubr.bf16.gmra.mrb[0].mxu0 %v538
        %v583 = vpop.f32.mrb[0].mxu0
        %v584 = vadd.f32 0.0, %v583
        %v585 = vpop.f32.mrb[0].mxu0
        %v586 = vpop.f32.mrb[0].mxu0
        %v587 = vadd.f32 0.0, %v586
        %v588 = vpop.f32.mrb[0].mxu0
        %589 = vmatprep.mubr.bf16.mxu0 0
        %590 = vmatmul.mubr.bf16.gmra.mrb[0].mxu0 %v541
        %v591 = vpop.f32.mrb[0].mxu0
        %v592 = vadd.f32 0.0, %v591
        %v593 = vpop.f32.mrb[0].mxu0
        %v594 = vpop.f32.mrb[0].mxu0
        %v595 = vadd.f32 0.0, %v594
        %v596 = vpop.f32.mrb[0].mxu0
        %597 = vmatprep.mubr.bf16.mxu0 0
        %598 = vmatmul.mubr.bf16.gmra.mrb[0].mxu0 %v544
        %v599 = vpop.f32.mrb[0].mxu0
        %v600 = vadd.f32 0.0, %v599
        %v601 = vpop.f32.mrb[0].mxu0
        %v602 = vpop.f32.mrb[0].mxu0
        %v603 = vadd.f32 0.0, %v602
        %v604 = vpop.f32.mrb[0].mxu0
        %605 = vmatprep.mubr.bf16.mxu0 0
        %606 = vmatmul.mubr.bf16.gmra.mrb[0].mxu0 %v547
        %v607 = vpop.f32.mrb[0].mxu0
        %v608 = vadd.f32 0.0, %v607
        %v609 = vpop.f32.mrb[0].mxu0
        %v610 = vpop.f32.mrb[0].mxu0
        %v611 = vpop.f32.mrb[0].mxu0
        %612 = vdwg.mxu0
        %v613 = vmax.f32 %v584, 0.0
        %v614 = vmax.f32 %v587, 0.0
        %v615 = vmax.f32 %v592, 0.0
        %v616 = vmax.f32 %v595, 0.0
        %v617 = vmax.f32 %v600, 0.0
        %v618 = vmax.f32 %v603, 0.0
        %v619 = vmax.f32 %v608, 0.0
        %620 = vst.msk [vmem:[#allocation4 + $0x1] sm:$0xff] %vm223, %v613
        %621 = vst.msk [vmem:[#allocation4 + $0x9] sm:$0xff] %vm223, %v614
        %622 = vst.msk [vmem:[#allocation4 + $0x11] sm:$0xff] %vm223, %v615
        %623 = vst.msk [vmem:[#allocation4 + $0x19] sm:$0xff] %vm223, %v616
        %624 = vst.msk [vmem:[#allocation4 + $0x21] sm:$0xff] %vm223, %v617
        %625 = vst.msk [vmem:[#allocation4 + $0x29] sm:$0xff] %vm223, %v618
        %626 = vst.msk [vmem:[#allocation4 + $0x31] sm:$0xff] %vm223, %v619
        %v634 = vunpack.c.l.b16 %v281
        %v635 = vunpack.c.l.b16 %v282
        %v636 = vunpack.c.l.b16 %v283
        %v637 = vunpack.c.l.b16 %v284
        %v638 = vunpack.c.l.b16 %v285
        %v639 = vunpack.c.l.b16 %v286
        %v640 = vunpack.c.l.b16 %v287
        %v641 = vpack.c.b16 %v635, %v634
        %v642 = vpack.c.b16 %v637, %v636
        %v643 = vpack.c.b16 %v639, %v638
        %v644 = vpack.c.b16 %v640, %v640
        %v646 = vsel %vm313, %v641, 0
        %v649 = vsel %vm313, %v642, 0
        %v652 = vsel %vm313, %v643, 0
        %v655 = vsel %vm313, %v644, 0
        %657 = vmatprep.subr.bf16.mxu0 0
        %658 = vmatpush1.bf16.msra.mxu0 %v331
        %659 = vmatprep.subr.bf16.mxu0 0
        %660 = vmatpush1.bf16.msra.mxu0 0
        %661 = vmatprep.subr.bf16.mxu0 0
        %662 = vmatpush1.bf16.msra.mxu0 0
        %663 = vmatprep.subr.bf16.mxu0 0
        %664 = vmatpush1.bf16.msra.mxu0 0
        %665 = vmatprep.subr.bf16.mxu0 0
        %666 = vmatpush1.bf16.msra.mxu0 0
        %667 = vmatprep.subr.bf16.mxu0 0
        %668 = vmatpush1.bf16.msra.mxu0 0
        %669 = vmatprep.subr.bf16.mxu0 0
        %670 = vmatpush1.bf16.msra.mxu0 0
        %671 = vmatprep.subr.bf16.mxu0 0
        %672 = vmatpush1.bf16.msra.mxu0 0
        %673 = vmatprep.subr.bf16.mxu0 0
        %674 = vmatpush1.bf16.msra.mxu0 0
        %675 = vmatprep.subr.bf16.mxu0 0
        %676 = vmatpush1.bf16.msra.mxu0 0
        %677 = vmatprep.subr.bf16.mxu0 0
        %678 = vmatpush1.bf16.msra.mxu0 0
        %679 = vmatprep.subr.bf16.mxu0 0
        %680 = vmatpush1.bf16.msra.mxu0 0
        %681 = vmatprep.subr.bf16.mxu0 0
        %682 = vmatpush1.bf16.msra.mxu0 0
        %683 = vmatprep.subr.bf16.mxu0 0
        %684 = vmatpush1.bf16.msra.mxu0 0
        %685 = vmatprep.subr.bf16.mxu0 0
        %686 = vmatpush1.bf16.msra.mxu0 0
        %687 = vmatprep.subr.bf16.mxu0 0
        %688 = vmatpush1.bf16.msra.mxu0 0
        %689 = vmatprep.mubr.bf16.mxu0 0
        %690 = vmatmul.mubr.bf16.gmra.mrb[0].mxu0 %v646
        %v691 = vpop.f32.mrb[0].mxu0
        %v692 = vadd.f32 0.0, %v691
        %v693 = vpop.f32.mrb[0].mxu0
        %v694 = vpop.f32.mrb[0].mxu0
        %v695 = vadd.f32 0.0, %v694
        %v696 = vpop.f32.mrb[0].mxu0
        %697 = vmatprep.mubr.bf16.mxu0 0
        %698 = vmatmul.mubr.bf16.gmra.mrb[0].mxu0 %v649
        %v699 = vpop.f32.mrb[0].mxu0
        %v700 = vadd.f32 0.0, %v699
        %v701 = vpop.f32.mrb[0].mxu0
        %v702 = vpop.f32.mrb[0].mxu0
        %v703 = vadd.f32 0.0, %v702
        %v704 = vpop.f32.mrb[0].mxu0
        %705 = vmatprep.mubr.bf16.mxu0 0
        %706 = vmatmul.mubr.bf16.gmra.mrb[0].mxu0 %v652
        %v707 = vpop.f32.mrb[0].mxu0
        %v708 = vadd.f32 0.0, %v707
        %v709 = vpop.f32.mrb[0].mxu0
        %v710 = vpop.f32.mrb[0].mxu0
        %v711 = vadd.f32 0.0, %v710
        %v712 = vpop.f32.mrb[0].mxu0
        %713 = vmatprep.mubr.bf16.mxu0 0
        %714 = vmatmul.mubr.bf16.gmra.mrb[0].mxu0 %v655
        %v715 = vpop.f32.mrb[0].mxu0
        %v716 = vadd.f32 0.0, %v715
        %v717 = vpop.f32.mrb[0].mxu0
        %v718 = vpop.f32.mrb[0].mxu0
        %v719 = vpop.f32.mrb[0].mxu0
        %720 = vdwg.mxu0
        %v721 = vmax.f32 %v692, 0.0
        %v722 = vmax.f32 %v695, 0.0
        %v723 = vmax.f32 %v700, 0.0
        %v724 = vmax.f32 %v703, 0.0
        %v725 = vmax.f32 %v708, 0.0
        %v726 = vmax.f32 %v711, 0.0
        %v727 = vmax.f32 %v716, 0.0
        %728 = vst.msk [vmem:[#allocation5] sm:$0xff] %vm223, %v721
        %729 = vst.msk [vmem:[#allocation5 + $0x8] sm:$0xff] %vm223, %v722
        %730 = vst.msk [vmem:[#allocation5 + $0x10] sm:$0xff] %vm223, %v723
        %731 = vst.msk [vmem:[#allocation5 + $0x18] sm:$0xff] %vm223, %v724
        %732 = vst.msk [vmem:[#allocation5 + $0x20] sm:$0xff] %vm223, %v725
        %733 = vst.msk [vmem:[#allocation5 + $0x28] sm:$0xff] %vm223, %v726
        %734 = vst.msk [vmem:[#allocation5 + $0x30] sm:$0xff] %vm223, %v727
        %v735 = vld [vmem:[#allocation2] sm:$0xff]
        %v736 = vld [vmem:[#allocation2 + $0x8] sm:$0xff]
        %v737 = vld [vmem:[#allocation2 + $0x10] sm:$0xff]
        %v738 = vld [vmem:[#allocation2 + $0x18] sm:$0xff]
        %v739 = vld [vmem:[#allocation2 + $0x20] sm:$0xff]
        %v740 = vld [vmem:[#allocation2 + $0x28] sm:$0xff]
        %v741 = vld [vmem:[#allocation2 + $0x30] sm:$0xff]
        %v742 = vpack.c.bf16 %v736, %v735
        %v743 = vpack.c.bf16 %v738, %v737
        %v744 = vpack.c.bf16 %v740, %v739
        %v745 = vpack.c.bf16 %v741, %v741
        %v746 = vld [vmem:[%s2] sm:$0xf]
        %v747 = vld [vmem:[%s2 + $0x4] sm:$0xf]
        %v748 = vld [vmem:[%s2 + $0x8] sm:$0xf]
        %v749 = vld [vmem:[%s2 + $0xc] sm:$0xf]
        %v750 = vld [vmem:[#allocation3] sm:$0xff]
        %v751 = vld [vmem:[#allocation3 + $0x8] sm:$0xff]
        %v752 = vld [vmem:[#allocation3 + $0x10] sm:$0xff]
        %v753 = vld [vmem:[#allocation3 + $0x18] sm:$0xff]
        %v754 = vld [vmem:[#allocation3 + $0x20] sm:$0xff]
        %v755 = vld [vmem:[#allocation3 + $0x28] sm:$0xff]
        %v756 = vld [vmem:[#allocation3 + $0x30] sm:$0xff]
        %v757 = vpack.c.bf16 %v751, %v750
        %v758 = vpack.c.bf16 %v753, %v752
        %v759 = vpack.c.bf16 %v755, %v754
        %v760 = vpack.c.bf16 %v756, %v756
        %s761 = scalar_lea.vmem %s2, 16
        %v762 = vld [vmem:[%s761] sm:$0xf]
        %v763 = vld [vmem:[%s761 + $0x4] sm:$0xf]
        %v764 = vld [vmem:[%s761 + $0x8] sm:$0xf]
        %v765 = vld [vmem:[%s761 + $0xc] sm:$0xf]
        %v770 = vunpack.c.l.b16 %v762
        %v771 = vunpack.c.l.b16 %v763
        %v772 = vunpack.c.l.b16 %v764
        %v773 = vunpack.c.l.b16 %v765
        %v774 = vpack.c.b16 %v771, %v770
        %v775 = vpack.c.b16 %v773, %v772
        %v779 = vsel %vm223, %v757, 0
        %v782 = vsel %vm223, %v758, 0
        %v785 = vsel %vm223, %v759, 0
        %v788 = vsel %vm223, %v760, 0
        %790 = vmatprep.subr.bf16.mxu0 0
        %791 = vmatpush1.bf16.msra.mxu0 %v774
        %792 = vmatprep.subr.bf16.mxu0 0
        %793 = vmatpush1.bf16.msra.mxu0 %v775
        %794 = vmatprep.subr.bf16.mxu0 0
        %795 = vmatpush1.bf16.msra.mxu0 0
        %796 = vmatprep.subr.bf16.mxu0 0
        %797 = vmatpush1.bf16.msra.mxu0 0
        %798 = vmatprep.subr.bf16.mxu0 0
        %799 = vmatpush1.bf16.msra.mxu0 0
        %800 = vmatprep.subr.bf16.mxu0 0
        %801 = vmatpush1.bf16.msra.mxu0 0
        %802 = vmatprep.subr.bf16.mxu0 0
        %803 = vmatpush1.bf16.msra.mxu0 0
        %804 = vmatprep.subr.bf16.mxu0 0
        %805 = vmatpush1.bf16.msra.mxu0 0
        %806 = vmatprep.subr.bf16.mxu0 0
        %807 = vmatpush1.bf16.msra.mxu0 0
        %808 = vmatprep.subr.bf16.mxu0 0
        %809 = vmatpush1.bf16.msra.mxu0 0
        %810 = vmatprep.subr.bf16.mxu0 0
        %811 = vmatpush1.bf16.msra.mxu0 0
        %812 = vmatprep.subr.bf16.mxu0 0
        %813 = vmatpush1.bf16.msra.mxu0 0
        %814 = vmatprep.subr.bf16.mxu0 0
        %815 = vmatpush1.bf16.msra.mxu0 0
        %816 = vmatprep.subr.bf16.mxu0 0
        %817 = vmatpush1.bf16.msra.mxu0 0
        %818 = vmatprep.subr.bf16.mxu0 0
        %819 = vmatpush1.bf16.msra.mxu0 0
        %820 = vmatprep.subr.bf16.mxu0 0
        %821 = vmatpush1.bf16.msra.mxu0 0
        %822 = vmatprep.mubr.bf16.mxu0 0
        %823 = vmatmul.mubr.bf16.gmra.mrb[0].mxu0 %v779
        %v824 = vpop.f32.mrb[0].mxu0
        %v825 = vadd.f32 0.0, %v824
        %v826 = vpop.f32.mrb[0].mxu0
        %v827 = vpop.f32.mrb[0].mxu0
        %v828 = vadd.f32 0.0, %v827
        %v829 = vpop.f32.mrb[0].mxu0
        %830 = vmatprep.mubr.bf16.mxu0 0
        %831 = vmatmul.mubr.bf16.gmra.mrb[0].mxu0 %v782
        %v832 = vpop.f32.mrb[0].mxu0
        %v833 = vadd.f32 0.0, %v832
        %v834 = vpop.f32.mrb[0].mxu0
        %v835 = vpop.f32.mrb[0].mxu0
        %v836 = vadd.f32 0.0, %v835
        %v837 = vpop.f32.mrb[0].mxu0
        %838 = vmatprep.mubr.bf16.mxu0 0
        %839 = vmatmul.mubr.bf16.gmra.mrb[0].mxu0 %v785
        %v840 = vpop.f32.mrb[0].mxu0
        %v841 = vadd.f32 0.0, %v840
        %v842 = vpop.f32.mrb[0].mxu0
        %v843 = vpop.f32.mrb[0].mxu0
        %v844 = vadd.f32 0.0, %v843
        %v845 = vpop.f32.mrb[0].mxu0
        %846 = vmatprep.mubr.bf16.mxu0 0
        %847 = vmatmul.mubr.bf16.gmra.mrb[0].mxu0 %v788
        %v848 = vpop.f32.mrb[0].mxu0
        %v849 = vadd.f32 0.0, %v848
        %v850 = vpop.f32.mrb[0].mxu0
        %v851 = vpop.f32.mrb[0].mxu0
        %v852 = vpop.f32.mrb[0].mxu0
        %853 = vdwg.mxu0
        %v858 = vunpack.c.l.b16 %v746
        %v859 = vunpack.c.l.b16 %v747
        %v860 = vunpack.c.l.b16 %v748
        %v861 = vunpack.c.l.b16 %v749
        %v862 = vpack.c.b16 %v859, %v858
        %v863 = vpack.c.b16 %v861, %v860
        %v867 = vsel %vm223, %v742, 0
        %v870 = vsel %vm223, %v743, 0
        %v873 = vsel %vm223, %v744, 0
        %v876 = vsel %vm223, %v745, 0
        %878 = vmatprep.subr.bf16.mxu0 0
        %879 = vmatpush1.bf16.msra.mxu0 %v862
        %880 = vmatprep.subr.bf16.mxu0 0
        %881 = vmatpush1.bf16.msra.mxu0 %v863
        %882 = vmatprep.subr.bf16.mxu0 0
        %883 = vmatpush1.bf16.msra.mxu0 0
        %884 = vmatprep.subr.bf16.mxu0 0
        %885 = vmatpush1.bf16.msra.mxu0 0
        %886 = vmatprep.subr.bf16.mxu0 0
        %887 = vmatpush1.bf16.msra.mxu0 0
        %888 = vmatprep.subr.bf16.mxu0 0
        %889 = vmatpush1.bf16.msra.mxu0 0
        %890 = vmatprep.subr.bf16.mxu0 0
        %891 = vmatpush1.bf16.msra.mxu0 0
        %892 = vmatprep.subr.bf16.mxu0 0
        %893 = vmatpush1.bf16.msra.mxu0 0
        %894 = vmatprep.subr.bf16.mxu0 0
        %895 = vmatpush1.bf16.msra.mxu0 0
        %896 = vmatprep.subr.bf16.mxu0 0
        %897 = vmatpush1.bf16.msra.mxu0 0
        %898 = vmatprep.subr.bf16.mxu0 0
        %899 = vmatpush1.bf16.msra.mxu0 0
        %900 = vmatprep.subr.bf16.mxu0 0
        %901 = vmatpush1.bf16.msra.mxu0 0
        %902 = vmatprep.subr.bf16.mxu0 0
        %903 = vmatpush1.bf16.msra.mxu0 0
        %904 = vmatprep.subr.bf16.mxu0 0
        %905 = vmatpush1.bf16.msra.mxu0 0
        %906 = vmatprep.subr.bf16.mxu0 0
        %907 = vmatpush1.bf16.msra.mxu0 0
        %908 = vmatprep.subr.bf16.mxu0 0
        %909 = vmatpush1.bf16.msra.mxu0 0
        %910 = vmatprep.mubr.bf16.mxu0 0
        %911 = vmatmul.mubr.bf16.gmra.mrb[0].mxu0 %v867
        %v912 = vpop.f32.mrb[0].mxu0
        %v913 = vadd.f32 %v825, %v912
        %v914 = vpop.f32.mrb[0].mxu0
        %v915 = vpop.f32.mrb[0].mxu0
        %v916 = vadd.f32 %v828, %v915
        %v917 = vpop.f32.mrb[0].mxu0
        %918 = vmatprep.mubr.bf16.mxu0 0
        %919 = vmatmul.mubr.bf16.gmra.mrb[0].mxu0 %v870
        %v920 = vpop.f32.mrb[0].mxu0
        %v921 = vadd.f32 %v833, %v920
        %v922 = vpop.f32.mrb[0].mxu0
        %v923 = vpop.f32.mrb[0].mxu0
        %v924 = vadd.f32 %v836, %v923
        %v925 = vpop.f32.mrb[0].mxu0
        %926 = vmatprep.mubr.bf16.mxu0 0
        %927 = vmatmul.mubr.bf16.gmra.mrb[0].mxu0 %v873
        %v928 = vpop.f32.mrb[0].mxu0
        %v929 = vadd.f32 %v841, %v928
        %v930 = vpop.f32.mrb[0].mxu0
        %v931 = vpop.f32.mrb[0].mxu0
        %v932 = vadd.f32 %v844, %v931
        %v933 = vpop.f32.mrb[0].mxu0
        %934 = vmatprep.mubr.bf16.mxu0 0
        %935 = vmatmul.mubr.bf16.gmra.mrb[0].mxu0 %v876
        %v936 = vpop.f32.mrb[0].mxu0
        %v937 = vadd.f32 %v849, %v936
        %v938 = vpop.f32.mrb[0].mxu0
        %v939 = vpop.f32.mrb[0].mxu0
        %v940 = vpop.f32.mrb[0].mxu0
        %941 = vdwg.mxu0
        %v942 = vld [vmem:[#allocation2 + $0x1] sm:$0xff]
        %v943 = vld [vmem:[#allocation2 + $0x9] sm:$0xff]
        %v944 = vld [vmem:[#allocation2 + $0x11] sm:$0xff]
        %v945 = vld [vmem:[#allocation2 + $0x19] sm:$0xff]
        %v946 = vld [vmem:[#allocation2 + $0x21] sm:$0xff]
        %v947 = vld [vmem:[#allocation2 + $0x29] sm:$0xff]
        %v948 = vld [vmem:[#allocation2 + $0x31] sm:$0xff]
        %v949 = vpack.c.bf16 %v943, %v942
        %v950 = vpack.c.bf16 %v945, %v944
        %v951 = vpack.c.bf16 %v947, %v946
        %v952 = vpack.c.bf16 %v948, %v948
        %s953 = scalar_lea.vmem %s2, 32
        %v954 = vld [vmem:[%s953] sm:$0xf]
        %v955 = vld [vmem:[%s953 + $0x4] sm:$0xf]
        %v956 = vld [vmem:[%s953 + $0x8] sm:$0xf]
        %v957 = vld [vmem:[%s953 + $0xc] sm:$0xf]
        %v962 = vunpack.c.l.b16 %v954
        %v963 = vunpack.c.l.b16 %v955
        %v964 = vunpack.c.l.b16 %v956
        %v965 = vunpack.c.l.b16 %v957
        %v966 = vpack.c.b16 %v963, %v962
        %v967 = vpack.c.b16 %v965, %v964
        %v971 = vsel %vm223, %v949, 0
        %v974 = vsel %vm223, %v950, 0
        %v977 = vsel %vm223, %v951, 0
        %v980 = vsel %vm223, %v952, 0
        %982 = vmatprep.subr.bf16.mxu0 0
        %983 = vmatpush1.bf16.msra.mxu0 %v966
        %984 = vmatprep.subr.bf16.mxu0 0
        %985 = vmatpush1.bf16.msra.mxu0 %v967
        %986 = vmatprep.subr.bf16.mxu0 0
        %987 = vmatpush1.bf16.msra.mxu0 0
        %988 = vmatprep.subr.bf16.mxu0 0
        %989 = vmatpush1.bf16.msra.mxu0 0
        %990 = vmatprep.subr.bf16.mxu0 0
        %991 = vmatpush1.bf16.msra.mxu0 0
        %992 = vmatprep.subr.bf16.mxu0 0
        %993 = vmatpush1.bf16.msra.mxu0 0
        %994 = vmatprep.subr.bf16.mxu0 0
        %995 = vmatpush1.bf16.msra.mxu0 0
        %996 = vmatprep.subr.bf16.mxu0 0
        %997 = vmatpush1.bf16.msra.mxu0 0
        %998 = vmatprep.subr.bf16.mxu0 0
        %999 = vmatpush1.bf16.msra.mxu0 0
        %1000 = vmatprep.subr.bf16.mxu0 0
        %1001 = vmatpush1.bf16.msra.mxu0 0
        %1002 = vmatprep.subr.bf16.mxu0 0
        %1003 = vmatpush1.bf16.msra.mxu0 0
        %1004 = vmatprep.subr.bf16.mxu0 0
        %1005 = vmatpush1.bf16.msra.mxu0 0
        %1006 = vmatprep.subr.bf16.mxu0 0
        %1007 = vmatpush1.bf16.msra.mxu0 0
        %1008 = vmatprep.subr.bf16.mxu0 0
        %1009 = vmatpush1.bf16.msra.mxu0 0
        %1010 = vmatprep.subr.bf16.mxu0 0
        %1011 = vmatpush1.bf16.msra.mxu0 0
        %1012 = vmatprep.subr.bf16.mxu0 0
        %1013 = vmatpush1.bf16.msra.mxu0 0
        %1014 = vmatprep.mubr.bf16.mxu0 0
        %1015 = vmatmul.mubr.bf16.gmra.mrb[0].mxu0 %v971
        %v1016 = vpop.f32.mrb[0].mxu0
        %v1017 = vadd.f32 0.0, %v1016
        %v1018 = vpop.f32.mrb[0].mxu0
        %v1019 = vpop.f32.mrb[0].mxu0
        %v1020 = vadd.f32 0.0, %v1019
        %v1021 = vpop.f32.mrb[0].mxu0
        %1022 = vmatprep.mubr.bf16.mxu0 0
        %1023 = vmatmul.mubr.bf16.gmra.mrb[0].mxu0 %v974
        %v1024 = vpop.f32.mrb[0].mxu0
        %v1025 = vadd.f32 0.0, %v1024
        %v1026 = vpop.f32.mrb[0].mxu0
        %v1027 = vpop.f32.mrb[0].mxu0
        %v1028 = vadd.f32 0.0, %v1027
        %v1029 = vpop.f32.mrb[0].mxu0
        %1030 = vmatprep.mubr.bf16.mxu0 0
        %1031 = vmatmul.mubr.bf16.gmra.mrb[0].mxu0 %v977
        %v1032 = vpop.f32.mrb[0].mxu0
        %v1033 = vadd.f32 0.0, %v1032
        %v1034 = vpop.f32.mrb[0].mxu0
        %v1035 = vpop.f32.mrb[0].mxu0
        %v1036 = vadd.f32 0.0, %v1035
        %v1037 = vpop.f32.mrb[0].mxu0
        %1038 = vmatprep.mubr.bf16.mxu0 0
        %1039 = vmatmul.mubr.bf16.gmra.mrb[0].mxu0 %v980
        %v1040 = vpop.f32.mrb[0].mxu0
        %v1041 = vadd.f32 0.0, %v1040
        %v1042 = vpop.f32.mrb[0].mxu0
        %v1043 = vpop.f32.mrb[0].mxu0
        %v1044 = vpop.f32.mrb[0].mxu0
        %1045 = vdwg.mxu0
        %v1046 = vadd.f32 %v913, %v1017
        %v1047 = vadd.f32 %v916, %v1020
        %v1048 = vadd.f32 %v921, %v1025
        %v1049 = vadd.f32 %v924, %v1028
        %v1050 = vadd.f32 %v929, %v1033
        %v1051 = vadd.f32 %v932, %v1036
        %v1052 = vadd.f32 %v937, %v1041
        %v1053 = vld [vmem:[#allocation4] sm:$0xff]
        %v1054 = vld [vmem:[#allocation4 + $0x8] sm:$0xff]
        %v1055 = vld [vmem:[#allocation4 + $0x10] sm:$0xff]
        %v1056 = vld [vmem:[#allocation4 + $0x18] sm:$0xff]
        %v1057 = vld [vmem:[#allocation4 + $0x20] sm:$0xff]
        %v1058 = vld [vmem:[#allocation4 + $0x28] sm:$0xff]
        %v1059 = vld [vmem:[#allocation4 + $0x30] sm:$0xff]
        %v1060 = vpack.c.bf16 %v1054, %v1053
        %v1061 = vpack.c.bf16 %v1056, %v1055
        %v1062 = vpack.c.bf16 %v1058, %v1057
        %v1063 = vpack.c.bf16 %v1059, %v1059
        %s1064 = scalar_lea.vmem %s2, 48
        %v1065 = vld [vmem:[%s1064] sm:$0xf]
        %v1066 = vld [vmem:[%s1064 + $0x4] sm:$0xf]
        %v1067 = vld [vmem:[%s1064 + $0x8] sm:$0xf]
        %v1068 = vld [vmem:[%s1064 + $0xc] sm:$0xf]
        %v1073 = vunpack.c.l.b16 %v1065
        %v1074 = vunpack.c.l.b16 %v1066
        %v1075 = vunpack.c.l.b16 %v1067
        %v1076 = vunpack.c.l.b16 %v1068
        %v1077 = vpack.c.b16 %v1074, %v1073
        %v1078 = vpack.c.b16 %v1076, %v1075
        %v1082 = vsel %vm223, %v1060, 0
        %v1085 = vsel %vm223, %v1061, 0
        %v1088 = vsel %vm223, %v1062, 0
        %v1091 = vsel %vm223, %v1063, 0
        %1093 = vmatprep.subr.bf16.mxu0 0
        %1094 = vmatpush1.bf16.msra.mxu0 %v1077
        %1095 = vmatprep.subr.bf16.mxu0 0
        %1096 = vmatpush1.bf16.msra.mxu0 %v1078
        %1097 = vmatprep.subr.bf16.mxu0 0
        %1098 = vmatpush1.bf16.msra.mxu0 0
        %1099 = vmatprep.subr.bf16.mxu0 0
        %1100 = vmatpush1.bf16.msra.mxu0 0
        %1101 = vmatprep.subr.bf16.mxu0 0
        %1102 = vmatpush1.bf16.msra.mxu0 0
        %1103 = vmatprep.subr.bf16.mxu0 0
        %1104 = vmatpush1.bf16.msra.mxu0 0
        %1105 = vmatprep.subr.bf16.mxu0 0
        %1106 = vmatpush1.bf16.msra.mxu0 0
        %1107 = vmatprep.subr.bf16.mxu0 0
        %1108 = vmatpush1.bf16.msra.mxu0 0
        %1109 = vmatprep.subr.bf16.mxu0 0
        %1110 = vmatpush1.bf16.msra.mxu0 0
        %1111 = vmatprep.subr.bf16.mxu0 0
        %1112 = vmatpush1.bf16.msra.mxu0 0
        %1113 = vmatprep.subr.bf16.mxu0 0
        %1114 = vmatpush1.bf16.msra.mxu0 0
        %1115 = vmatprep.subr.bf16.mxu0 0
        %1116 = vmatpush1.bf16.msra.mxu0 0
        %1117 = vmatprep.subr.bf16.mxu0 0
        %1118 = vmatpush1.bf16.msra.mxu0 0
        %1119 = vmatprep.subr.bf16.mxu0 0
        %1120 = vmatpush1.bf16.msra.mxu0 0
        %1121 = vmatprep.subr.bf16.mxu0 0
        %1122 = vmatpush1.bf16.msra.mxu0 0
        %1123 = vmatprep.subr.bf16.mxu0 0
        %1124 = vmatpush1.bf16.msra.mxu0 0
        %1125 = vmatprep.mubr.bf16.mxu0 0
        %1126 = vmatmul.mubr.bf16.gmra.mrb[0].mxu0 %v1082
        %v1127 = vpop.f32.mrb[0].mxu0
        %v1128 = vadd.f32 0.0, %v1127
        %v1129 = vpop.f32.mrb[0].mxu0
        %v1130 = vpop.f32.mrb[0].mxu0
        %v1131 = vadd.f32 0.0, %v1130
        %v1132 = vpop.f32.mrb[0].mxu0
        %1133 = vmatprep.mubr.bf16.mxu0 0
        %1134 = vmatmul.mubr.bf16.gmra.mrb[0].mxu0 %v1085
        %v1135 = vpop.f32.mrb[0].mxu0
        %v1136 = vadd.f32 0.0, %v1135
        %v1137 = vpop.f32.mrb[0].mxu0
        %v1138 = vpop.f32.mrb[0].mxu0
        %v1139 = vadd.f32 0.0, %v1138
        %v1140 = vpop.f32.mrb[0].mxu0
        %1141 = vmatprep.mubr.bf16.mxu0 0
        %1142 = vmatmul.mubr.bf16.gmra.mrb[0].mxu0 %v1088
        %v1143 = vpop.f32.mrb[0].mxu0
        %v1144 = vadd.f32 0.0, %v1143
        %v1145 = vpop.f32.mrb[0].mxu0
        %v1146 = vpop.f32.mrb[0].mxu0
        %v1147 = vadd.f32 0.0, %v1146
        %v1148 = vpop.f32.mrb[0].mxu0
        %1149 = vmatprep.mubr.bf16.mxu0 0
        %1150 = vmatmul.mubr.bf16.gmra.mrb[0].mxu0 %v1091
        %v1151 = vpop.f32.mrb[0].mxu0
        %v1152 = vadd.f32 0.0, %v1151
        %v1153 = vpop.f32.mrb[0].mxu0
        %v1154 = vpop.f32.mrb[0].mxu0
        %v1155 = vpop.f32.mrb[0].mxu0
        %1156 = vdwg.mxu0
        %v1157 = vadd.f32 %v1046, %v1128
        %v1158 = vadd.f32 %v1047, %v1131
        %v1159 = vadd.f32 %v1048, %v1136
        %v1160 = vadd.f32 %v1049, %v1139
        %v1161 = vadd.f32 %v1050, %v1144
        %v1162 = vadd.f32 %v1051, %v1147
        %v1163 = vadd.f32 %v1052, %v1152
        %v1164 = vld [vmem:[#allocation5] sm:$0xff]
        %v1165 = vld [vmem:[#allocation5 + $0x8] sm:$0xff]
        %v1166 = vld [vmem:[#allocation5 + $0x10] sm:$0xff]
        %v1167 = vld [vmem:[#allocation5 + $0x18] sm:$0xff]
        %v1168 = vld [vmem:[#allocation5 + $0x20] sm:$0xff]
        %v1169 = vld [vmem:[#allocation5 + $0x28] sm:$0xff]
        %v1170 = vld [vmem:[#allocation5 + $0x30] sm:$0xff]
        %v1171 = vpack.c.bf16 %v1165, %v1164
        %v1172 = vpack.c.bf16 %v1167, %v1166
        %v1173 = vpack.c.bf16 %v1169, %v1168
        %v1174 = vpack.c.bf16 %v1170, %v1170
        %s1175 = scalar_lea.vmem %s2, 64
        %v1176 = vld [vmem:[%s1175] sm:$0xf]
        %v1177 = vld [vmem:[%s1175 + $0x4] sm:$0xf]
        %v1178 = vld [vmem:[%s1175 + $0x8] sm:$0xf]
        %v1179 = vld [vmem:[%s1175 + $0xc] sm:$0xf]
        %v1184 = vunpack.c.l.b16 %v1176
        %v1185 = vunpack.c.l.b16 %v1177
        %v1186 = vunpack.c.l.b16 %v1178
        %v1187 = vunpack.c.l.b16 %v1179
        %v1188 = vpack.c.b16 %v1185, %v1184
        %v1189 = vpack.c.b16 %v1187, %v1186
        %v1193 = vsel %vm223, %v1171, 0
        %v1196 = vsel %vm223, %v1172, 0
        %v1199 = vsel %vm223, %v1173, 0
        %v1202 = vsel %vm223, %v1174, 0
        %1204 = vmatprep.subr.bf16.mxu0 0
        %1205 = vmatpush1.bf16.msra.mxu0 %v1188
        %1206 = vmatprep.subr.bf16.mxu0 0
        %1207 = vmatpush1.bf16.msra.mxu0 %v1189
        %1208 = vmatprep.subr.bf16.mxu0 0
        %1209 = vmatpush1.bf16.msra.mxu0 0
        %1210 = vmatprep.subr.bf16.mxu0 0
        %1211 = vmatpush1.bf16.msra.mxu0 0
        %1212 = vmatprep.subr.bf16.mxu0 0
        %1213 = vmatpush1.bf16.msra.mxu0 0
        %1214 = vmatprep.subr.bf16.mxu0 0
        %1215 = vmatpush1.bf16.msra.mxu0 0
        %1216 = vmatprep.subr.bf16.mxu0 0
        %1217 = vmatpush1.bf16.msra.mxu0 0
        %1218 = vmatprep.subr.bf16.mxu0 0
        %1219 = vmatpush1.bf16.msra.mxu0 0
        %1220 = vmatprep.subr.bf16.mxu0 0
        %1221 = vmatpush1.bf16.msra.mxu0 0
        %1222 = vmatprep.subr.bf16.mxu0 0
        %1223 = vmatpush1.bf16.msra.mxu0 0
        %1224 = vmatprep.subr.bf16.mxu0 0
        %1225 = vmatpush1.bf16.msra.mxu0 0
        %1226 = vmatprep.subr.bf16.mxu0 0
        %1227 = vmatpush1.bf16.msra.mxu0 0
        %1228 = vmatprep.subr.bf16.mxu0 0
        %1229 = vmatpush1.bf16.msra.mxu0 0
        %1230 = vmatprep.subr.bf16.mxu0 0
        %1231 = vmatpush1.bf16.msra.mxu0 0
        %1232 = vmatprep.subr.bf16.mxu0 0
        %1233 = vmatpush1.bf16.msra.mxu0 0
        %1234 = vmatprep.subr.bf16.mxu0 0
        %1235 = vmatpush1.bf16.msra.mxu0 0
        %1236 = vmatprep.mubr.bf16.mxu0 0
        %1237 = vmatmul.mubr.bf16.gmra.mrb[0].mxu0 %v1193
        %v1238 = vpop.f32.mrb[0].mxu0
        %v1239 = vadd.f32 0.0, %v1238
        %v1240 = vpop.f32.mrb[0].mxu0
        %v1241 = vpop.f32.mrb[0].mxu0
        %v1242 = vadd.f32 0.0, %v1241
        %v1243 = vpop.f32.mrb[0].mxu0
        %1244 = vmatprep.mubr.bf16.mxu0 0
        %1245 = vmatmul.mubr.bf16.gmra.mrb[0].mxu0 %v1196
        %v1246 = vpop.f32.mrb[0].mxu0
        %v1247 = vadd.f32 0.0, %v1246
        %v1248 = vpop.f32.mrb[0].mxu0
        %v1249 = vpop.f32.mrb[0].mxu0
        %v1250 = vadd.f32 0.0, %v1249
        %v1251 = vpop.f32.mrb[0].mxu0
        %1252 = vmatprep.mubr.bf16.mxu0 0
        %1253 = vmatmul.mubr.bf16.gmra.mrb[0].mxu0 %v1199
        %v1254 = vpop.f32.mrb[0].mxu0
        %v1255 = vadd.f32 0.0, %v1254
        %v1256 = vpop.f32.mrb[0].mxu0
        %v1257 = vpop.f32.mrb[0].mxu0
        %v1258 = vadd.f32 0.0, %v1257
        %v1259 = vpop.f32.mrb[0].mxu0
        %1260 = vmatprep.mubr.bf16.mxu0 0
        %1261 = vmatmul.mubr.bf16.gmra.mrb[0].mxu0 %v1202
        %v1262 = vpop.f32.mrb[0].mxu0
        %v1263 = vadd.f32 0.0, %v1262
        %v1264 = vpop.f32.mrb[0].mxu0
        %v1265 = vpop.f32.mrb[0].mxu0
        %v1266 = vpop.f32.mrb[0].mxu0
        %1267 = vdwg.mxu0
        %v1268 = vadd.f32 %v1157, %v1239
        %v1269 = vadd.f32 %v1158, %v1242
        %v1270 = vadd.f32 %v1159, %v1247
        %v1271 = vadd.f32 %v1160, %v1250
        %v1272 = vadd.f32 %v1161, %v1255
        %v1273 = vadd.f32 %v1162, %v1258
        %v1274 = vadd.f32 %v1163, %v1263
        %v1275 = vld [vmem:[#allocation4 + $0x1] sm:$0xff]
        %v1276 = vld [vmem:[#allocation4 + $0x9] sm:$0xff]
        %v1277 = vld [vmem:[#allocation4 + $0x11] sm:$0xff]
        %v1278 = vld [vmem:[#allocation4 + $0x19] sm:$0xff]
        %v1279 = vld [vmem:[#allocation4 + $0x21] sm:$0xff]
        %v1280 = vld [vmem:[#allocation4 + $0x29] sm:$0xff]
        %v1281 = vld [vmem:[#allocation4 + $0x31] sm:$0xff]
        %v1282 = vpack.c.bf16 %v1276, %v1275
        %v1283 = vpack.c.bf16 %v1278, %v1277
        %v1284 = vpack.c.bf16 %v1280, %v1279
        %v1285 = vpack.c.bf16 %v1281, %v1281
        %s1286 = scalar_lea.vmem %s2, 80
        %v1287 = vld [vmem:[%s1286] sm:$0xf]
        %v1288 = vld [vmem:[%s1286 + $0x4] sm:$0xf]
        %v1289 = vld [vmem:[%s1286 + $0x8] sm:$0xf]
        %v1290 = vld [vmem:[%s1286 + $0xc] sm:$0xf]
        %v1295 = vunpack.c.l.b16 %v1287
        %v1296 = vunpack.c.l.b16 %v1288
        %v1297 = vunpack.c.l.b16 %v1289
        %v1298 = vunpack.c.l.b16 %v1290
        %v1299 = vpack.c.b16 %v1296, %v1295
        %v1300 = vpack.c.b16 %v1298, %v1297
        %v1304 = vsel %vm223, %v1282, 0
        %v1307 = vsel %vm223, %v1283, 0
        %v1310 = vsel %vm223, %v1284, 0
        %v1313 = vsel %vm223, %v1285, 0
        %1315 = vmatprep.subr.bf16.mxu0 0
        %1316 = vmatpush1.bf16.msra.mxu0 %v1299
        %1317 = vmatprep.subr.bf16.mxu0 0
        %1318 = vmatpush1.bf16.msra.mxu0 %v1300
        %1319 = vmatprep.subr.bf16.mxu0 0
        %1320 = vmatpush1.bf16.msra.mxu0 0
        %1321 = vmatprep.subr.bf16.mxu0 0
        %1322 = vmatpush1.bf16.msra.mxu0 0
        %1323 = vmatprep.subr.bf16.mxu0 0
        %1324 = vmatpush1.bf16.msra.mxu0 0
        %1325 = vmatprep.subr.bf16.mxu0 0
        %1326 = vmatpush1.bf16.msra.mxu0 0
        %1327 = vmatprep.subr.bf16.mxu0 0
        %1328 = vmatpush1.bf16.msra.mxu0 0
        %1329 = vmatprep.subr.bf16.mxu0 0
        %1330 = vmatpush1.bf16.msra.mxu0 0
        %1331 = vmatprep.subr.bf16.mxu0 0
        %1332 = vmatpush1.bf16.msra.mxu0 0
        %1333 = vmatprep.subr.bf16.mxu0 0
        %1334 = vmatpush1.bf16.msra.mxu0 0
        %1335 = vmatprep.subr.bf16.mxu0 0
        %1336 = vmatpush1.bf16.msra.mxu0 0
        %1337 = vmatprep.subr.bf16.mxu0 0
        %1338 = vmatpush1.bf16.msra.mxu0 0
        %1339 = vmatprep.subr.bf16.mxu0 0
        %1340 = vmatpush1.bf16.msra.mxu0 0
        %1341 = vmatprep.subr.bf16.mxu0 0
        %1342 = vmatpush1.bf16.msra.mxu0 0
        %1343 = vmatprep.subr.bf16.mxu0 0
        %1344 = vmatpush1.bf16.msra.mxu0 0
        %1345 = vmatprep.subr.bf16.mxu0 0
        %1346 = vmatpush1.bf16.msra.mxu0 0
        %1347 = vmatprep.mubr.bf16.mxu0 0
        %1348 = vmatmul.mubr.bf16.gmra.mrb[0].mxu0 %v1304
        %v1349 = vpop.f32.mrb[0].mxu0
        %v1350 = vadd.f32 0.0, %v1349
        %v1351 = vpop.f32.mrb[0].mxu0
        %v1352 = vpop.f32.mrb[0].mxu0
        %v1353 = vadd.f32 0.0, %v1352
        %v1354 = vpop.f32.mrb[0].mxu0
        %1355 = vmatprep.mubr.bf16.mxu0 0
        %1356 = vmatmul.mubr.bf16.gmra.mrb[0].mxu0 %v1307
        %v1357 = vpop.f32.mrb[0].mxu0
        %v1358 = vadd.f32 0.0, %v1357
        %v1359 = vpop.f32.mrb[0].mxu0
        %v1360 = vpop.f32.mrb[0].mxu0
        %v1361 = vadd.f32 0.0, %v1360
        %v1362 = vpop.f32.mrb[0].mxu0
        %1363 = vmatprep.mubr.bf16.mxu0 0
        %1364 = vmatmul.mubr.bf16.gmra.mrb[0].mxu0 %v1310
        %v1365 = vpop.f32.mrb[0].mxu0
        %v1366 = vadd.f32 0.0, %v1365
        %v1367 = vpop.f32.mrb[0].mxu0
        %v1368 = vpop.f32.mrb[0].mxu0
        %v1369 = vadd.f32 0.0, %v1368
        %v1370 = vpop.f32.mrb[0].mxu0
        %1371 = vmatprep.mubr.bf16.mxu0 0
        %1372 = vmatmul.mubr.bf16.gmra.mrb[0].mxu0 %v1313
        %v1373 = vpop.f32.mrb[0].mxu0
        %v1374 = vadd.f32 0.0, %v1373
        %v1375 = vpop.f32.mrb[0].mxu0
        %v1376 = vpop.f32.mrb[0].mxu0
        %v1377 = vpop.f32.mrb[0].mxu0
        %1378 = vdwg.mxu0
        %v1379 = vadd.f32 %v1268, %v1350
        %v1380 = vadd.f32 %v1269, %v1353
        %v1381 = vadd.f32 %v1270, %v1358
        %v1382 = vadd.f32 %v1271, %v1361
        %v1383 = vadd.f32 %v1272, %v1366
        %v1384 = vadd.f32 %v1273, %v1369
        %v1385 = vadd.f32 %v1274, %v1374
        %v1386 = vld [vmem:[#allocation2 + $0x8] sm:$0xff]
        %v1387 = vld [vmem:[#allocation2 + $0x10] sm:$0xff]
        %v1388 = vld [vmem:[#allocation2 + $0x18] sm:$0xff]
        %v1389 = vld [vmem:[#allocation2 + $0x20] sm:$0xff]
        %v1390 = vld [vmem:[#allocation2 + $0x28] sm:$0xff]
        %v1391 = vld [vmem:[#allocation2 + $0x30] sm:$0xff]
        %v1392 = vld [vmem:[#allocation2 + $0x38] sm:$0xff]
        %v1393 = vpack.c.bf16 %v1387, %v1386
        %v1394 = vpack.c.bf16 %v1389, %v1388
        %v1395 = vpack.c.bf16 %v1391, %v1390
        %v1396 = vpack.c.bf16 %v1392, %v1392
        %s1397 = scalar_lea.vmem %s2, 96
        %v1398 = vld [vmem:[%s1397] sm:$0xf]
        %v1399 = vld [vmem:[%s1397 + $0x4] sm:$0xf]
        %v1400 = vld [vmem:[%s1397 + $0x8] sm:$0xf]
        %v1401 = vld [vmem:[%s1397 + $0xc] sm:$0xf]
        %v1406 = vunpack.c.l.b16 %v1398
        %v1407 = vunpack.c.l.b16 %v1399
        %v1408 = vunpack.c.l.b16 %v1400
        %v1409 = vunpack.c.l.b16 %v1401
        %v1410 = vpack.c.b16 %v1407, %v1406
        %v1411 = vpack.c.b16 %v1409, %v1408
        %v1415 = vsel %vm223, %v1393, 0
        %v1418 = vsel %vm223, %v1394, 0
        %v1421 = vsel %vm223, %v1395, 0
        %v1424 = vsel %vm223, %v1396, 0
        %1426 = vmatprep.subr.bf16.mxu0 0
        %1427 = vmatpush1.bf16.msra.mxu0 %v1410
        %1428 = vmatprep.subr.bf16.mxu0 0
        %1429 = vmatpush1.bf16.msra.mxu0 %v1411
        %1430 = vmatprep.subr.bf16.mxu0 0
        %1431 = vmatpush1.bf16.msra.mxu0 0
        %1432 = vmatprep.subr.bf16.mxu0 0
        %1433 = vmatpush1.bf16.msra.mxu0 0
        %1434 = vmatprep.subr.bf16.mxu0 0
        %1435 = vmatpush1.bf16.msra.mxu0 0
        %1436 = vmatprep.subr.bf16.mxu0 0
        %1437 = vmatpush1.bf16.msra.mxu0 0
        %1438 = vmatprep.subr.bf16.mxu0 0
        %1439 = vmatpush1.bf16.msra.mxu0 0
        %1440 = vmatprep.subr.bf16.mxu0 0
        %1441 = vmatpush1.bf16.msra.mxu0 0
        %1442 = vmatprep.subr.bf16.mxu0 0
        %1443 = vmatpush1.bf16.msra.mxu0 0
        %1444 = vmatprep.subr.bf16.mxu0 0
        %1445 = vmatpush1.bf16.msra.mxu0 0
        %1446 = vmatprep.subr.bf16.mxu0 0
        %1447 = vmatpush1.bf16.msra.mxu0 0
        %1448 = vmatprep.subr.bf16.mxu0 0
        %1449 = vmatpush1.bf16.msra.mxu0 0
        %1450 = vmatprep.subr.bf16.mxu0 0
        %1451 = vmatpush1.bf16.msra.mxu0 0
        %1452 = vmatprep.subr.bf16.mxu0 0
        %1453 = vmatpush1.bf16.msra.mxu0 0
        %1454 = vmatprep.subr.bf16.mxu0 0
        %1455 = vmatpush1.bf16.msra.mxu0 0
        %1456 = vmatprep.subr.bf16.mxu0 0
        %1457 = vmatpush1.bf16.msra.mxu0 0
        %1458 = vmatprep.mubr.bf16.mxu0 0
        %1459 = vmatmul.mubr.bf16.gmra.mrb[0].mxu0 %v1415
        %v1460 = vpop.f32.mrb[0].mxu0
        %v1461 = vadd.f32 0.0, %v1460
        %v1462 = vpop.f32.mrb[0].mxu0
        %v1463 = vpop.f32.mrb[0].mxu0
        %v1464 = vadd.f32 0.0, %v1463
        %v1465 = vpop.f32.mrb[0].mxu0
        %1466 = vmatprep.mubr.bf16.mxu0 0
        %1467 = vmatmul.mubr.bf16.gmra.mrb[0].mxu0 %v1418
        %v1468 = vpop.f32.mrb[0].mxu0
        %v1469 = vadd.f32 0.0, %v1468
        %v1470 = vpop.f32.mrb[0].mxu0
        %v1471 = vpop.f32.mrb[0].mxu0
        %v1472 = vadd.f32 0.0, %v1471
        %v1473 = vpop.f32.mrb[0].mxu0
        %1474 = vmatprep.mubr.bf16.mxu0 0
        %1475 = vmatmul.mubr.bf16.gmra.mrb[0].mxu0 %v1421
        %v1476 = vpop.f32.mrb[0].mxu0
        %v1477 = vadd.f32 0.0, %v1476
        %v1478 = vpop.f32.mrb[0].mxu0
        %v1479 = vpop.f32.mrb[0].mxu0
        %v1480 = vadd.f32 0.0, %v1479
        %v1481 = vpop.f32.mrb[0].mxu0
        %1482 = vmatprep.mubr.bf16.mxu0 0
        %1483 = vmatmul.mubr.bf16.gmra.mrb[0].mxu0 %v1424
        %v1484 = vpop.f32.mrb[0].mxu0
        %v1485 = vadd.f32 0.0, %v1484
        %v1486 = vpop.f32.mrb[0].mxu0
        %v1487 = vpop.f32.mrb[0].mxu0
        %v1488 = vpop.f32.mrb[0].mxu0
        %1489 = vdwg.mxu0
        %v1490 = vadd.f32 %v1379, %v1461
        %v1491 = vadd.f32 %v1380, %v1464
        %v1492 = vadd.f32 %v1381, %v1469
        %v1493 = vadd.f32 %v1382, %v1472
        %v1494 = vadd.f32 %v1383, %v1477
        %v1495 = vadd.f32 %v1384, %v1480
        %v1496 = vadd.f32 %v1385, %v1485
        %v1497 = vld [vmem:[#allocation3 + $0x8] sm:$0xff]
        %v1498 = vld [vmem:[#allocation3 + $0x10] sm:$0xff]
        %v1499 = vld [vmem:[#allocation3 + $0x18] sm:$0xff]
        %v1500 = vld [vmem:[#allocation3 + $0x20] sm:$0xff]
        %v1501 = vld [vmem:[#allocation3 + $0x28] sm:$0xff]
        %v1502 = vld [vmem:[#allocation3 + $0x30] sm:$0xff]
        %v1503 = vld [vmem:[#allocation3 + $0x38] sm:$0xff]
        %v1504 = vpack.c.bf16 %v1498, %v1497
        %v1505 = vpack.c.bf16 %v1500, %v1499
        %v1506 = vpack.c.bf16 %v1502, %v1501
        %v1507 = vpack.c.bf16 %v1503, %v1503
        %s1508 = scalar_lea.vmem %s2, 112
        %v1509 = vld [vmem:[%s1508] sm:$0xf]
        %v1510 = vld [vmem:[%s1508 + $0x4] sm:$0xf]
        %v1511 = vld [vmem:[%s1508 + $0x8] sm:$0xf]
        %v1512 = vld [vmem:[%s1508 + $0xc] sm:$0xf]
        %v1517 = vunpack.c.l.b16 %v1509
        %v1518 = vunpack.c.l.b16 %v1510
        %v1519 = vunpack.c.l.b16 %v1511
        %v1520 = vunpack.c.l.b16 %v1512
        %v1521 = vpack.c.b16 %v1518, %v1517
        %v1522 = vpack.c.b16 %v1520, %v1519
        %v1526 = vsel %vm223, %v1504, 0
        %v1529 = vsel %vm223, %v1505, 0
        %v1532 = vsel %vm223, %v1506, 0
        %v1535 = vsel %vm223, %v1507, 0
        %1537 = vmatprep.subr.bf16.mxu0 0
        %1538 = vmatpush1.bf16.msra.mxu0 %v1521
        %1539 = vmatprep.subr.bf16.mxu0 0
        %1540 = vmatpush1.bf16.msra.mxu0 %v1522
        %1541 = vmatprep.subr.bf16.mxu0 0
        %1542 = vmatpush1.bf16.msra.mxu0 0
        %1543 = vmatprep.subr.bf16.mxu0 0
        %1544 = vmatpush1.bf16.msra.mxu0 0
        %1545 = vmatprep.subr.bf16.mxu0 0
        %1546 = vmatpush1.bf16.msra.mxu0 0
        %1547 = vmatprep.subr.bf16.mxu0 0
        %1548 = vmatpush1.bf16.msra.mxu0 0
        %1549 = vmatprep.subr.bf16.mxu0 0
        %1550 = vmatpush1.bf16.msra.mxu0 0
        %1551 = vmatprep.subr.bf16.mxu0 0
        %1552 = vmatpush1.bf16.msra.mxu0 0
        %1553 = vmatprep.subr.bf16.mxu0 0
        %1554 = vmatpush1.bf16.msra.mxu0 0
        %1555 = vmatprep.subr.bf16.mxu0 0
        %1556 = vmatpush1.bf16.msra.mxu0 0
        %1557 = vmatprep.subr.bf16.mxu0 0
        %1558 = vmatpush1.bf16.msra.mxu0 0
        %1559 = vmatprep.subr.bf16.mxu0 0
        %1560 = vmatpush1.bf16.msra.mxu0 0
        %1561 = vmatprep.subr.bf16.mxu0 0
        %1562 = vmatpush1.bf16.msra.mxu0 0
        %1563 = vmatprep.subr.bf16.mxu0 0
        %1564 = vmatpush1.bf16.msra.mxu0 0
        %1565 = vmatprep.subr.bf16.mxu0 0
        %1566 = vmatpush1.bf16.msra.mxu0 0
        %1567 = vmatprep.subr.bf16.mxu0 0
        %1568 = vmatpush1.bf16.msra.mxu0 0
        %1569 = vmatprep.mubr.bf16.mxu0 0
        %1570 = vmatmul.mubr.bf16.gmra.mrb[0].mxu0 %v1526
        %v1571 = vpop.f32.mrb[0].mxu0
        %v1572 = vadd.f32 0.0, %v1571
        %v1573 = vpop.f32.mrb[0].mxu0
        %v1574 = vpop.f32.mrb[0].mxu0
        %v1575 = vadd.f32 0.0, %v1574
        %v1576 = vpop.f32.mrb[0].mxu0
        %1577 = vmatprep.mubr.bf16.mxu0 0
        %1578 = vmatmul.mubr.bf16.gmra.mrb[0].mxu0 %v1529
        %v1579 = vpop.f32.mrb[0].mxu0
        %v1580 = vadd.f32 0.0, %v1579
        %v1581 = vpop.f32.mrb[0].mxu0
        %v1582 = vpop.f32.mrb[0].mxu0
        %v1583 = vadd.f32 0.0, %v1582
        %v1584 = vpop.f32.mrb[0].mxu0
        %1585 = vmatprep.mubr.bf16.mxu0 0
        %1586 = vmatmul.mubr.bf16.gmra.mrb[0].mxu0 %v1532
        %v1587 = vpop.f32.mrb[0].mxu0
        %v1588 = vadd.f32 0.0, %v1587
        %v1589 = vpop.f32.mrb[0].mxu0
        %v1590 = vpop.f32.mrb[0].mxu0
        %v1591 = vadd.f32 0.0, %v1590
        %v1592 = vpop.f32.mrb[0].mxu0
        %1593 = vmatprep.mubr.bf16.mxu0 0
        %1594 = vmatmul.mubr.bf16.gmra.mrb[0].mxu0 %v1535
        %v1595 = vpop.f32.mrb[0].mxu0
        %v1596 = vadd.f32 0.0, %v1595
        %v1597 = vpop.f32.mrb[0].mxu0
        %v1598 = vpop.f32.mrb[0].mxu0
        %v1599 = vpop.f32.mrb[0].mxu0
        %1600 = vdwg.mxu0
        %v1601 = vadd.f32 %v1490, %v1572
        %v1602 = vadd.f32 %v1491, %v1575
        %v1603 = vadd.f32 %v1492, %v1580
        %v1604 = vadd.f32 %v1493, %v1583
        %v1605 = vadd.f32 %v1494, %v1588
        %v1606 = vadd.f32 %v1495, %v1591
        %v1607 = vadd.f32 %v1496, %v1596
        %v1608 = vld [vmem:[#allocation2 + $0x9] sm:$0xff]
        %v1609 = vld [vmem:[#allocation2 + $0x11] sm:$0xff]
        %v1610 = vld [vmem:[#allocation2 + $0x19] sm:$0xff]
        %v1611 = vld [vmem:[#allocation2 + $0x21] sm:$0xff]
        %v1612 = vld [vmem:[#allocation2 + $0x29] sm:$0xff]
        %v1613 = vld [vmem:[#allocation2 + $0x31] sm:$0xff]
        %v1614 = vld [vmem:[#allocation2 + $0x39] sm:$0xff]
        %v1615 = vpack.c.bf16 %v1609, %v1608
        %v1616 = vpack.c.bf16 %v1611, %v1610
        %v1617 = vpack.c.bf16 %v1613, %v1612
        %v1618 = vpack.c.bf16 %v1614, %v1614
        %s1619 = scalar_lea.vmem %s2, 128
        %v1620 = vld [vmem:[%s1619] sm:$0xf]
        %v1621 = vld [vmem:[%s1619 + $0x4] sm:$0xf]
        %v1622 = vld [vmem:[%s1619 + $0x8] sm:$0xf]
        %v1623 = vld [vmem:[%s1619 + $0xc] sm:$0xf]
        %v1628 = vunpack.c.l.b16 %v1620
        %v1629 = vunpack.c.l.b16 %v1621
        %v1630 = vunpack.c.l.b16 %v1622
        %v1631 = vunpack.c.l.b16 %v1623
        %v1632 = vpack.c.b16 %v1629, %v1628
        %v1633 = vpack.c.b16 %v1631, %v1630
        %v1637 = vsel %vm223, %v1615, 0
        %v1640 = vsel %vm223, %v1616, 0
        %v1643 = vsel %vm223, %v1617, 0
        %v1646 = vsel %vm223, %v1618, 0
        %1648 = vmatprep.subr.bf16.mxu0 0
        %1649 = vmatpush1.bf16.msra.mxu0 %v1632
        %1650 = vmatprep.subr.bf16.mxu0 0
        %1651 = vmatpush1.bf16.msra.mxu0 %v1633
        %1652 = vmatprep.subr.bf16.mxu0 0
        %1653 = vmatpush1.bf16.msra.mxu0 0
        %1654 = vmatprep.subr.bf16.mxu0 0
        %1655 = vmatpush1.bf16.msra.mxu0 0
        %1656 = vmatprep.subr.bf16.mxu0 0
        %1657 = vmatpush1.bf16.msra.mxu0 0
        %1658 = vmatprep.subr.bf16.mxu0 0
        %1659 = vmatpush1.bf16.msra.mxu0 0
        %1660 = vmatprep.subr.bf16.mxu0 0
        %1661 = vmatpush1.bf16.msra.mxu0 0
        %1662 = vmatprep.subr.bf16.mxu0 0
        %1663 = vmatpush1.bf16.msra.mxu0 0
        %1664 = vmatprep.subr.bf16.mxu0 0
        %1665 = vmatpush1.bf16.msra.mxu0 0
        %1666 = vmatprep.subr.bf16.mxu0 0
        %1667 = vmatpush1.bf16.msra.mxu0 0
        %1668 = vmatprep.subr.bf16.mxu0 0
        %1669 = vmatpush1.bf16.msra.mxu0 0
        %1670 = vmatprep.subr.bf16.mxu0 0
        %1671 = vmatpush1.bf16.msra.mxu0 0
        %1672 = vmatprep.subr.bf16.mxu0 0
        %1673 = vmatpush1.bf16.msra.mxu0 0
        %1674 = vmatprep.subr.bf16.mxu0 0
        %1675 = vmatpush1.bf16.msra.mxu0 0
        %1676 = vmatprep.subr.bf16.mxu0 0
        %1677 = vmatpush1.bf16.msra.mxu0 0
        %1678 = vmatprep.subr.bf16.mxu0 0
        %1679 = vmatpush1.bf16.msra.mxu0 0
        %1680 = vmatprep.mubr.bf16.mxu0 0
        %1681 = vmatmul.mubr.bf16.gmra.mrb[0].mxu0 %v1637
        %v1682 = vpop.f32.mrb[0].mxu0
        %v1683 = vadd.f32 0.0, %v1682
        %v1684 = vpop.f32.mrb[0].mxu0
        %v1685 = vpop.f32.mrb[0].mxu0
        %v1686 = vadd.f32 0.0, %v1685
        %v1687 = vpop.f32.mrb[0].mxu0
        %1688 = vmatprep.mubr.bf16.mxu0 0
        %1689 = vmatmul.mubr.bf16.gmra.mrb[0].mxu0 %v1640
        %v1690 = vpop.f32.mrb[0].mxu0
        %v1691 = vadd.f32 0.0, %v1690
        %v1692 = vpop.f32.mrb[0].mxu0
        %v1693 = vpop.f32.mrb[0].mxu0
        %v1694 = vadd.f32 0.0, %v1693
        %v1695 = vpop.f32.mrb[0].mxu0
        %1696 = vmatprep.mubr.bf16.mxu0 0
        %1697 = vmatmul.mubr.bf16.gmra.mrb[0].mxu0 %v1643
        %v1698 = vpop.f32.mrb[0].mxu0
        %v1699 = vadd.f32 0.0, %v1698
        %v1700 = vpop.f32.mrb[0].mxu0
        %v1701 = vpop.f32.mrb[0].mxu0
        %v1702 = vadd.f32 0.0, %v1701
        %v1703 = vpop.f32.mrb[0].mxu0
        %1704 = vmatprep.mubr.bf16.mxu0 0
        %1705 = vmatmul.mubr.bf16.gmra.mrb[0].mxu0 %v1646
        %v1706 = vpop.f32.mrb[0].mxu0
        %v1707 = vadd.f32 0.0, %v1706
        %v1708 = vpop.f32.mrb[0].mxu0
        %v1709 = vpop.f32.mrb[0].mxu0
        %v1710 = vpop.f32.mrb[0].mxu0
        %1711 = vdwg.mxu0
        %v1712 = vadd.f32 %v1601, %v1683
        %v1713 = vadd.f32 %v1602, %v1686
        %v1714 = vadd.f32 %v1603, %v1691
        %v1715 = vadd.f32 %v1604, %v1694
        %v1716 = vadd.f32 %v1605, %v1699
        %v1717 = vadd.f32 %v1606, %v1702
        %v1718 = vadd.f32 %v1607, %v1707
        %v1719 = vmax.f32 %v1712, 0.0
        %v1720 = vmax.f32 %v1713, 0.0
        %v1721 = vmax.f32 %v1714, 0.0
        %v1722 = vmax.f32 %v1715, 0.0
        %v1723 = vmax.f32 %v1716, 0.0
        %v1724 = vmax.f32 %v1717, 0.0
        %v1725 = vmax.f32 %v1718, 0.0
        %v1726 = vlaneseq
        %vm1727 = vcmp.ge.s32.totalorder %v1726, 0
        %vm1728 = vcmp.lt.s32.totalorder %v1726, 64
        %vm1729 = vmand %vm1727, %vm1728
        %1730 = vst.msk [vmem:[#allocation6] sm:$0x1] %vm1729, %v1719
        %v1733 = vunpack.c.l.s4 1966171168
        %v1734 = vunpack.c.0.s8 %v1733
        %v1735 = vlaneseq
        %v1736 = vshrl.u32 %v1735, 7
        %v1737 = vsub.s32 %v1734, %v1736
        %v1738 = vrot.slane %v1719, %v1737
        %v1739 = vcombine.high %v1738, %v1738
        %v1741 = vunpack.c.l.s4 1966171168
        %v1742 = vunpack.c.0.s8 %v1741
        %v1743 = vlaneseq
        %v1744 = vshrl.u32 %v1743, 7
        %v1745 = vsub.s32 %v1742, %v1744
        %v1746 = vrot.slane %v1738, %v1745
        %v1748 = vunpack.c.l.s4 1966171168
        %v1749 = vunpack.c.0.s8 %v1748
        %v1750 = vlaneseq
        %v1751 = vshrl.u32 %v1750, 7
        %v1752 = vsub.s32 %v1749, %v1751
        %v1753 = vrot.slane %v1739, %v1752
        %1754 = vrot.lane.b32.xlu0 %v1753, 64
        %v1755 = vpop.permute.xlu0 %1754
        %vm1757 = vcmp.ge.s32.totalorder %v1726, 64
        %vm1758 = vcmp.lt.s32.totalorder %v1726, 128
        %vm1759 = vmand %vm1757, %vm1758
        %1760 = vst.msk [vmem:[#allocation6] sm:$0x1] %vm1759, %v1755
        %v1761 = vcombine.high %v1746, %v1746
        %1763 = vst.msk [vmem:[#allocation6 + $0x1] sm:$0x1] %vm1729, %v1761
        %v1764 = vcombine.high %v1753, %v1753
        %1765 = vrot.lane.b32.xlu0 %v1764, 64
        %v1766 = vpop.permute.xlu0 %1765
        %1768 = vst.msk [vmem:[#allocation6 + $0x1] sm:$0x1] %vm1759, %v1766
        %v1769 = vcombine.high %v1719, %v1719
        %v1771 = vunpack.c.l.s4 1966171168
        %v1772 = vunpack.c.0.s8 %v1771
        %v1773 = vlaneseq
        %v1774 = vshrl.u32 %v1773, 7
        %v1775 = vsub.s32 %v1772, %v1774
        %v1776 = vrot.slane %v1769, %v1775
        %v1778 = vunpack.c.l.s4 1966171168
        %v1779 = vunpack.c.0.s8 %v1778
        %v1780 = vlaneseq
        %v1781 = vshrl.u32 %v1780, 7
        %v1782 = vsub.s32 %v1779, %v1781
        %v1783 = vrot.slane %v1776, %v1782
        %1785 = vst.msk [vmem:[#allocation6 + $0x2] sm:$0x1] %vm1729, %v1783
        %v1786 = vcombine.high %v1776, %v1776
        %v1788 = vunpack.c.l.s4 1966171168
        %v1789 = vunpack.c.0.s8 %v1788
        %v1790 = vlaneseq
        %v1791 = vshrl.u32 %v1790, 7
        %v1792 = vsub.s32 %v1789, %v1791
        %v1793 = vrot.slane %v1786, %v1792
        %1794 = vrot.lane.b32.xlu0 %v1793, 64
        %v1795 = vpop.permute.xlu0 %1794
        %1797 = vst.msk [vmem:[#allocation6 + $0x2] sm:$0x1] %vm1759, %v1795
        %v1798 = vcombine.high %v1783, %v1783
        %1800 = vst.msk [vmem:[#allocation6 + $0x3] sm:$0x1] %vm1729, %v1798
        %v1803 = vunpack.c.l.s4 1966171168
        %v1804 = vunpack.c.0.s8 %v1803
        %v1805 = vlaneseq
        %v1806 = vshrl.u32 %v1805, 7
        %v1807 = vsub.s32 %v1804, %v1806
        %v1808 = vrot.slane %v1720, %v1807
        %v1810 = vunpack.c.l.s4 1966171168
        %v1811 = vunpack.c.0.s8 %v1810
        %v1812 = vlaneseq
        %v1813 = vshrl.u32 %v1812, 7
        %v1814 = vsub.s32 %v1811, %v1813
        %v1815 = vrot.slane %v1808, %v1814
        %1816 = vrot.lane.b32.xlu0 %v1815, 64
        %v1817 = vpop.permute.xlu0 %1816
        %1819 = vst.msk [vmem:[#allocation6 + $0x3] sm:$0x1] %vm1759, %v1817
        %v1820 = vcombine.high %v1808, %v1808
        %v1822 = vunpack.c.l.s4 1966171168
        %v1823 = vunpack.c.0.s8 %v1822
        %v1824 = vlaneseq
        %v1825 = vshrl.u32 %v1824, 7
        %v1826 = vsub.s32 %v1823, %v1825
        %v1827 = vrot.slane %v1820, %v1826
        %1829 = vst.msk [vmem:[#allocation6 + $0x4] sm:$0x1] %vm1729, %v1827
        %v1830 = vcombine.high %v1815, %v1815
        %1831 = vrot.lane.b32.xlu0 %v1830, 64
        %v1832 = vpop.permute.xlu0 %1831
        %1834 = vst.msk [vmem:[#allocation6 + $0x4] sm:$0x1] %vm1759, %v1832
        %v1835 = vcombine.high %v1827, %v1827
        %1837 = vst.msk [vmem:[#allocation6 + $0x5] sm:$0x1] %vm1729, %v1835
        %v1838 = vcombine.high %v1720, %v1720
        %v1840 = vunpack.c.l.s4 1966171168
        %v1841 = vunpack.c.0.s8 %v1840
        %v1842 = vlaneseq
        %v1843 = vshrl.u32 %v1842, 7
        %v1844 = vsub.s32 %v1841, %v1843
        %v1845 = vrot.slane %v1838, %v1844
        %v1847 = vunpack.c.l.s4 1966171168
        %v1848 = vunpack.c.0.s8 %v1847
        %v1849 = vlaneseq
        %v1850 = vshrl.u32 %v1849, 7
        %v1851 = vsub.s32 %v1848, %v1850
        %v1852 = vrot.slane %v1845, %v1851
        %1853 = vrot.lane.b32.xlu0 %v1852, 64
        %v1854 = vpop.permute.xlu0 %1853
        %1856 = vst.msk [vmem:[#allocation6 + $0x5] sm:$0x1] %vm1759, %v1854
        %v1857 = vcombine.high %v1845, %v1845
        %v1859 = vunpack.c.l.s4 1966171168
        %v1860 = vunpack.c.0.s8 %v1859
        %v1861 = vlaneseq
        %v1862 = vshrl.u32 %v1861, 7
        %v1863 = vsub.s32 %v1860, %v1862
        %v1864 = vrot.slane %v1857, %v1863
        %1866 = vst.msk [vmem:[#allocation6 + $0x6] sm:$0x1] %vm1729, %v1864
        %v1867 = vcombine.high %v1852, %v1852
        %1868 = vrot.lane.b32.xlu0 %v1867, 64
        %v1869 = vpop.permute.xlu0 %1868
        %1871 = vst.msk [vmem:[#allocation6 + $0x6] sm:$0x1] %vm1759, %v1869
        %1872 = vst.msk [vmem:[#allocation6 + $0x7] sm:$0x1] %vm1729, %v1721
        %v1875 = vunpack.c.l.s4 1966171168
        %v1876 = vunpack.c.0.s8 %v1875
        %v1877 = vlaneseq
        %v1878 = vshrl.u32 %v1877, 7
        %v1879 = vsub.s32 %v1876, %v1878
        %v1880 = vrot.slane %v1721, %v1879
        %v1881 = vcombine.high %v1880, %v1880
        %v1883 = vunpack.c.l.s4 1966171168
        %v1884 = vunpack.c.0.s8 %v1883
        %v1885 = vlaneseq
        %v1886 = vshrl.u32 %v1885, 7
        %v1887 = vsub.s32 %v1884, %v1886
        %v1888 = vrot.slane %v1880, %v1887
        %v1890 = vunpack.c.l.s4 1966171168
        %v1891 = vunpack.c.0.s8 %v1890
        %v1892 = vlaneseq
        %v1893 = vshrl.u32 %v1892, 7
        %v1894 = vsub.s32 %v1891, %v1893
        %v1895 = vrot.slane %v1881, %v1894
        %1896 = vrot.lane.b32.xlu0 %v1895, 64
        %v1897 = vpop.permute.xlu0 %1896
        %1899 = vst.msk [vmem:[#allocation6 + $0x7] sm:$0x1] %vm1759, %v1897
        %v1900 = vcombine.high %v1888, %v1888
        %1902 = vst.msk [vmem:[#allocation6 + $0x8] sm:$0x1] %vm1729, %v1900
        %v1903 = vcombine.high %v1895, %v1895
        %1904 = vrot.lane.b32.xlu0 %v1903, 64
        %v1905 = vpop.permute.xlu0 %1904
        %1907 = vst.msk [vmem:[#allocation6 + $0x8] sm:$0x1] %vm1759, %v1905
        %v1908 = vcombine.high %v1721, %v1721
        %v1910 = vunpack.c.l.s4 1966171168
        %v1911 = vunpack.c.0.s8 %v1910
        %v1912 = vlaneseq
        %v1913 = vshrl.u32 %v1912, 7
        %v1914 = vsub.s32 %v1911, %v1913
        %v1915 = vrot.slane %v1908, %v1914
        %v1917 = vunpack.c.l.s4 1966171168
        %v1918 = vunpack.c.0.s8 %v1917
        %v1919 = vlaneseq
        %v1920 = vshrl.u32 %v1919, 7
        %v1921 = vsub.s32 %v1918, %v1920
        %v1922 = vrot.slane %v1915, %v1921
        %1924 = vst.msk [vmem:[#allocation6 + $0x9] sm:$0x1] %vm1729, %v1922
        %v1925 = vcombine.high %v1915, %v1915
        %v1927 = vunpack.c.l.s4 1966171168
        %v1928 = vunpack.c.0.s8 %v1927
        %v1929 = vlaneseq
        %v1930 = vshrl.u32 %v1929, 7
        %v1931 = vsub.s32 %v1928, %v1930
        %v1932 = vrot.slane %v1925, %v1931
        %1933 = vrot.lane.b32.xlu0 %v1932, 64
        %v1934 = vpop.permute.xlu0 %1933
        %1936 = vst.msk [vmem:[#allocation6 + $0x9] sm:$0x1] %vm1759, %v1934
        %v1937 = vcombine.high %v1922, %v1922
        %1939 = vst.msk [vmem:[#allocation6 + $0xa] sm:$0x1] %vm1729, %v1937
        %v1942 = vunpack.c.l.s4 1966171168
        %v1943 = vunpack.c.0.s8 %v1942
        %v1944 = vlaneseq
        %v1945 = vshrl.u32 %v1944, 7
        %v1946 = vsub.s32 %v1943, %v1945
        %v1947 = vrot.slane %v1722, %v1946
        %v1949 = vunpack.c.l.s4 1966171168
        %v1950 = vunpack.c.0.s8 %v1949
        %v1951 = vlaneseq
        %v1952 = vshrl.u32 %v1951, 7
        %v1953 = vsub.s32 %v1950, %v1952
        %v1954 = vrot.slane %v1947, %v1953
        %1955 = vrot.lane.b32.xlu0 %v1954, 64
        %v1956 = vpop.permute.xlu0 %1955
        %1958 = vst.msk [vmem:[#allocation6 + $0xa] sm:$0x1] %vm1759, %v1956
        %v1959 = vcombine.high %v1947, %v1947
        %v1961 = vunpack.c.l.s4 1966171168
        %v1962 = vunpack.c.0.s8 %v1961
        %v1963 = vlaneseq
        %v1964 = vshrl.u32 %v1963, 7
        %v1965 = vsub.s32 %v1962, %v1964
        %v1966 = vrot.slane %v1959, %v1965
        %1968 = vst.msk [vmem:[#allocation6 + $0xb] sm:$0x1] %vm1729, %v1966
        %v1969 = vcombine.high %v1954, %v1954
        %1970 = vrot.lane.b32.xlu0 %v1969, 64
        %v1971 = vpop.permute.xlu0 %1970
        %1973 = vst.msk [vmem:[#allocation6 + $0xb] sm:$0x1] %vm1759, %v1971
        %v1974 = vcombine.high %v1966, %v1966
        %1976 = vst.msk [vmem:[#allocation6 + $0xc] sm:$0x1] %vm1729, %v1974
        %v1977 = vcombine.high %v1722, %v1722
        %v1979 = vunpack.c.l.s4 1966171168
        %v1980 = vunpack.c.0.s8 %v1979
        %v1981 = vlaneseq
        %v1982 = vshrl.u32 %v1981, 7
        %v1983 = vsub.s32 %v1980, %v1982
        %v1984 = vrot.slane %v1977, %v1983
        %v1986 = vunpack.c.l.s4 1966171168
        %v1987 = vunpack.c.0.s8 %v1986
        %v1988 = vlaneseq
        %v1989 = vshrl.u32 %v1988, 7
        %v1990 = vsub.s32 %v1987, %v1989
        %v1991 = vrot.slane %v1984, %v1990
        %1992 = vrot.lane.b32.xlu0 %v1991, 64
        %v1993 = vpop.permute.xlu0 %1992
        %1995 = vst.msk [vmem:[#allocation6 + $0xc] sm:$0x1] %vm1759, %v1993
        %v1996 = vcombine.high %v1984, %v1984
        %v1998 = vunpack.c.l.s4 1966171168
        %v1999 = vunpack.c.0.s8 %v1998
        %v2000 = vlaneseq
        %v2001 = vshrl.u32 %v2000, 7
        %v2002 = vsub.s32 %v1999, %v2001
        %v2003 = vrot.slane %v1996, %v2002
        %2005 = vst.msk [vmem:[#allocation6 + $0xd] sm:$0x1] %vm1729, %v2003
        %v2006 = vcombine.high %v1991, %v1991
        %2007 = vrot.lane.b32.xlu0 %v2006, 64
        %v2008 = vpop.permute.xlu0 %2007
        %2010 = vst.msk [vmem:[#allocation6 + $0xd] sm:$0x1] %vm1759, %v2008
        %2011 = vst.msk [vmem:[#allocation6 + $0xe] sm:$0x1] %vm1729, %v1723
        %v2014 = vunpack.c.l.s4 1966171168
        %v2015 = vunpack.c.0.s8 %v2014
        %v2016 = vlaneseq
        %v2017 = vshrl.u32 %v2016, 7
        %v2018 = vsub.s32 %v2015, %v2017
        %v2019 = vrot.slane %v1723, %v2018
        %v2020 = vcombine.high %v2019, %v2019
        %v2022 = vunpack.c.l.s4 1966171168
        %v2023 = vunpack.c.0.s8 %v2022
        %v2024 = vlaneseq
        %v2025 = vshrl.u32 %v2024, 7
        %v2026 = vsub.s32 %v2023, %v2025
        %v2027 = vrot.slane %v2019, %v2026
        %v2029 = vunpack.c.l.s4 1966171168
        %v2030 = vunpack.c.0.s8 %v2029
        %v2031 = vlaneseq
        %v2032 = vshrl.u32 %v2031, 7
        %v2033 = vsub.s32 %v2030, %v2032
        %v2034 = vrot.slane %v2020, %v2033
        %2035 = vrot.lane.b32.xlu0 %v2034, 64
        %v2036 = vpop.permute.xlu0 %2035
        %2038 = vst.msk [vmem:[#allocation6 + $0xe] sm:$0x1] %vm1759, %v2036
        %v2039 = vcombine.high %v2027, %v2027
        %2041 = vst.msk [vmem:[#allocation6 + $0xf] sm:$0x1] %vm1729, %v2039
        %v2042 = vcombine.high %v2034, %v2034
        %2043 = vrot.lane.b32.xlu0 %v2042, 64
        %v2044 = vpop.permute.xlu0 %2043
        %2046 = vst.msk [vmem:[#allocation6 + $0xf] sm:$0x1] %vm1759, %v2044
        %v2047 = vcombine.high %v1723, %v1723
        %v2049 = vunpack.c.l.s4 1966171168
        %v2050 = vunpack.c.0.s8 %v2049
        %v2051 = vlaneseq
        %v2052 = vshrl.u32 %v2051, 7
        %v2053 = vsub.s32 %v2050, %v2052
        %v2054 = vrot.slane %v2047, %v2053
        %v2056 = vunpack.c.l.s4 1966171168
        %v2057 = vunpack.c.0.s8 %v2056
        %v2058 = vlaneseq
        %v2059 = vshrl.u32 %v2058, 7
        %v2060 = vsub.s32 %v2057, %v2059
        %v2061 = vrot.slane %v2054, %v2060
        %2063 = vst.msk [vmem:[#allocation6 + $0x10] sm:$0x1] %vm1729, %v2061
        %v2064 = vcombine.high %v2054, %v2054
        %v2066 = vunpack.c.l.s4 1966171168
        %v2067 = vunpack.c.0.s8 %v2066
        %v2068 = vlaneseq
        %v2069 = vshrl.u32 %v2068, 7
        %v2070 = vsub.s32 %v2067, %v2069
        %v2071 = vrot.slane %v2064, %v2070
        %2072 = vrot.lane.b32.xlu0 %v2071, 64
        %v2073 = vpop.permute.xlu0 %2072
        %2075 = vst.msk [vmem:[#allocation6 + $0x10] sm:$0x1] %vm1759, %v2073
        %v2076 = vcombine.high %v2061, %v2061
        %2078 = vst.msk [vmem:[#allocation6 + $0x11] sm:$0x1] %vm1729, %v2076
        %v2081 = vunpack.c.l.s4 1966171168
        %v2082 = vunpack.c.0.s8 %v2081
        %v2083 = vlaneseq
        %v2084 = vshrl.u32 %v2083, 7
        %v2085 = vsub.s32 %v2082, %v2084
        %v2086 = vrot.slane %v1724, %v2085
        %v2088 = vunpack.c.l.s4 1966171168
        %v2089 = vunpack.c.0.s8 %v2088
        %v2090 = vlaneseq
        %v2091 = vshrl.u32 %v2090, 7
        %v2092 = vsub.s32 %v2089, %v2091
        %v2093 = vrot.slane %v2086, %v2092
        %2094 = vrot.lane.b32.xlu0 %v2093, 64
        %v2095 = vpop.permute.xlu0 %2094
        %2097 = vst.msk [vmem:[#allocation6 + $0x11] sm:$0x1] %vm1759, %v2095
        %v2098 = vcombine.high %v2086, %v2086
        %v2100 = vunpack.c.l.s4 1966171168
        %v2101 = vunpack.c.0.s8 %v2100
        %v2102 = vlaneseq
        %v2103 = vshrl.u32 %v2102, 7
        %v2104 = vsub.s32 %v2101, %v2103
        %v2105 = vrot.slane %v2098, %v2104
        %2107 = vst.msk [vmem:[#allocation6 + $0x12] sm:$0x1] %vm1729, %v2105
        %v2108 = vcombine.high %v2093, %v2093
        %2109 = vrot.lane.b32.xlu0 %v2108, 64
        %v2110 = vpop.permute.xlu0 %2109
        %2112 = vst.msk [vmem:[#allocation6 + $0x12] sm:$0x1] %vm1759, %v2110
        %v2113 = vcombine.high %v2105, %v2105
        %2115 = vst.msk [vmem:[#allocation6 + $0x13] sm:$0x1] %vm1729, %v2113
        %v2116 = vcombine.high %v1724, %v1724
        %v2118 = vunpack.c.l.s4 1966171168
        %v2119 = vunpack.c.0.s8 %v2118
        %v2120 = vlaneseq
        %v2121 = vshrl.u32 %v2120, 7
        %v2122 = vsub.s32 %v2119, %v2121
        %v2123 = vrot.slane %v2116, %v2122
        %v2125 = vunpack.c.l.s4 1966171168
        %v2126 = vunpack.c.0.s8 %v2125
        %v2127 = vlaneseq
        %v2128 = vshrl.u32 %v2127, 7
        %v2129 = vsub.s32 %v2126, %v2128
        %v2130 = vrot.slane %v2123, %v2129
        %2131 = vrot.lane.b32.xlu0 %v2130, 64
        %v2132 = vpop.permute.xlu0 %2131
        %2134 = vst.msk [vmem:[#allocation6 + $0x13] sm:$0x1] %vm1759, %v2132
        %v2135 = vcombine.high %v2123, %v2123
        %v2137 = vunpack.c.l.s4 1966171168
        %v2138 = vunpack.c.0.s8 %v2137
        %v2139 = vlaneseq
        %v2140 = vshrl.u32 %v2139, 7
        %v2141 = vsub.s32 %v2138, %v2140
        %v2142 = vrot.slane %v2135, %v2141
        %2144 = vst.msk [vmem:[#allocation6 + $0x14] sm:$0x1] %vm1729, %v2142
        %v2145 = vcombine.high %v2130, %v2130
        %2146 = vrot.lane.b32.xlu0 %v2145, 64
        %v2147 = vpop.permute.xlu0 %2146
        %2149 = vst.msk [vmem:[#allocation6 + $0x14] sm:$0x1] %vm1759, %v2147
        %2150 = vst.msk [vmem:[#allocation6 + $0x15] sm:$0x1] %vm1729, %v1725
        %v2153 = vunpack.c.l.s4 1966171168
        %v2154 = vunpack.c.0.s8 %v2153
        %v2155 = vlaneseq
        %v2156 = vshrl.u32 %v2155, 7
        %v2157 = vsub.s32 %v2154, %v2156
        %v2158 = vrot.slane %v1725, %v2157
        %v2159 = vcombine.high %v2158, %v2158
        %v2161 = vunpack.c.l.s4 1966171168
        %v2162 = vunpack.c.0.s8 %v2161
        %v2163 = vlaneseq
        %v2164 = vshrl.u32 %v2163, 7
        %v2165 = vsub.s32 %v2162, %v2164
        %v2166 = vrot.slane %v2158, %v2165
        %v2168 = vunpack.c.l.s4 1966171168
        %v2169 = vunpack.c.0.s8 %v2168
        %v2170 = vlaneseq
        %v2171 = vshrl.u32 %v2170, 7
        %v2172 = vsub.s32 %v2169, %v2171
        %v2173 = vrot.slane %v2159, %v2172
        %2174 = vrot.lane.b32.xlu0 %v2173, 64
        %v2175 = vpop.permute.xlu0 %2174
        %2177 = vst.msk [vmem:[#allocation6 + $0x15] sm:$0x1] %vm1759, %v2175
        %v2178 = vcombine.high %v2166, %v2166
        %2180 = vst.msk [vmem:[#allocation6 + $0x16] sm:$0x1] %vm1729, %v2178
        %v2181 = vcombine.high %v2173, %v2173
        %2182 = vrot.lane.b32.xlu0 %v2181, 64
        %v2183 = vpop.permute.xlu0 %2182
        %2185 = vst.msk [vmem:[#allocation6 + $0x16] sm:$0x1] %vm1759, %v2183
        %v2186 = vcombine.high %v1725, %v1725
        %v2188 = vunpack.c.l.s4 1966171168
        %v2189 = vunpack.c.0.s8 %v2188
        %v2190 = vlaneseq
        %v2191 = vshrl.u32 %v2190, 7
        %v2192 = vsub.s32 %v2189, %v2191
        %v2193 = vrot.slane %v2186, %v2192
        %v2195 = vunpack.c.l.s4 1966171168
        %v2196 = vunpack.c.0.s8 %v2195
        %v2197 = vlaneseq
        %v2198 = vshrl.u32 %v2197, 7
        %v2199 = vsub.s32 %v2196, %v2198
        %v2200 = vrot.slane %v2193, %v2199
        %2202 = vst.msk [vmem:[#allocation6 + $0x17] sm:$0x1] %vm1729, %v2200
        %v2203 = vcombine.high %v2193, %v2193
        %v2205 = vunpack.c.l.s4 1966171168
        %v2206 = vunpack.c.0.s8 %v2205
        %v2207 = vlaneseq
        %v2208 = vshrl.u32 %v2207, 7
        %v2209 = vsub.s32 %v2206, %v2208
        %v2210 = vrot.slane %v2203, %v2209
        %2211 = vrot.lane.b32.xlu0 %v2210, 64
        %v2212 = vpop.permute.xlu0 %2211
        %2214 = vst.msk [vmem:[#allocation6 + $0x17] sm:$0x1] %vm1759, %v2212
        %v2215 = vcombine.high %v2200, %v2200
        %2217 = vst.msk [vmem:[#allocation6 + $0x18] sm:$0x1] %vm1729, %v2215
        %v2218 = vld [vmem:[#allocation6] sm:$0xff]
        %v2219 = vld [vmem:[#allocation6 + $0x8] sm:$0xff]
        %v2220 = vld [vmem:[#allocation6 + $0x10] sm:$0xff]
        %v2221 = vld [vmem:[#allocation6 + $0x18] sm:$0x1]
        %v2226 = vlaneseq
        %v2227 = vshrl.u32 %v2226, 7
        %v2228 = vsub.s32 0, %v2227
        %v2229 = vrot.slane %v2218, %v2228
        %v2230 = vlaneseq
        %v2231 = vshrl.u32 %v2230, 7
        %v2232 = vsub.s32 1, %v2231
        %v2233 = vrot.slane %v2218, %v2232
        %v2234 = vlaneseq
        %v2235 = vshrl.u32 %v2234, 7
        %v2236 = vsub.s32 2, %v2235
        %v2237 = vrot.slane %v2218, %v2236
        %v2238 = vlaneseq
        %v2239 = vshrl.u32 %v2238, 7
        %v2240 = vsub.s32 3, %v2239
        %v2241 = vrot.slane %v2218, %v2240
        %v2242 = vlaneseq
        %v2243 = vshrl.u32 %v2242, 7
        %v2244 = vsub.s32 4, %v2243
        %v2245 = vrot.slane %v2218, %v2244
        %v2246 = vlaneseq
        %v2247 = vshrl.u32 %v2246, 7
        %v2248 = vsub.s32 5, %v2247
        %v2249 = vrot.slane %v2218, %v2248
        %v2250 = vlaneseq
        %v2251 = vshrl.u32 %v2250, 7
        %v2252 = vsub.s32 6, %v2251
        %v2253 = vrot.slane %v2218, %v2252
        %v2254 = vlaneseq
        %v2255 = vshrl.u32 %v2254, 7
        %v2256 = vsub.s32 7, %v2255
        %v2257 = vrot.slane %v2218, %v2256
        %v2258 = vlaneseq
        %v2259 = vshrl.u32 %v2258, 7
        %v2260 = vsub.s32 0, %v2259
        %v2261 = vrot.slane %v2219, %v2260
        %v2262 = vlaneseq
        %v2263 = vshrl.u32 %v2262, 7
        %v2264 = vsub.s32 1, %v2263
        %v2265 = vrot.slane %v2219, %v2264
        %v2266 = vlaneseq
        %v2267 = vshrl.u32 %v2266, 7
        %v2268 = vsub.s32 2, %v2267
        %v2269 = vrot.slane %v2219, %v2268
        %v2270 = vlaneseq
        %v2271 = vshrl.u32 %v2270, 7
        %v2272 = vsub.s32 3, %v2271
        %v2273 = vrot.slane %v2219, %v2272
        %v2274 = vlaneseq
        %v2275 = vshrl.u32 %v2274, 7
        %v2276 = vsub.s32 4, %v2275
        %v2277 = vrot.slane %v2219, %v2276
        %v2278 = vlaneseq
        %v2279 = vshrl.u32 %v2278, 7
        %v2280 = vsub.s32 5, %v2279
        %v2281 = vrot.slane %v2219, %v2280
        %v2282 = vlaneseq
        %v2283 = vshrl.u32 %v2282, 7
        %v2284 = vsub.s32 6, %v2283
        %v2285 = vrot.slane %v2219, %v2284
        %v2286 = vlaneseq
        %v2287 = vshrl.u32 %v2286, 7
        %v2288 = vsub.s32 7, %v2287
        %v2289 = vrot.slane %v2219, %v2288
        %v2290 = vlaneseq
        %v2291 = vshrl.u32 %v2290, 7
        %v2292 = vsub.s32 0, %v2291
        %v2293 = vrot.slane %v2220, %v2292
        %v2294 = vlaneseq
        %v2295 = vshrl.u32 %v2294, 7
        %v2296 = vsub.s32 1, %v2295
        %v2297 = vrot.slane %v2220, %v2296
        %v2298 = vlaneseq
        %v2299 = vshrl.u32 %v2298, 7
        %v2300 = vsub.s32 2, %v2299
        %v2301 = vrot.slane %v2220, %v2300
        %v2302 = vlaneseq
        %v2303 = vshrl.u32 %v2302, 7
        %v2304 = vsub.s32 3, %v2303
        %v2305 = vrot.slane %v2220, %v2304
        %v2306 = vlaneseq
        %v2307 = vshrl.u32 %v2306, 7
        %v2308 = vsub.s32 4, %v2307
        %v2309 = vrot.slane %v2220, %v2308
        %v2310 = vlaneseq
        %v2311 = vshrl.u32 %v2310, 7
        %v2312 = vsub.s32 5, %v2311
        %v2313 = vrot.slane %v2220, %v2312
        %v2314 = vlaneseq
        %v2315 = vshrl.u32 %v2314, 7
        %v2316 = vsub.s32 6, %v2315
        %v2317 = vrot.slane %v2220, %v2316
        %v2318 = vlaneseq
        %v2319 = vshrl.u32 %v2318, 7
        %v2320 = vsub.s32 7, %v2319
        %v2321 = vrot.slane %v2220, %v2320
        %v2322 = vlaneseq
        %v2323 = vshrl.u32 %v2322, 7
        %v2324 = vsub.s32 0, %v2323
        %v2325 = vrot.slane %v2221, %v2324
        %v2351 = vpack.c.bf16 %v2229, %v2229
        %v2352 = vpack.c.bf16 %v2233, %v2233
        %v2353 = vpack.c.bf16 %v2237, %v2237
        %v2354 = vpack.c.bf16 %v2241, %v2241
        %v2355 = vpack.c.bf16 %v2245, %v2245
        %v2356 = vpack.c.bf16 %v2249, %v2249
        %v2357 = vpack.c.bf16 %v2253, %v2253
        %v2358 = vpack.c.bf16 %v2257, %v2257
        %v2359 = vpack.c.bf16 %v2261, %v2261
        %v2360 = vpack.c.bf16 %v2265, %v2265
        %v2361 = vpack.c.bf16 %v2269, %v2269
        %v2362 = vpack.c.bf16 %v2273, %v2273
        %v2363 = vpack.c.bf16 %v2277, %v2277
        %v2364 = vpack.c.bf16 %v2281, %v2281
        %v2365 = vpack.c.bf16 %v2285, %v2285
        %v2366 = vpack.c.bf16 %v2289, %v2289
        %v2367 = vpack.c.bf16 %v2293, %v2293
        %v2368 = vpack.c.bf16 %v2297, %v2297
        %v2369 = vpack.c.bf16 %v2301, %v2301
        %v2370 = vpack.c.bf16 %v2305, %v2305
        %v2371 = vpack.c.bf16 %v2309, %v2309
        %v2372 = vpack.c.bf16 %v2313, %v2313
        %v2373 = vpack.c.bf16 %v2317, %v2317
        %v2374 = vpack.c.bf16 %v2321, %v2321
        %v2375 = vpack.c.bf16 %v2325, %v2325
        %v2376 = vld [vmem:[%s3] sm:$0xf]
        %v2377 = vld [vmem:[%s3 + $0x4] sm:$0xf]
        %v2378 = vld [vmem:[%s3 + $0x8] sm:$0xf]
        %v2379 = vld [vmem:[%s3 + $0xc] sm:$0xf]
        %v2380 = vld [vmem:[%s3 + $0x10] sm:$0xf]
        %v2381 = vld [vmem:[%s3 + $0x14] sm:$0xf]
        %v2382 = vld [vmem:[%s3 + $0x18] sm:$0xf]
        %v2383 = vld [vmem:[%s3 + $0x1c] sm:$0xf]
        %v2384 = vld [vmem:[%s3 + $0x20] sm:$0xf]
        %v2385 = vld [vmem:[%s3 + $0x24] sm:$0xf]
        %v2386 = vld [vmem:[%s3 + $0x28] sm:$0xf]
        %v2387 = vld [vmem:[%s3 + $0x2c] sm:$0xf]
        %v2388 = vld [vmem:[%s3 + $0x30] sm:$0xf]
        %v2389 = vld [vmem:[%s3 + $0x34] sm:$0xf]
        %v2390 = vld [vmem:[%s3 + $0x38] sm:$0xf]
        %v2391 = vld [vmem:[%s3 + $0x3c] sm:$0xf]
        %v2392 = vld [vmem:[%s3 + $0x40] sm:$0xf]
        %v2393 = vld [vmem:[%s3 + $0x44] sm:$0xf]
        %v2394 = vld [vmem:[%s3 + $0x48] sm:$0xf]
        %v2395 = vld [vmem:[%s3 + $0x4c] sm:$0xf]
        %v2396 = vld [vmem:[%s3 + $0x50] sm:$0xf]
        %v2397 = vld [vmem:[%s3 + $0x54] sm:$0xf]
        %v2398 = vld [vmem:[%s3 + $0x58] sm:$0xf]
        %v2399 = vld [vmem:[%s3 + $0x5c] sm:$0xf]
        %v2400 = vld [vmem:[%s3 + $0x60] sm:$0xf]
        %v2401 = vld [vmem:[%s3 + $0x64] sm:$0xf]
        %v2402 = vld [vmem:[%s3 + $0x68] sm:$0xf]
        %v2403 = vld [vmem:[%s3 + $0x6c] sm:$0xf]
        %v2404 = vld [vmem:[%s3 + $0x70] sm:$0xf]
        %v2405 = vld [vmem:[%s3 + $0x74] sm:$0xf]
        %v2406 = vld [vmem:[%s3 + $0x78] sm:$0xf]
        %v2407 = vld [vmem:[%s3 + $0x7c] sm:$0xf]
        %v2408 = vld [vmem:[%s3 + $0x80] sm:$0xf]
        %v2409 = vld [vmem:[%s3 + $0x84] sm:$0xf]
        %v2410 = vld [vmem:[%s3 + $0x88] sm:$0xf]
        %v2411 = vld [vmem:[%s3 + $0x8c] sm:$0xf]
        %v2412 = vld [vmem:[%s3 + $0x90] sm:$0xf]
        %v2413 = vld [vmem:[%s3 + $0x94] sm:$0xf]
        %v2414 = vld [vmem:[%s3 + $0x98] sm:$0xf]
        %v2415 = vld [vmem:[%s3 + $0x9c] sm:$0xf]
        %v2416 = vld [vmem:[%s3 + $0xa0] sm:$0xf]
        %v2417 = vld [vmem:[%s3 + $0xa4] sm:$0xf]
        %v2418 = vld [vmem:[%s3 + $0xa8] sm:$0xf]
        %v2419 = vld [vmem:[%s3 + $0xac] sm:$0xf]
        %v2420 = vld [vmem:[%s3 + $0xb0] sm:$0xf]
        %v2421 = vld [vmem:[%s3 + $0xb4] sm:$0xf]
        %v2422 = vld [vmem:[%s3 + $0xb8] sm:$0xf]
        %v2423 = vld [vmem:[%s3 + $0xbc] sm:$0xf]
        %v2424 = vld [vmem:[%s3 + $0xc0] sm:$0xf]
        %v2425 = vld [vmem:[%s3 + $0xc4] sm:$0xf]
        %v2426 = vld [vmem:[%s3 + $0xc8] sm:$0xf]
        %v2427 = vld [vmem:[%s3 + $0xcc] sm:$0xf]
        %v2428 = vld [vmem:[%s3 + $0xd0] sm:$0xf]
        %v2429 = vld [vmem:[%s3 + $0xd4] sm:$0xf]
        %v2430 = vld [vmem:[%s3 + $0xd8] sm:$0xf]
        %v2431 = vld [vmem:[%s3 + $0xdc] sm:$0xf]
        %v2432 = vld [vmem:[%s3 + $0xe0] sm:$0xf]
        %v2433 = vld [vmem:[%s3 + $0xe4] sm:$0xf]
        %v2434 = vld [vmem:[%s3 + $0xe8] sm:$0xf]
        %v2435 = vld [vmem:[%s3 + $0xec] sm:$0xf]
        %v2436 = vld [vmem:[%s3 + $0xf0] sm:$0xf]
        %v2437 = vld [vmem:[%s3 + $0xf4] sm:$0xf]
        %v2438 = vld [vmem:[%s3 + $0xf8] sm:$0xf]
        %v2439 = vld [vmem:[%s3 + $0xfc] sm:$0xf]
        %v2440 = vld [vmem:[%s3 + $0x100] sm:$0xf]
        %v2441 = vld [vmem:[%s3 + $0x104] sm:$0xf]
        %v2442 = vld [vmem:[%s3 + $0x108] sm:$0xf]
        %v2443 = vld [vmem:[%s3 + $0x10c] sm:$0xf]
        %v2444 = vld [vmem:[%s3 + $0x110] sm:$0xf]
        %v2445 = vld [vmem:[%s3 + $0x114] sm:$0xf]
        %v2446 = vld [vmem:[%s3 + $0x118] sm:$0xf]
        %v2447 = vld [vmem:[%s3 + $0x11c] sm:$0xf]
        %v2448 = vld [vmem:[%s3 + $0x120] sm:$0xf]
        %v2449 = vld [vmem:[%s3 + $0x124] sm:$0xf]
        %v2450 = vld [vmem:[%s3 + $0x128] sm:$0xf]
        %v2451 = vld [vmem:[%s3 + $0x12c] sm:$0xf]
        %v2452 = vld [vmem:[%s3 + $0x130] sm:$0xf]
        %v2453 = vld [vmem:[%s3 + $0x134] sm:$0xf]
        %v2454 = vld [vmem:[%s3 + $0x138] sm:$0xf]
        %v2455 = vld [vmem:[%s3 + $0x13c] sm:$0xf]
        %v2456 = vld [vmem:[%s3 + $0x140] sm:$0xf]
        %v2457 = vld [vmem:[%s3 + $0x144] sm:$0xf]
        %v2458 = vld [vmem:[%s3 + $0x148] sm:$0xf]
        %v2459 = vld [vmem:[%s3 + $0x14c] sm:$0xf]
        %v2460 = vld [vmem:[%s3 + $0x150] sm:$0xf]
        %v2461 = vld [vmem:[%s3 + $0x154] sm:$0xf]
        %v2462 = vld [vmem:[%s3 + $0x158] sm:$0xf]
        %v2463 = vld [vmem:[%s3 + $0x15c] sm:$0xf]
        %v2464 = vld [vmem:[%s3 + $0x160] sm:$0xf]
        %v2465 = vld [vmem:[%s3 + $0x164] sm:$0xf]
        %v2466 = vld [vmem:[%s3 + $0x168] sm:$0xf]
        %v2467 = vld [vmem:[%s3 + $0x16c] sm:$0xf]
        %v2468 = vld [vmem:[%s3 + $0x170] sm:$0xf]
        %v2469 = vld [vmem:[%s3 + $0x174] sm:$0xf]
        %v2470 = vld [vmem:[%s3 + $0x178] sm:$0xf]
        %v2471 = vld [vmem:[%s3 + $0x17c] sm:$0xf]
        %v2472 = vld [vmem:[%s3 + $0x180] sm:$0xf]
        %v2473 = vld [vmem:[%s3 + $0x184] sm:$0xf]
        %v2474 = vld [vmem:[%s3 + $0x188] sm:$0xf]
        %v2475 = vld [vmem:[%s3 + $0x18c] sm:$0xf]
        %v2476 = vld [vmem:[%s3 + $0x190] sm:$0xf]
        %v2477 = vld [vmem:[%s3 + $0x194] sm:$0xf]
        %v2478 = vld [vmem:[%s3 + $0x198] sm:$0xf]
        %v2479 = vld [vmem:[%s3 + $0x19c] sm:$0xf]
        %v2480 = vld [vmem:[%s3 + $0x1a0] sm:$0xf]
        %v2481 = vld [vmem:[%s3 + $0x1a4] sm:$0xf]
        %v2482 = vld [vmem:[%s3 + $0x1a8] sm:$0xf]
        %v2483 = vld [vmem:[%s3 + $0x1ac] sm:$0xf]
        %v2484 = vld [vmem:[%s3 + $0x1b0] sm:$0xf]
        %v2485 = vld [vmem:[%s3 + $0x1b4] sm:$0xf]
        %v2486 = vld [vmem:[%s3 + $0x1b8] sm:$0xf]
        %v2487 = vld [vmem:[%s3 + $0x1bc] sm:$0xf]
        %v2488 = vld [vmem:[%s3 + $0x1c0] sm:$0xf]
        %v2489 = vld [vmem:[%s3 + $0x1c4] sm:$0xf]
        %v2490 = vld [vmem:[%s3 + $0x1c8] sm:$0xf]
        %v2491 = vld [vmem:[%s3 + $0x1cc] sm:$0xf]
        %v2492 = vld [vmem:[%s3 + $0x1d0] sm:$0xf]
        %v2493 = vld [vmem:[%s3 + $0x1d4] sm:$0xf]
        %v2494 = vld [vmem:[%s3 + $0x1d8] sm:$0xf]
        %v2495 = vld [vmem:[%s3 + $0x1dc] sm:$0xf]
        %v2496 = vld [vmem:[%s3 + $0x1e0] sm:$0xf]
        %v2497 = vld [vmem:[%s3 + $0x1e4] sm:$0xf]
        %v2498 = vld [vmem:[%s3 + $0x1e8] sm:$0xf]
        %v2499 = vld [vmem:[%s3 + $0x1ec] sm:$0xf]
        %v2500 = vld [vmem:[%s3 + $0x1f0] sm:$0xf]
        %v2501 = vld [vmem:[%s3 + $0x1f4] sm:$0xf]
        %v2502 = vld [vmem:[%s3 + $0x1f8] sm:$0xf]
        %v2503 = vld [vmem:[%s3 + $0x1fc] sm:$0xf]
        %v2504 = vld [vmem:[%s3 + $0x200] sm:$0xf]
        %v2505 = vld [vmem:[%s3 + $0x204] sm:$0xf]
        %v2506 = vld [vmem:[%s3 + $0x208] sm:$0xf]
        %v2507 = vld [vmem:[%s3 + $0x20c] sm:$0xf]
        %v2508 = vld [vmem:[%s3 + $0x210] sm:$0xf]
        %v2509 = vld [vmem:[%s3 + $0x214] sm:$0xf]
        %v2510 = vld [vmem:[%s3 + $0x218] sm:$0xf]
        %v2511 = vld [vmem:[%s3 + $0x21c] sm:$0xf]
        %v2512 = vld [vmem:[%s3 + $0x220] sm:$0xf]
        %v2513 = vld [vmem:[%s3 + $0x224] sm:$0xf]
        %v2514 = vld [vmem:[%s3 + $0x228] sm:$0xf]
        %v2515 = vld [vmem:[%s3 + $0x22c] sm:$0xf]
        %v2516 = vld [vmem:[%s3 + $0x230] sm:$0xf]
        %v2517 = vld [vmem:[%s3 + $0x234] sm:$0xf]
        %v2518 = vld [vmem:[%s3 + $0x238] sm:$0xf]
        %v2519 = vld [vmem:[%s3 + $0x23c] sm:$0xf]
        %v2520 = vld [vmem:[%s3 + $0x240] sm:$0xf]
        %v2521 = vld [vmem:[%s3 + $0x244] sm:$0xf]
        %v2522 = vld [vmem:[%s3 + $0x248] sm:$0xf]
        %v2523 = vld [vmem:[%s3 + $0x24c] sm:$0xf]
        %v2524 = vld [vmem:[%s3 + $0x250] sm:$0xf]
        %v2525 = vld [vmem:[%s3 + $0x254] sm:$0xf]
        %v2526 = vld [vmem:[%s3 + $0x258] sm:$0xf]
        %v2527 = vld [vmem:[%s3 + $0x25c] sm:$0xf]
        %v2528 = vld [vmem:[%s3 + $0x260] sm:$0xf]
        %v2529 = vld [vmem:[%s3 + $0x264] sm:$0xf]
        %v2530 = vld [vmem:[%s3 + $0x268] sm:$0xf]
        %v2531 = vld [vmem:[%s3 + $0x26c] sm:$0xf]
        %v2532 = vld [vmem:[%s3 + $0x270] sm:$0xf]
        %v2533 = vld [vmem:[%s3 + $0x274] sm:$0xf]
        %v2534 = vld [vmem:[%s3 + $0x278] sm:$0xf]
        %v2535 = vld [vmem:[%s3 + $0x27c] sm:$0xf]
        %v2536 = vld [vmem:[%s3 + $0x280] sm:$0xf]
        %v2537 = vld [vmem:[%s3 + $0x284] sm:$0xf]
        %v2538 = vld [vmem:[%s3 + $0x288] sm:$0xf]
        %v2539 = vld [vmem:[%s3 + $0x28c] sm:$0xf]
        %v2540 = vld [vmem:[%s3 + $0x290] sm:$0xf]
        %v2541 = vld [vmem:[%s3 + $0x294] sm:$0xf]
        %v2542 = vld [vmem:[%s3 + $0x298] sm:$0xf]
        %v2543 = vld [vmem:[%s3 + $0x29c] sm:$0xf]
        %v2544 = vld [vmem:[%s3 + $0x2a0] sm:$0xf]
        %v2545 = vld [vmem:[%s3 + $0x2a4] sm:$0xf]
        %v2546 = vld [vmem:[%s3 + $0x2a8] sm:$0xf]
        %v2547 = vld [vmem:[%s3 + $0x2ac] sm:$0xf]
        %v2548 = vld [vmem:[%s3 + $0x2b0] sm:$0xf]
        %v2549 = vld [vmem:[%s3 + $0x2b4] sm:$0xf]
        %v2550 = vld [vmem:[%s3 + $0x2b8] sm:$0xf]
        %v2551 = vld [vmem:[%s3 + $0x2bc] sm:$0xf]
        %v2552 = vld [vmem:[%s3 + $0x2c0] sm:$0xf]
        %v2553 = vld [vmem:[%s3 + $0x2c4] sm:$0xf]
        %v2554 = vld [vmem:[%s3 + $0x2c8] sm:$0xf]
        %v2555 = vld [vmem:[%s3 + $0x2cc] sm:$0xf]
        %v2556 = vld [vmem:[%s3 + $0x2d0] sm:$0xf]
        %v2557 = vld [vmem:[%s3 + $0x2d4] sm:$0xf]
        %v2558 = vld [vmem:[%s3 + $0x2d8] sm:$0xf]
        %v2559 = vld [vmem:[%s3 + $0x2dc] sm:$0xf]
        %v2560 = vld [vmem:[%s3 + $0x2e0] sm:$0xf]
        %v2561 = vld [vmem:[%s3 + $0x2e4] sm:$0xf]
        %v2562 = vld [vmem:[%s3 + $0x2e8] sm:$0xf]
        %v2563 = vld [vmem:[%s3 + $0x2ec] sm:$0xf]
        %v2564 = vld [vmem:[%s3 + $0x2f0] sm:$0xf]
        %v2565 = vld [vmem:[%s3 + $0x2f4] sm:$0xf]
        %v2566 = vld [vmem:[%s3 + $0x2f8] sm:$0xf]
        %v2567 = vld [vmem:[%s3 + $0x2fc] sm:$0xf]
        %v2568 = vld [vmem:[%s3 + $0x300] sm:$0xf]
        %v2569 = vld [vmem:[%s3 + $0x304] sm:$0xf]
        %v2570 = vld [vmem:[%s3 + $0x308] sm:$0xf]
        %v2571 = vld [vmem:[%s3 + $0x30c] sm:$0xf]
        %v2572 = vld [vmem:[%s3 + $0x310] sm:$0xf]
        %v2573 = vld [vmem:[%s3 + $0x314] sm:$0xf]
        %v2574 = vld [vmem:[%s3 + $0x318] sm:$0xf]
        %v2575 = vld [vmem:[%s3 + $0x31c] sm:$0xf]
        %v2576 = vld [vmem:[%s3 + $0x320] sm:$0xf]
        %v2577 = vld [vmem:[%s3 + $0x324] sm:$0xf]
        %v2578 = vld [vmem:[%s3 + $0x328] sm:$0xf]
        %v2579 = vld [vmem:[%s3 + $0x32c] sm:$0xf]
        %v2580 = vld [vmem:[%s3 + $0x330] sm:$0xf]
        %v2581 = vld [vmem:[%s3 + $0x334] sm:$0xf]
        %v2582 = vld [vmem:[%s3 + $0x338] sm:$0xf]
        %v2583 = vld [vmem:[%s3 + $0x33c] sm:$0xf]
        %v2584 = vld [vmem:[%s3 + $0x340] sm:$0xf]
        %v2585 = vld [vmem:[%s3 + $0x344] sm:$0xf]
        %v2586 = vld [vmem:[%s3 + $0x348] sm:$0xf]
        %v2587 = vld [vmem:[%s3 + $0x34c] sm:$0xf]
        %v2588 = vld [vmem:[%s3 + $0x350] sm:$0xf]
        %v2589 = vld [vmem:[%s3 + $0x354] sm:$0xf]
        %v2590 = vld [vmem:[%s3 + $0x358] sm:$0xf]
        %v2591 = vld [vmem:[%s3 + $0x35c] sm:$0xf]
        %v2592 = vld [vmem:[%s3 + $0x360] sm:$0xf]
        %v2593 = vld [vmem:[%s3 + $0x364] sm:$0xf]
        %v2594 = vld [vmem:[%s3 + $0x368] sm:$0xf]
        %v2595 = vld [vmem:[%s3 + $0x36c] sm:$0xf]
        %v2596 = vld [vmem:[%s3 + $0x370] sm:$0xf]
        %v2597 = vld [vmem:[%s3 + $0x374] sm:$0xf]
        %v2598 = vld [vmem:[%s3 + $0x378] sm:$0xf]
        %v2599 = vld [vmem:[%s3 + $0x37c] sm:$0xf]
        %v2600 = vld [vmem:[%s3 + $0x380] sm:$0xf]
        %v2601 = vld [vmem:[%s3 + $0x384] sm:$0xf]
        %v2602 = vld [vmem:[%s3 + $0x388] sm:$0xf]
        %v2603 = vld [vmem:[%s3 + $0x38c] sm:$0xf]
        %v2604 = vld [vmem:[%s3 + $0x390] sm:$0xf]
        %v2605 = vld [vmem:[%s3 + $0x394] sm:$0xf]
        %v2606 = vld [vmem:[%s3 + $0x398] sm:$0xf]
        %v2607 = vld [vmem:[%s3 + $0x39c] sm:$0xf]
        %v2608 = vld [vmem:[%s3 + $0x3a0] sm:$0xf]
        %v2609 = vld [vmem:[%s3 + $0x3a4] sm:$0xf]
        %v2610 = vld [vmem:[%s3 + $0x3a8] sm:$0xf]
        %v2611 = vld [vmem:[%s3 + $0x3ac] sm:$0xf]
        %v2612 = vld [vmem:[%s3 + $0x3b0] sm:$0xf]
        %v2613 = vld [vmem:[%s3 + $0x3b4] sm:$0xf]
        %v2614 = vld [vmem:[%s3 + $0x3b8] sm:$0xf]
        %v2615 = vld [vmem:[%s3 + $0x3bc] sm:$0xf]
        %v2616 = vld [vmem:[%s3 + $0x3c0] sm:$0xf]
        %v2617 = vld [vmem:[%s3 + $0x3c4] sm:$0xf]
        %v2618 = vld [vmem:[%s3 + $0x3c8] sm:$0xf]
        %v2619 = vld [vmem:[%s3 + $0x3cc] sm:$0xf]
        %v2620 = vld [vmem:[%s3 + $0x3d0] sm:$0xf]
        %v2621 = vld [vmem:[%s3 + $0x3d4] sm:$0xf]
        %v2622 = vld [vmem:[%s3 + $0x3d8] sm:$0xf]
        %v2623 = vld [vmem:[%s3 + $0x3dc] sm:$0xf]
        %v2624 = vld [vmem:[%s3 + $0x3e0] sm:$0xf]
        %v2625 = vld [vmem:[%s3 + $0x3e4] sm:$0xf]
        %v2626 = vld [vmem:[%s3 + $0x3e8] sm:$0xf]
        %v2627 = vld [vmem:[%s3 + $0x3ec] sm:$0xf]
        %v2628 = vld [vmem:[%s3 + $0x3f0] sm:$0xf]
        %v2629 = vld [vmem:[%s3 + $0x3f4] sm:$0xf]
        %v2630 = vld [vmem:[%s3 + $0x3f8] sm:$0xf]
        %v2631 = vld [vmem:[%s3 + $0x3fc] sm:$0xf]
        %v2632 = vld [vmem:[%s3 + $0x400] sm:$0xf]
        %v2633 = vld [vmem:[%s3 + $0x404] sm:$0xf]
        %v2634 = vld [vmem:[%s3 + $0x408] sm:$0xf]
        %v2635 = vld [vmem:[%s3 + $0x40c] sm:$0xf]
        %v2636 = vld [vmem:[%s3 + $0x410] sm:$0xf]
        %v2637 = vld [vmem:[%s3 + $0x414] sm:$0xf]
        %v2638 = vld [vmem:[%s3 + $0x418] sm:$0xf]
        %v2639 = vld [vmem:[%s3 + $0x41c] sm:$0xf]
        %v2640 = vld [vmem:[%s3 + $0x420] sm:$0xf]
        %v2641 = vld [vmem:[%s3 + $0x424] sm:$0xf]
        %v2642 = vld [vmem:[%s3 + $0x428] sm:$0xf]
        %v2643 = vld [vmem:[%s3 + $0x42c] sm:$0xf]
        %v2644 = vld [vmem:[%s3 + $0x430] sm:$0xf]
        %v2645 = vld [vmem:[%s3 + $0x434] sm:$0xf]
        %v2646 = vld [vmem:[%s3 + $0x438] sm:$0xf]
        %v2647 = vld [vmem:[%s3 + $0x43c] sm:$0xf]
        %v2648 = vld [vmem:[%s3 + $0x440] sm:$0xf]
        %v2649 = vld [vmem:[%s3 + $0x444] sm:$0xf]
        %v2650 = vld [vmem:[%s3 + $0x448] sm:$0xf]
        %v2651 = vld [vmem:[%s3 + $0x44c] sm:$0xf]
        %v2652 = vld [vmem:[%s3 + $0x450] sm:$0xf]
        %v2653 = vld [vmem:[%s3 + $0x454] sm:$0xf]
        %v2654 = vld [vmem:[%s3 + $0x458] sm:$0xf]
        %v2655 = vld [vmem:[%s3 + $0x45c] sm:$0xf]
        %v2656 = vld [vmem:[%s3 + $0x460] sm:$0xf]
        %v2657 = vld [vmem:[%s3 + $0x464] sm:$0xf]
        %v2658 = vld [vmem:[%s3 + $0x468] sm:$0xf]
        %v2659 = vld [vmem:[%s3 + $0x46c] sm:$0xf]
        %v2660 = vld [vmem:[%s3 + $0x470] sm:$0xf]
        %v2661 = vld [vmem:[%s3 + $0x474] sm:$0xf]
        %v2662 = vld [vmem:[%s3 + $0x478] sm:$0xf]
        %v2663 = vld [vmem:[%s3 + $0x47c] sm:$0xf]
        %v2664 = vld [vmem:[%s3 + $0x480] sm:$0xf]
        %v2665 = vld [vmem:[%s3 + $0x484] sm:$0xf]
        %v2666 = vld [vmem:[%s3 + $0x488] sm:$0xf]
        %v2667 = vld [vmem:[%s3 + $0x48c] sm:$0xf]
        %v2668 = vld [vmem:[%s3 + $0x490] sm:$0xf]
        %v2669 = vld [vmem:[%s3 + $0x494] sm:$0xf]
        %v2670 = vld [vmem:[%s3 + $0x498] sm:$0xf]
        %v2671 = vld [vmem:[%s3 + $0x49c] sm:$0xf]
        %v2672 = vld [vmem:[%s3 + $0x4a0] sm:$0xf]
        %v2673 = vld [vmem:[%s3 + $0x4a4] sm:$0xf]
        %v2674 = vld [vmem:[%s3 + $0x4a8] sm:$0xf]
        %v2675 = vld [vmem:[%s3 + $0x4ac] sm:$0xf]
        %v2676 = vld [vmem:[%s3 + $0x4b0] sm:$0xf]
        %v2677 = vld [vmem:[%s3 + $0x4b4] sm:$0xf]
        %v2678 = vld [vmem:[%s3 + $0x4b8] sm:$0xf]
        %v2679 = vld [vmem:[%s3 + $0x4bc] sm:$0xf]
        %v2680 = vld [vmem:[%s3 + $0x4c0] sm:$0xf]
        %v2681 = vld [vmem:[%s3 + $0x4c4] sm:$0xf]
        %v2682 = vld [vmem:[%s3 + $0x4c8] sm:$0xf]
        %v2683 = vld [vmem:[%s3 + $0x4cc] sm:$0xf]
        %v2684 = vld [vmem:[%s3 + $0x4d0] sm:$0xf]
        %v2685 = vld [vmem:[%s3 + $0x4d4] sm:$0xf]
        %v2686 = vld [vmem:[%s3 + $0x4d8] sm:$0xf]
        %v2687 = vld [vmem:[%s3 + $0x4dc] sm:$0xf]
        %v2688 = vld [vmem:[%s3 + $0x4e0] sm:$0xf]
        %v2689 = vld [vmem:[%s3 + $0x4e4] sm:$0xf]
        %v2690 = vld [vmem:[%s3 + $0x4e8] sm:$0xf]
        %v2691 = vld [vmem:[%s3 + $0x4ec] sm:$0xf]
        %v2692 = vld [vmem:[%s3 + $0x4f0] sm:$0xf]
        %v2693 = vld [vmem:[%s3 + $0x4f4] sm:$0xf]
        %v2694 = vld [vmem:[%s3 + $0x4f8] sm:$0xf]
        %v2695 = vld [vmem:[%s3 + $0x4fc] sm:$0xf]
        %v2696 = vld [vmem:[%s3 + $0x500] sm:$0xf]
        %v2697 = vld [vmem:[%s3 + $0x504] sm:$0xf]
        %v2698 = vld [vmem:[%s3 + $0x508] sm:$0xf]
        %v2699 = vld [vmem:[%s3 + $0x50c] sm:$0xf]
        %v2700 = vld [vmem:[%s3 + $0x510] sm:$0xf]
        %v2701 = vld [vmem:[%s3 + $0x514] sm:$0xf]
        %v2702 = vld [vmem:[%s3 + $0x518] sm:$0xf]
        %v2703 = vld [vmem:[%s3 + $0x51c] sm:$0xf]
        %v2704 = vld [vmem:[%s3 + $0x520] sm:$0xf]
        %v2705 = vld [vmem:[%s3 + $0x524] sm:$0xf]
        %v2706 = vld [vmem:[%s3 + $0x528] sm:$0xf]
        %v2707 = vld [vmem:[%s3 + $0x52c] sm:$0xf]
        %v2708 = vld [vmem:[%s3 + $0x530] sm:$0xf]
        %v2709 = vld [vmem:[%s3 + $0x534] sm:$0xf]
        %v2710 = vld [vmem:[%s3 + $0x538] sm:$0xf]
        %v2711 = vld [vmem:[%s3 + $0x53c] sm:$0xf]
        %v2712 = vld [vmem:[%s3 + $0x540] sm:$0xf]
        %v2713 = vld [vmem:[%s3 + $0x544] sm:$0xf]
        %v2714 = vld [vmem:[%s3 + $0x548] sm:$0xf]
        %v2715 = vld [vmem:[%s3 + $0x54c] sm:$0xf]
        %v2716 = vld [vmem:[%s3 + $0x550] sm:$0xf]
        %v2717 = vld [vmem:[%s3 + $0x554] sm:$0xf]
        %v2718 = vld [vmem:[%s3 + $0x558] sm:$0xf]
        %v2719 = vld [vmem:[%s3 + $0x55c] sm:$0xf]
        %v2720 = vld [vmem:[%s3 + $0x560] sm:$0xf]
        %v2721 = vld [vmem:[%s3 + $0x564] sm:$0xf]
        %v2722 = vld [vmem:[%s3 + $0x568] sm:$0xf]
        %v2723 = vld [vmem:[%s3 + $0x56c] sm:$0xf]
        %v2724 = vld [vmem:[%s3 + $0x570] sm:$0xf]
        %v2725 = vld [vmem:[%s3 + $0x574] sm:$0xf]
        %v2726 = vld [vmem:[%s3 + $0x578] sm:$0xf]
        %v2727 = vld [vmem:[%s3 + $0x57c] sm:$0xf]
        %v2728 = vld [vmem:[%s3 + $0x580] sm:$0xf]
        %v2729 = vld [vmem:[%s3 + $0x584] sm:$0xf]
        %v2730 = vld [vmem:[%s3 + $0x588] sm:$0xf]
        %v2731 = vld [vmem:[%s3 + $0x58c] sm:$0xf]
        %v2732 = vld [vmem:[%s3 + $0x590] sm:$0xf]
        %v2733 = vld [vmem:[%s3 + $0x594] sm:$0xf]
        %v2734 = vld [vmem:[%s3 + $0x598] sm:$0xf]
        %v2735 = vld [vmem:[%s3 + $0x59c] sm:$0xf]
        %v2736 = vld [vmem:[%s3 + $0x5a0] sm:$0xf]
        %v2737 = vld [vmem:[%s3 + $0x5a4] sm:$0xf]
        %v2738 = vld [vmem:[%s3 + $0x5a8] sm:$0xf]
        %v2739 = vld [vmem:[%s3 + $0x5ac] sm:$0xf]
        %v2740 = vld [vmem:[%s3 + $0x5b0] sm:$0xf]
        %v2741 = vld [vmem:[%s3 + $0x5b4] sm:$0xf]
        %v2742 = vld [vmem:[%s3 + $0x5b8] sm:$0xf]
        %v2743 = vld [vmem:[%s3 + $0x5bc] sm:$0xf]
        %v2744 = vld [vmem:[%s3 + $0x5c0] sm:$0xf]
        %v2745 = vld [vmem:[%s3 + $0x5c4] sm:$0xf]
        %v2746 = vld [vmem:[%s3 + $0x5c8] sm:$0xf]
        %v2747 = vld [vmem:[%s3 + $0x5cc] sm:$0xf]
        %v2748 = vld [vmem:[%s3 + $0x5d0] sm:$0xf]
        %v2749 = vld [vmem:[%s3 + $0x5d4] sm:$0xf]
        %v2750 = vld [vmem:[%s3 + $0x5d8] sm:$0xf]
        %v2751 = vld [vmem:[%s3 + $0x5dc] sm:$0xf]
        %v2752 = vld [vmem:[%s3 + $0x5e0] sm:$0xf]
        %v2753 = vld [vmem:[%s3 + $0x5e4] sm:$0xf]
        %v2754 = vld [vmem:[%s3 + $0x5e8] sm:$0xf]
        %v2755 = vld [vmem:[%s3 + $0x5ec] sm:$0xf]
        %v2756 = vld [vmem:[%s3 + $0x5f0] sm:$0xf]
        %v2757 = vld [vmem:[%s3 + $0x5f4] sm:$0xf]
        %v2758 = vld [vmem:[%s3 + $0x5f8] sm:$0xf]
        %v2759 = vld [vmem:[%s3 + $0x5fc] sm:$0xf]
        %v2760 = vld [vmem:[%s3 + $0x600] sm:$0xf]
        %v2761 = vld [vmem:[%s3 + $0x604] sm:$0xf]
        %v2762 = vld [vmem:[%s3 + $0x608] sm:$0xf]
        %v2763 = vld [vmem:[%s3 + $0x60c] sm:$0xf]
        %v2764 = vld [vmem:[%s3 + $0x610] sm:$0xf]
        %v2765 = vld [vmem:[%s3 + $0x614] sm:$0xf]
        %v2766 = vld [vmem:[%s3 + $0x618] sm:$0xf]
        %v2767 = vld [vmem:[%s3 + $0x61c] sm:$0xf]
        %v2768 = vld [vmem:[%s4] sm:$0x1]
        %v3161 = vunpack.c.l.b16 %v2376
        %v3162 = vunpack.c.l.b16 %v2377
        %v3163 = vunpack.c.l.b16 %v2378
        %v3164 = vunpack.c.l.b16 %v2379
        %v3165 = vunpack.c.l.b16 %v2380
        %v3166 = vunpack.c.l.b16 %v2381
        %v3167 = vunpack.c.l.b16 %v2382
        %v3168 = vunpack.c.l.b16 %v2383
        %v3169 = vunpack.c.l.b16 %v2384
        %v3170 = vunpack.c.l.b16 %v2385
        %v3171 = vunpack.c.l.b16 %v2386
        %v3172 = vunpack.c.l.b16 %v2387
        %v3173 = vunpack.c.l.b16 %v2388
        %v3174 = vunpack.c.l.b16 %v2389
        %v3175 = vunpack.c.l.b16 %v2390
        %v3176 = vunpack.c.l.b16 %v2391
        %v3177 = vunpack.c.l.b16 %v2392
        %v3178 = vunpack.c.l.b16 %v2393
        %v3179 = vunpack.c.l.b16 %v2394
        %v3180 = vunpack.c.l.b16 %v2395
        %v3181 = vunpack.c.l.b16 %v2396
        %v3182 = vunpack.c.l.b16 %v2397
        %v3183 = vunpack.c.l.b16 %v2398
        %v3184 = vunpack.c.l.b16 %v2399
        %v3185 = vunpack.c.l.b16 %v2400
        %v3186 = vunpack.c.l.b16 %v2401
        %v3187 = vunpack.c.l.b16 %v2402
        %v3188 = vunpack.c.l.b16 %v2403
        %v3189 = vunpack.c.l.b16 %v2404
        %v3190 = vunpack.c.l.b16 %v2405
        %v3191 = vunpack.c.l.b16 %v2406
        %v3192 = vunpack.c.l.b16 %v2407
        %v3193 = vunpack.c.l.b16 %v2408
        %v3194 = vunpack.c.l.b16 %v2409
        %v3195 = vunpack.c.l.b16 %v2410
        %v3196 = vunpack.c.l.b16 %v2411
        %v3197 = vunpack.c.l.b16 %v2412
        %v3198 = vunpack.c.l.b16 %v2413
        %v3199 = vunpack.c.l.b16 %v2414
        %v3200 = vunpack.c.l.b16 %v2415
        %v3201 = vunpack.c.l.b16 %v2416
        %v3202 = vunpack.c.l.b16 %v2417
        %v3203 = vunpack.c.l.b16 %v2418
        %v3204 = vunpack.c.l.b16 %v2419
        %v3205 = vunpack.c.l.b16 %v2420
        %v3206 = vunpack.c.l.b16 %v2421
        %v3207 = vunpack.c.l.b16 %v2422
        %v3208 = vunpack.c.l.b16 %v2423
        %v3209 = vunpack.c.l.b16 %v2424
        %v3210 = vunpack.c.l.b16 %v2425
        %v3211 = vunpack.c.l.b16 %v2426
        %v3212 = vunpack.c.l.b16 %v2427
        %v3213 = vunpack.c.l.b16 %v2428
        %v3214 = vunpack.c.l.b16 %v2429
        %v3215 = vunpack.c.l.b16 %v2430
        %v3216 = vunpack.c.l.b16 %v2431
        %v3217 = vunpack.c.l.b16 %v2432
        %v3218 = vunpack.c.l.b16 %v2433
        %v3219 = vunpack.c.l.b16 %v2434
        %v3220 = vunpack.c.l.b16 %v2435
        %v3221 = vunpack.c.l.b16 %v2436
        %v3222 = vunpack.c.l.b16 %v2437
        %v3223 = vunpack.c.l.b16 %v2438
        %v3224 = vunpack.c.l.b16 %v2439
        %v3225 = vunpack.c.l.b16 %v2440
        %v3226 = vunpack.c.l.b16 %v2441
        %v3227 = vunpack.c.l.b16 %v2442
        %v3228 = vunpack.c.l.b16 %v2443
        %v3229 = vunpack.c.l.b16 %v2444
        %v3230 = vunpack.c.l.b16 %v2445
        %v3231 = vunpack.c.l.b16 %v2446
        %v3232 = vunpack.c.l.b16 %v2447
        %v3233 = vunpack.c.l.b16 %v2448
        %v3234 = vunpack.c.l.b16 %v2449
        %v3235 = vunpack.c.l.b16 %v2450
        %v3236 = vunpack.c.l.b16 %v2451
        %v3237 = vunpack.c.l.b16 %v2452
        %v3238 = vunpack.c.l.b16 %v2453
        %v3239 = vunpack.c.l.b16 %v2454
        %v3240 = vunpack.c.l.b16 %v2455
        %v3241 = vunpack.c.l.b16 %v2456
        %v3242 = vunpack.c.l.b16 %v2457
        %v3243 = vunpack.c.l.b16 %v2458
        %v3244 = vunpack.c.l.b16 %v2459
        %v3245 = vunpack.c.l.b16 %v2460
        %v3246 = vunpack.c.l.b16 %v2461
        %v3247 = vunpack.c.l.b16 %v2462
        %v3248 = vunpack.c.l.b16 %v2463
        %v3249 = vunpack.c.l.b16 %v2464
        %v3250 = vunpack.c.l.b16 %v2465
        %v3251 = vunpack.c.l.b16 %v2466
        %v3252 = vunpack.c.l.b16 %v2467
        %v3253 = vunpack.c.l.b16 %v2468
        %v3254 = vunpack.c.l.b16 %v2469
        %v3255 = vunpack.c.l.b16 %v2470
        %v3256 = vunpack.c.l.b16 %v2471
        %v3257 = vunpack.c.l.b16 %v2472
        %v3258 = vunpack.c.l.b16 %v2473
        %v3259 = vunpack.c.l.b16 %v2474
        %v3260 = vunpack.c.l.b16 %v2475
        %v3261 = vunpack.c.l.b16 %v2476
        %v3262 = vunpack.c.l.b16 %v2477
        %v3263 = vunpack.c.l.b16 %v2478
        %v3264 = vunpack.c.l.b16 %v2479
        %v3265 = vunpack.c.l.b16 %v2480
        %v3266 = vunpack.c.l.b16 %v2481
        %v3267 = vunpack.c.l.b16 %v2482
        %v3268 = vunpack.c.l.b16 %v2483
        %v3269 = vunpack.c.l.b16 %v2484
        %v3270 = vunpack.c.l.b16 %v2485
        %v3271 = vunpack.c.l.b16 %v2486
        %v3272 = vunpack.c.l.b16 %v2487
        %v3273 = vunpack.c.l.b16 %v2488
        %v3274 = vunpack.c.l.b16 %v2489
        %v3275 = vunpack.c.l.b16 %v2490
        %v3276 = vunpack.c.l.b16 %v2491
        %v3277 = vunpack.c.l.b16 %v2492
        %v3278 = vunpack.c.l.b16 %v2493
        %v3279 = vunpack.c.l.b16 %v2494
        %v3280 = vunpack.c.l.b16 %v2495
        %v3281 = vunpack.c.l.b16 %v2496
        %v3282 = vunpack.c.l.b16 %v2497
        %v3283 = vunpack.c.l.b16 %v2498
        %v3284 = vunpack.c.l.b16 %v2499
        %v3285 = vunpack.c.l.b16 %v2500
        %v3286 = vunpack.c.l.b16 %v2501
        %v3287 = vunpack.c.l.b16 %v2502
        %v3288 = vunpack.c.l.b16 %v2503
        %v3289 = vunpack.c.l.b16 %v2504
        %v3290 = vunpack.c.l.b16 %v2505
        %v3291 = vunpack.c.l.b16 %v2506
        %v3292 = vunpack.c.l.b16 %v2507
        %v3293 = vunpack.c.l.b16 %v2508
        %v3294 = vunpack.c.l.b16 %v2509
        %v3295 = vunpack.c.l.b16 %v2510
        %v3296 = vunpack.c.l.b16 %v2511
        %v3297 = vunpack.c.l.b16 %v2512
        %v3298 = vunpack.c.l.b16 %v2513
        %v3299 = vunpack.c.l.b16 %v2514
        %v3300 = vunpack.c.l.b16 %v2515
        %v3301 = vunpack.c.l.b16 %v2516
        %v3302 = vunpack.c.l.b16 %v2517
        %v3303 = vunpack.c.l.b16 %v2518
        %v3304 = vunpack.c.l.b16 %v2519
        %v3305 = vunpack.c.l.b16 %v2520
        %v3306 = vunpack.c.l.b16 %v2521
        %v3307 = vunpack.c.l.b16 %v2522
        %v3308 = vunpack.c.l.b16 %v2523
        %v3309 = vunpack.c.l.b16 %v2524
        %v3310 = vunpack.c.l.b16 %v2525
        %v3311 = vunpack.c.l.b16 %v2526
        %v3312 = vunpack.c.l.b16 %v2527
        %v3313 = vunpack.c.l.b16 %v2528
        %v3314 = vunpack.c.l.b16 %v2529
        %v3315 = vunpack.c.l.b16 %v2530
        %v3316 = vunpack.c.l.b16 %v2531
        %v3317 = vunpack.c.l.b16 %v2532
        %v3318 = vunpack.c.l.b16 %v2533
        %v3319 = vunpack.c.l.b16 %v2534
        %v3320 = vunpack.c.l.b16 %v2535
        %v3321 = vunpack.c.l.b16 %v2536
        %v3322 = vunpack.c.l.b16 %v2537
        %v3323 = vunpack.c.l.b16 %v2538
        %v3324 = vunpack.c.l.b16 %v2539
        %v3325 = vunpack.c.l.b16 %v2540
        %v3326 = vunpack.c.l.b16 %v2541
        %v3327 = vunpack.c.l.b16 %v2542
        %v3328 = vunpack.c.l.b16 %v2543
        %v3329 = vunpack.c.l.b16 %v2544
        %v3330 = vunpack.c.l.b16 %v2545
        %v3331 = vunpack.c.l.b16 %v2546
        %v3332 = vunpack.c.l.b16 %v2547
        %v3333 = vunpack.c.l.b16 %v2548
        %v3334 = vunpack.c.l.b16 %v2549
        %v3335 = vunpack.c.l.b16 %v2550
        %v3336 = vunpack.c.l.b16 %v2551
        %v3337 = vunpack.c.l.b16 %v2552
        %v3338 = vunpack.c.l.b16 %v2553
        %v3339 = vunpack.c.l.b16 %v2554
        %v3340 = vunpack.c.l.b16 %v2555
        %v3341 = vunpack.c.l.b16 %v2556
        %v3342 = vunpack.c.l.b16 %v2557
        %v3343 = vunpack.c.l.b16 %v2558
        %v3344 = vunpack.c.l.b16 %v2559
        %v3345 = vunpack.c.l.b16 %v2560
        %v3346 = vunpack.c.l.b16 %v2561
        %v3347 = vunpack.c.l.b16 %v2562
        %v3348 = vunpack.c.l.b16 %v2563
        %v3349 = vunpack.c.l.b16 %v2564
        %v3350 = vunpack.c.l.b16 %v2565
        %v3351 = vunpack.c.l.b16 %v2566
        %v3352 = vunpack.c.l.b16 %v2567
        %v3353 = vunpack.c.l.b16 %v2568
        %v3354 = vunpack.c.l.b16 %v2569
        %v3355 = vunpack.c.l.b16 %v2570
        %v3356 = vunpack.c.l.b16 %v2571
        %v3357 = vunpack.c.l.b16 %v2572
        %v3358 = vunpack.c.l.b16 %v2573
        %v3359 = vunpack.c.l.b16 %v2574
        %v3360 = vunpack.c.l.b16 %v2575
        %v3361 = vunpack.c.l.b16 %v2576
        %v3362 = vunpack.c.l.b16 %v2577
        %v3363 = vunpack.c.l.b16 %v2578
        %v3364 = vunpack.c.l.b16 %v2579
        %v3365 = vunpack.c.l.b16 %v2580
        %v3366 = vunpack.c.l.b16 %v2581
        %v3367 = vunpack.c.l.b16 %v2582
        %v3368 = vunpack.c.l.b16 %v2583
        %v3369 = vunpack.c.l.b16 %v2584
        %v3370 = vunpack.c.l.b16 %v2585
        %v3371 = vunpack.c.l.b16 %v2586
        %v3372 = vunpack.c.l.b16 %v2587
        %v3373 = vunpack.c.l.b16 %v2588
        %v3374 = vunpack.c.l.b16 %v2589
        %v3375 = vunpack.c.l.b16 %v2590
        %v3376 = vunpack.c.l.b16 %v2591
        %v3377 = vunpack.c.l.b16 %v2592
        %v3378 = vunpack.c.l.b16 %v2593
        %v3379 = vunpack.c.l.b16 %v2594
        %v3380 = vunpack.c.l.b16 %v2595
        %v3381 = vunpack.c.l.b16 %v2596
        %v3382 = vunpack.c.l.b16 %v2597
        %v3383 = vunpack.c.l.b16 %v2598
        %v3384 = vunpack.c.l.b16 %v2599
        %v3385 = vunpack.c.l.b16 %v2600
        %v3386 = vunpack.c.l.b16 %v2601
        %v3387 = vunpack.c.l.b16 %v2602
        %v3388 = vunpack.c.l.b16 %v2603
        %v3389 = vunpack.c.l.b16 %v2604
        %v3390 = vunpack.c.l.b16 %v2605
        %v3391 = vunpack.c.l.b16 %v2606
        %v3392 = vunpack.c.l.b16 %v2607
        %v3393 = vunpack.c.l.b16 %v2608
        %v3394 = vunpack.c.l.b16 %v2609
        %v3395 = vunpack.c.l.b16 %v2610
        %v3396 = vunpack.c.l.b16 %v2611
        %v3397 = vunpack.c.l.b16 %v2612
        %v3398 = vunpack.c.l.b16 %v2613
        %v3399 = vunpack.c.l.b16 %v2614
        %v3400 = vunpack.c.l.b16 %v2615
        %v3401 = vunpack.c.l.b16 %v2616
        %v3402 = vunpack.c.l.b16 %v2617
        %v3403 = vunpack.c.l.b16 %v2618
        %v3404 = vunpack.c.l.b16 %v2619
        %v3405 = vunpack.c.l.b16 %v2620
        %v3406 = vunpack.c.l.b16 %v2621
        %v3407 = vunpack.c.l.b16 %v2622
        %v3408 = vunpack.c.l.b16 %v2623
        %v3409 = vunpack.c.l.b16 %v2624
        %v3410 = vunpack.c.l.b16 %v2625
        %v3411 = vunpack.c.l.b16 %v2626
        %v3412 = vunpack.c.l.b16 %v2627
        %v3413 = vunpack.c.l.b16 %v2628
        %v3414 = vunpack.c.l.b16 %v2629
        %v3415 = vunpack.c.l.b16 %v2630
        %v3416 = vunpack.c.l.b16 %v2631
        %v3417 = vunpack.c.l.b16 %v2632
        %v3418 = vunpack.c.l.b16 %v2633
        %v3419 = vunpack.c.l.b16 %v2634
        %v3420 = vunpack.c.l.b16 %v2635
        %v3421 = vunpack.c.l.b16 %v2636
        %v3422 = vunpack.c.l.b16 %v2637
        %v3423 = vunpack.c.l.b16 %v2638
        %v3424 = vunpack.c.l.b16 %v2639
        %v3425 = vunpack.c.l.b16 %v2640
        %v3426 = vunpack.c.l.b16 %v2641
        %v3427 = vunpack.c.l.b16 %v2642
        %v3428 = vunpack.c.l.b16 %v2643
        %v3429 = vunpack.c.l.b16 %v2644
        %v3430 = vunpack.c.l.b16 %v2645
        %v3431 = vunpack.c.l.b16 %v2646
        %v3432 = vunpack.c.l.b16 %v2647
        %v3433 = vunpack.c.l.b16 %v2648
        %v3434 = vunpack.c.l.b16 %v2649
        %v3435 = vunpack.c.l.b16 %v2650
        %v3436 = vunpack.c.l.b16 %v2651
        %v3437 = vunpack.c.l.b16 %v2652
        %v3438 = vunpack.c.l.b16 %v2653
        %v3439 = vunpack.c.l.b16 %v2654
        %v3440 = vunpack.c.l.b16 %v2655
        %v3441 = vunpack.c.l.b16 %v2656
        %v3442 = vunpack.c.l.b16 %v2657
        %v3443 = vunpack.c.l.b16 %v2658
        %v3444 = vunpack.c.l.b16 %v2659
        %v3445 = vunpack.c.l.b16 %v2660
        %v3446 = vunpack.c.l.b16 %v2661
        %v3447 = vunpack.c.l.b16 %v2662
        %v3448 = vunpack.c.l.b16 %v2663
        %v3449 = vunpack.c.l.b16 %v2664
        %v3450 = vunpack.c.l.b16 %v2665
        %v3451 = vunpack.c.l.b16 %v2666
        %v3452 = vunpack.c.l.b16 %v2667
        %v3453 = vunpack.c.l.b16 %v2668
        %v3454 = vunpack.c.l.b16 %v2669
        %v3455 = vunpack.c.l.b16 %v2670
        %v3456 = vunpack.c.l.b16 %v2671
        %v3457 = vunpack.c.l.b16 %v2672
        %v3458 = vunpack.c.l.b16 %v2673
        %v3459 = vunpack.c.l.b16 %v2674
        %v3460 = vunpack.c.l.b16 %v2675
        %v3461 = vunpack.c.l.b16 %v2676
        %v3462 = vunpack.c.l.b16 %v2677
        %v3463 = vunpack.c.l.b16 %v2678
        %v3464 = vunpack.c.l.b16 %v2679
        %v3465 = vunpack.c.l.b16 %v2680
        %v3466 = vunpack.c.l.b16 %v2681
        %v3467 = vunpack.c.l.b16 %v2682
        %v3468 = vunpack.c.l.b16 %v2683
        %v3469 = vunpack.c.l.b16 %v2684
        %v3470 = vunpack.c.l.b16 %v2685
        %v3471 = vunpack.c.l.b16 %v2686
        %v3472 = vunpack.c.l.b16 %v2687
        %v3473 = vunpack.c.l.b16 %v2688
        %v3474 = vunpack.c.l.b16 %v2689
        %v3475 = vunpack.c.l.b16 %v2690
        %v3476 = vunpack.c.l.b16 %v2691
        %v3477 = vunpack.c.l.b16 %v2692
        %v3478 = vunpack.c.l.b16 %v2693
        %v3479 = vunpack.c.l.b16 %v2694
        %v3480 = vunpack.c.l.b16 %v2695
        %v3481 = vunpack.c.l.b16 %v2696
        %v3482 = vunpack.c.l.b16 %v2697
        %v3483 = vunpack.c.l.b16 %v2698
        %v3484 = vunpack.c.l.b16 %v2699
        %v3485 = vunpack.c.l.b16 %v2700
        %v3486 = vunpack.c.l.b16 %v2701
        %v3487 = vunpack.c.l.b16 %v2702
        %v3488 = vunpack.c.l.b16 %v2703
        %v3489 = vunpack.c.l.b16 %v2704
        %v3490 = vunpack.c.l.b16 %v2705
        %v3491 = vunpack.c.l.b16 %v2706
        %v3492 = vunpack.c.l.b16 %v2707
        %v3493 = vunpack.c.l.b16 %v2708
        %v3494 = vunpack.c.l.b16 %v2709
        %v3495 = vunpack.c.l.b16 %v2710
        %v3496 = vunpack.c.l.b16 %v2711
        %v3497 = vunpack.c.l.b16 %v2712
        %v3498 = vunpack.c.l.b16 %v2713
        %v3499 = vunpack.c.l.b16 %v2714
        %v3500 = vunpack.c.l.b16 %v2715
        %v3501 = vunpack.c.l.b16 %v2716
        %v3502 = vunpack.c.l.b16 %v2717
        %v3503 = vunpack.c.l.b16 %v2718
        %v3504 = vunpack.c.l.b16 %v2719
        %v3505 = vunpack.c.l.b16 %v2720
        %v3506 = vunpack.c.l.b16 %v2721
        %v3507 = vunpack.c.l.b16 %v2722
        %v3508 = vunpack.c.l.b16 %v2723
        %v3509 = vunpack.c.l.b16 %v2724
        %v3510 = vunpack.c.l.b16 %v2725
        %v3511 = vunpack.c.l.b16 %v2726
        %v3512 = vunpack.c.l.b16 %v2727
        %v3513 = vunpack.c.l.b16 %v2728
        %v3514 = vunpack.c.l.b16 %v2729
        %v3515 = vunpack.c.l.b16 %v2730
        %v3516 = vunpack.c.l.b16 %v2731
        %v3517 = vunpack.c.l.b16 %v2732
        %v3518 = vunpack.c.l.b16 %v2733
        %v3519 = vunpack.c.l.b16 %v2734
        %v3520 = vunpack.c.l.b16 %v2735
        %v3521 = vunpack.c.l.b16 %v2736
        %v3522 = vunpack.c.l.b16 %v2737
        %v3523 = vunpack.c.l.b16 %v2738
        %v3524 = vunpack.c.l.b16 %v2739
        %v3525 = vunpack.c.l.b16 %v2740
        %v3526 = vunpack.c.l.b16 %v2741
        %v3527 = vunpack.c.l.b16 %v2742
        %v3528 = vunpack.c.l.b16 %v2743
        %v3529 = vunpack.c.l.b16 %v2744
        %v3530 = vunpack.c.l.b16 %v2745
        %v3531 = vunpack.c.l.b16 %v2746
        %v3532 = vunpack.c.l.b16 %v2747
        %v3533 = vunpack.c.l.b16 %v2748
        %v3534 = vunpack.c.l.b16 %v2749
        %v3535 = vunpack.c.l.b16 %v2750
        %v3536 = vunpack.c.l.b16 %v2751
        %v3537 = vunpack.c.l.b16 %v2752
        %v3538 = vunpack.c.l.b16 %v2753
        %v3539 = vunpack.c.l.b16 %v2754
        %v3540 = vunpack.c.l.b16 %v2755
        %v3541 = vunpack.c.l.b16 %v2756
        %v3542 = vunpack.c.l.b16 %v2757
        %v3543 = vunpack.c.l.b16 %v2758
        %v3544 = vunpack.c.l.b16 %v2759
        %v3545 = vunpack.c.l.b16 %v2760
        %v3546 = vunpack.c.l.b16 %v2761
        %v3547 = vunpack.c.l.b16 %v2762
        %v3548 = vunpack.c.l.b16 %v2763
        %v3549 = vunpack.c.l.b16 %v2764
        %v3550 = vunpack.c.l.b16 %v2765
        %v3551 = vunpack.c.l.b16 %v2766
        %v3552 = vunpack.c.l.b16 %v2767
        %v3553 = vpack.c.b16 %v3162, %v3161
        %v3554 = vpack.c.b16 %v3164, %v3163
        %v3555 = vpack.c.b16 %v3166, %v3165
        %v3556 = vpack.c.b16 %v3168, %v3167
        %v3557 = vpack.c.b16 %v3170, %v3169
        %v3558 = vpack.c.b16 %v3172, %v3171
        %v3559 = vpack.c.b16 %v3174, %v3173
        %v3560 = vpack.c.b16 %v3176, %v3175
        %v3561 = vpack.c.b16 %v3178, %v3177
        %v3562 = vpack.c.b16 %v3180, %v3179
        %v3563 = vpack.c.b16 %v3182, %v3181
        %v3564 = vpack.c.b16 %v3184, %v3183
        %v3565 = vpack.c.b16 %v3186, %v3185
        %v3566 = vpack.c.b16 %v3188, %v3187
        %v3567 = vpack.c.b16 %v3190, %v3189
        %v3568 = vpack.c.b16 %v3192, %v3191
        %v3569 = vpack.c.b16 %v3194, %v3193
        %v3570 = vpack.c.b16 %v3196, %v3195
        %v3571 = vpack.c.b16 %v3198, %v3197
        %v3572 = vpack.c.b16 %v3200, %v3199
        %v3573 = vpack.c.b16 %v3202, %v3201
        %v3574 = vpack.c.b16 %v3204, %v3203
        %v3575 = vpack.c.b16 %v3206, %v3205
        %v3576 = vpack.c.b16 %v3208, %v3207
        %v3577 = vpack.c.b16 %v3210, %v3209
        %v3578 = vpack.c.b16 %v3212, %v3211
        %v3579 = vpack.c.b16 %v3214, %v3213
        %v3580 = vpack.c.b16 %v3216, %v3215
        %v3581 = vpack.c.b16 %v3218, %v3217
        %v3582 = vpack.c.b16 %v3220, %v3219
        %v3583 = vpack.c.b16 %v3222, %v3221
        %v3584 = vpack.c.b16 %v3224, %v3223
        %v3585 = vpack.c.b16 %v3226, %v3225
        %v3586 = vpack.c.b16 %v3228, %v3227
        %v3587 = vpack.c.b16 %v3230, %v3229
        %v3588 = vpack.c.b16 %v3232, %v3231
        %v3589 = vpack.c.b16 %v3234, %v3233
        %v3590 = vpack.c.b16 %v3236, %v3235
        %v3591 = vpack.c.b16 %v3238, %v3237
        %v3592 = vpack.c.b16 %v3240, %v3239
        %v3593 = vpack.c.b16 %v3242, %v3241
        %v3594 = vpack.c.b16 %v3244, %v3243
        %v3595 = vpack.c.b16 %v3246, %v3245
        %v3596 = vpack.c.b16 %v3248, %v3247
        %v3597 = vpack.c.b16 %v3250, %v3249
        %v3598 = vpack.c.b16 %v3252, %v3251
        %v3599 = vpack.c.b16 %v3254, %v3253
        %v3600 = vpack.c.b16 %v3256, %v3255
        %v3601 = vpack.c.b16 %v3258, %v3257
        %v3602 = vpack.c.b16 %v3260, %v3259
        %v3603 = vpack.c.b16 %v3262, %v3261
        %v3604 = vpack.c.b16 %v3264, %v3263
        %v3605 = vpack.c.b16 %v3266, %v3265
        %v3606 = vpack.c.b16 %v3268, %v3267
        %v3607 = vpack.c.b16 %v3270, %v3269
        %v3608 = vpack.c.b16 %v3272, %v3271
        %v3609 = vpack.c.b16 %v3274, %v3273
        %v3610 = vpack.c.b16 %v3276, %v3275
        %v3611 = vpack.c.b16 %v3278, %v3277
        %v3612 = vpack.c.b16 %v3280, %v3279
        %v3613 = vpack.c.b16 %v3282, %v3281
        %v3614 = vpack.c.b16 %v3284, %v3283
        %v3615 = vpack.c.b16 %v3286, %v3285
        %v3616 = vpack.c.b16 %v3288, %v3287
        %v3617 = vpack.c.b16 %v3290, %v3289
        %v3618 = vpack.c.b16 %v3292, %v3291
        %v3619 = vpack.c.b16 %v3294, %v3293
        %v3620 = vpack.c.b16 %v3296, %v3295
        %v3621 = vpack.c.b16 %v3298, %v3297
        %v3622 = vpack.c.b16 %v3300, %v3299
        %v3623 = vpack.c.b16 %v3302, %v3301
        %v3624 = vpack.c.b16 %v3304, %v3303
        %v3625 = vpack.c.b16 %v3306, %v3305
        %v3626 = vpack.c.b16 %v3308, %v3307
        %v3627 = vpack.c.b16 %v3310, %v3309
        %v3628 = vpack.c.b16 %v3312, %v3311
        %v3629 = vpack.c.b16 %v3314, %v3313
        %v3630 = vpack.c.b16 %v3316, %v3315
        %v3631 = vpack.c.b16 %v3318, %v3317
        %v3632 = vpack.c.b16 %v3320, %v3319
        %v3633 = vpack.c.b16 %v3322, %v3321
        %v3634 = vpack.c.b16 %v3324, %v3323
        %v3635 = vpack.c.b16 %v3326, %v3325
        %v3636 = vpack.c.b16 %v3328, %v3327
        %v3637 = vpack.c.b16 %v3330, %v3329
        %v3638 = vpack.c.b16 %v3332, %v3331
        %v3639 = vpack.c.b16 %v3334, %v3333
        %v3640 = vpack.c.b16 %v3336, %v3335
        %v3641 = vpack.c.b16 %v3338, %v3337
        %v3642 = vpack.c.b16 %v3340, %v3339
        %v3643 = vpack.c.b16 %v3342, %v3341
        %v3644 = vpack.c.b16 %v3344, %v3343
        %v3645 = vpack.c.b16 %v3346, %v3345
        %v3646 = vpack.c.b16 %v3348, %v3347
        %v3647 = vpack.c.b16 %v3350, %v3349
        %v3648 = vpack.c.b16 %v3352, %v3351
        %v3649 = vpack.c.b16 %v3354, %v3353
        %v3650 = vpack.c.b16 %v3356, %v3355
        %v3651 = vpack.c.b16 %v3358, %v3357
        %v3652 = vpack.c.b16 %v3360, %v3359
        %v3653 = vpack.c.b16 %v3362, %v3361
        %v3654 = vpack.c.b16 %v3364, %v3363
        %v3655 = vpack.c.b16 %v3366, %v3365
        %v3656 = vpack.c.b16 %v3368, %v3367
        %v3657 = vpack.c.b16 %v3370, %v3369
        %v3658 = vpack.c.b16 %v3372, %v3371
        %v3659 = vpack.c.b16 %v3374, %v3373
        %v3660 = vpack.c.b16 %v3376, %v3375
        %v3661 = vpack.c.b16 %v3378, %v3377
        %v3662 = vpack.c.b16 %v3380, %v3379
        %v3663 = vpack.c.b16 %v3382, %v3381
        %v3664 = vpack.c.b16 %v3384, %v3383
        %v3665 = vpack.c.b16 %v3386, %v3385
        %v3666 = vpack.c.b16 %v3388, %v3387
        %v3667 = vpack.c.b16 %v3390, %v3389
        %v3668 = vpack.c.b16 %v3392, %v3391
        %v3669 = vpack.c.b16 %v3394, %v3393
        %v3670 = vpack.c.b16 %v3396, %v3395
        %v3671 = vpack.c.b16 %v3398, %v3397
        %v3672 = vpack.c.b16 %v3400, %v3399
        %v3673 = vpack.c.b16 %v3402, %v3401
        %v3674 = vpack.c.b16 %v3404, %v3403
        %v3675 = vpack.c.b16 %v3406, %v3405
        %v3676 = vpack.c.b16 %v3408, %v3407
        %v3677 = vpack.c.b16 %v3410, %v3409
        %v3678 = vpack.c.b16 %v3412, %v3411
        %v3679 = vpack.c.b16 %v3414, %v3413
        %v3680 = vpack.c.b16 %v3416, %v3415
        %v3681 = vpack.c.b16 %v3418, %v3417
        %v3682 = vpack.c.b16 %v3420, %v3419
        %v3683 = vpack.c.b16 %v3422, %v3421
        %v3684 = vpack.c.b16 %v3424, %v3423
        %v3685 = vpack.c.b16 %v3426, %v3425
        %v3686 = vpack.c.b16 %v3428, %v3427
        %v3687 = vpack.c.b16 %v3430, %v3429
        %v3688 = vpack.c.b16 %v3432, %v3431
        %v3689 = vpack.c.b16 %v3434, %v3433
        %v3690 = vpack.c.b16 %v3436, %v3435
        %v3691 = vpack.c.b16 %v3438, %v3437
        %v3692 = vpack.c.b16 %v3440, %v3439
        %v3693 = vpack.c.b16 %v3442, %v3441
        %v3694 = vpack.c.b16 %v3444, %v3443
        %v3695 = vpack.c.b16 %v3446, %v3445
        %v3696 = vpack.c.b16 %v3448, %v3447
        %v3697 = vpack.c.b16 %v3450, %v3449
        %v3698 = vpack.c.b16 %v3452, %v3451
        %v3699 = vpack.c.b16 %v3454, %v3453
        %v3700 = vpack.c.b16 %v3456, %v3455
        %v3701 = vpack.c.b16 %v3458, %v3457
        %v3702 = vpack.c.b16 %v3460, %v3459
        %v3703 = vpack.c.b16 %v3462, %v3461
        %v3704 = vpack.c.b16 %v3464, %v3463
        %v3705 = vpack.c.b16 %v3466, %v3465
        %v3706 = vpack.c.b16 %v3468, %v3467
        %v3707 = vpack.c.b16 %v3470, %v3469
        %v3708 = vpack.c.b16 %v3472, %v3471
        %v3709 = vpack.c.b16 %v3474, %v3473
        %v3710 = vpack.c.b16 %v3476, %v3475
        %v3711 = vpack.c.b16 %v3478, %v3477
        %v3712 = vpack.c.b16 %v3480, %v3479
        %v3713 = vpack.c.b16 %v3482, %v3481
        %v3714 = vpack.c.b16 %v3484, %v3483
        %v3715 = vpack.c.b16 %v3486, %v3485
        %v3716 = vpack.c.b16 %v3488, %v3487
        %v3717 = vpack.c.b16 %v3490, %v3489
        %v3718 = vpack.c.b16 %v3492, %v3491
        %v3719 = vpack.c.b16 %v3494, %v3493
        %v3720 = vpack.c.b16 %v3496, %v3495
        %v3721 = vpack.c.b16 %v3498, %v3497
        %v3722 = vpack.c.b16 %v3500, %v3499
        %v3723 = vpack.c.b16 %v3502, %v3501
        %v3724 = vpack.c.b16 %v3504, %v3503
        %v3725 = vpack.c.b16 %v3506, %v3505
        %v3726 = vpack.c.b16 %v3508, %v3507
        %v3727 = vpack.c.b16 %v3510, %v3509
        %v3728 = vpack.c.b16 %v3512, %v3511
        %v3729 = vpack.c.b16 %v3514, %v3513
        %v3730 = vpack.c.b16 %v3516, %v3515
        %v3731 = vpack.c.b16 %v3518, %v3517
        %v3732 = vpack.c.b16 %v3520, %v3519
        %v3733 = vpack.c.b16 %v3522, %v3521
        %v3734 = vpack.c.b16 %v3524, %v3523
        %v3735 = vpack.c.b16 %v3526, %v3525
        %v3736 = vpack.c.b16 %v3528, %v3527
        %v3737 = vpack.c.b16 %v3530, %v3529
        %v3738 = vpack.c.b16 %v3532, %v3531
        %v3739 = vpack.c.b16 %v3534, %v3533
        %v3740 = vpack.c.b16 %v3536, %v3535
        %v3741 = vpack.c.b16 %v3538, %v3537
        %v3742 = vpack.c.b16 %v3540, %v3539
        %v3743 = vpack.c.b16 %v3542, %v3541
        %v3744 = vpack.c.b16 %v3544, %v3543
        %v3745 = vpack.c.b16 %v3546, %v3545
        %v3746 = vpack.c.b16 %v3548, %v3547
        %v3747 = vpack.c.b16 %v3550, %v3549
        %v3748 = vpack.c.b16 %v3552, %v3551
        %vm3945 = vcmask 523264
        %v3947 = vsel %vm3945, %v2375, 0
        %3949 = vmatprep.subr.bf16.mxu0 0
        %3950 = vmatpush1.bf16.msra.mxu0 %v3553
        %3951 = vmatprep.subr.bf16.mxu0 0
        %3952 = vmatpush1.bf16.msra.mxu0 %v3554
        %3953 = vmatprep.subr.bf16.mxu0 0
        %3954 = vmatpush1.bf16.msra.mxu0 %v3555
        %3955 = vmatprep.subr.bf16.mxu0 0
        %3956 = vmatpush1.bf16.msra.mxu0 %v3556
        %3957 = vmatprep.subr.bf16.mxu0 0
        %3958 = vmatpush1.bf16.msra.mxu0 %v3557
        %3959 = vmatprep.subr.bf16.mxu0 0
        %3960 = vmatpush1.bf16.msra.mxu0 %v3558
        %3961 = vmatprep.subr.bf16.mxu0 0
        %3962 = vmatpush1.bf16.msra.mxu0 %v3559
        %3963 = vmatprep.subr.bf16.mxu0 0
        %3964 = vmatpush1.bf16.msra.mxu0 %v3560
        %3965 = vmatprep.subr.bf16.mxu0 0
        %3966 = vmatpush1.bf16.msra.mxu0 %v3561
        %3967 = vmatprep.subr.bf16.mxu0 0
        %3968 = vmatpush1.bf16.msra.mxu0 %v3562
        %3969 = vmatprep.subr.bf16.mxu0 0
        %3970 = vmatpush1.bf16.msra.mxu0 %v3563
        %3971 = vmatprep.subr.bf16.mxu0 0
        %3972 = vmatpush1.bf16.msra.mxu0 %v3564
        %3973 = vmatprep.subr.bf16.mxu0 0
        %3974 = vmatpush1.bf16.msra.mxu0 %v3565
        %3975 = vmatprep.subr.bf16.mxu0 0
        %3976 = vmatpush1.bf16.msra.mxu0 %v3566
        %3977 = vmatprep.subr.bf16.mxu0 0
        %3978 = vmatpush1.bf16.msra.mxu0 %v3567
        %3979 = vmatprep.subr.bf16.mxu0 0
        %3980 = vmatpush1.bf16.msra.mxu0 %v3568
        %3981 = vmatprep.mubr.bf16.mxu0 %v2352
        %3982 = vmatmul.mubr.bf16.gmra.mrb[0].mxu0 %v2351
        %v3983 = vpop.f32.mrb[0].mxu0
        %v3984 = vadd.f32 %v2768, %v3983
        %v3985 = vpop.f32.mrb[0].mxu0
        %v3986 = vpop.f32.mrb[0].mxu0
        %v3987 = vpop.f32.mrb[0].mxu0
        %3988 = vdwg.mxu0
        %3989 = vmatprep.subr.bf16.mxu0 0
        %3990 = vmatpush1.bf16.msra.mxu0 %v3569
        %3991 = vmatprep.subr.bf16.mxu0 0
        %3992 = vmatpush1.bf16.msra.mxu0 %v3570
        %3993 = vmatprep.subr.bf16.mxu0 0
        %3994 = vmatpush1.bf16.msra.mxu0 %v3571
        %3995 = vmatprep.subr.bf16.mxu0 0
        %3996 = vmatpush1.bf16.msra.mxu0 %v3572
        %3997 = vmatprep.subr.bf16.mxu0 0
        %3998 = vmatpush1.bf16.msra.mxu0 %v3573
        %3999 = vmatprep.subr.bf16.mxu0 0
        %4000 = vmatpush1.bf16.msra.mxu0 %v3574
        %4001 = vmatprep.subr.bf16.mxu0 0
        %4002 = vmatpush1.bf16.msra.mxu0 %v3575
        %4003 = vmatprep.subr.bf16.mxu0 0
        %4004 = vmatpush1.bf16.msra.mxu0 %v3576
        %4005 = vmatprep.subr.bf16.mxu0 0
        %4006 = vmatpush1.bf16.msra.mxu0 %v3577
        %4007 = vmatprep.subr.bf16.mxu0 0
        %4008 = vmatpush1.bf16.msra.mxu0 %v3578
        %4009 = vmatprep.subr.bf16.mxu0 0
        %4010 = vmatpush1.bf16.msra.mxu0 %v3579
        %4011 = vmatprep.subr.bf16.mxu0 0
        %4012 = vmatpush1.bf16.msra.mxu0 %v3580
        %4013 = vmatprep.subr.bf16.mxu0 0
        %4014 = vmatpush1.bf16.msra.mxu0 %v3581
        %4015 = vmatprep.subr.bf16.mxu0 0
        %4016 = vmatpush1.bf16.msra.mxu0 %v3582
        %4017 = vmatprep.subr.bf16.mxu0 0
        %4018 = vmatpush1.bf16.msra.mxu0 %v3583
        %4019 = vmatprep.subr.bf16.mxu0 0
        %4020 = vmatpush1.bf16.msra.mxu0 %v3584
        %4021 = vmatprep.mubr.bf16.mxu0 %v2354
        %4022 = vmatmul.mubr.bf16.gmra.mrb[0].mxu0 %v2353
        %v4023 = vpop.f32.mrb[0].mxu0
        %v4024 = vadd.f32 %v3984, %v4023
        %v4025 = vpop.f32.mrb[0].mxu0
        %v4026 = vpop.f32.mrb[0].mxu0
        %v4027 = vpop.f32.mrb[0].mxu0
        %4028 = vdwg.mxu0
        %4029 = vmatprep.subr.bf16.mxu0 0
        %4030 = vmatpush1.bf16.msra.mxu0 %v3585
        %4031 = vmatprep.subr.bf16.mxu0 0
        %4032 = vmatpush1.bf16.msra.mxu0 %v3586
        %4033 = vmatprep.subr.bf16.mxu0 0
        %4034 = vmatpush1.bf16.msra.mxu0 %v3587
        %4035 = vmatprep.subr.bf16.mxu0 0
        %4036 = vmatpush1.bf16.msra.mxu0 %v3588
        %4037 = vmatprep.subr.bf16.mxu0 0
        %4038 = vmatpush1.bf16.msra.mxu0 %v3589
        %4039 = vmatprep.subr.bf16.mxu0 0
        %4040 = vmatpush1.bf16.msra.mxu0 %v3590
        %4041 = vmatprep.subr.bf16.mxu0 0
        %4042 = vmatpush1.bf16.msra.mxu0 %v3591
        %4043 = vmatprep.subr.bf16.mxu0 0
        %4044 = vmatpush1.bf16.msra.mxu0 %v3592
        %4045 = vmatprep.subr.bf16.mxu0 0
        %4046 = vmatpush1.bf16.msra.mxu0 %v3593
        %4047 = vmatprep.subr.bf16.mxu0 0
        %4048 = vmatpush1.bf16.msra.mxu0 %v3594
        %4049 = vmatprep.subr.bf16.mxu0 0
        %4050 = vmatpush1.bf16.msra.mxu0 %v3595
        %4051 = vmatprep.subr.bf16.mxu0 0
        %4052 = vmatpush1.bf16.msra.mxu0 %v3596
        %4053 = vmatprep.subr.bf16.mxu0 0
        %4054 = vmatpush1.bf16.msra.mxu0 %v3597
        %4055 = vmatprep.subr.bf16.mxu0 0
        %4056 = vmatpush1.bf16.msra.mxu0 %v3598
        %4057 = vmatprep.subr.bf16.mxu0 0
        %4058 = vmatpush1.bf16.msra.mxu0 %v3599
        %4059 = vmatprep.subr.bf16.mxu0 0
        %4060 = vmatpush1.bf16.msra.mxu0 %v3600
        %4061 = vmatprep.mubr.bf16.mxu0 %v2356
        %4062 = vmatmul.mubr.bf16.gmra.mrb[0].mxu0 %v2355
        %v4063 = vpop.f32.mrb[0].mxu0
        %v4064 = vadd.f32 %v4024, %v4063
        %v4065 = vpop.f32.mrb[0].mxu0
        %v4066 = vpop.f32.mrb[0].mxu0
        %v4067 = vpop.f32.mrb[0].mxu0
        %4068 = vdwg.mxu0
        %4069 = vmatprep.subr.bf16.mxu0 0
        %4070 = vmatpush1.bf16.msra.mxu0 %v3601
        %4071 = vmatprep.subr.bf16.mxu0 0
        %4072 = vmatpush1.bf16.msra.mxu0 %v3602
        %4073 = vmatprep.subr.bf16.mxu0 0
        %4074 = vmatpush1.bf16.msra.mxu0 %v3603
        %4075 = vmatprep.subr.bf16.mxu0 0
        %4076 = vmatpush1.bf16.msra.mxu0 %v3604
        %4077 = vmatprep.subr.bf16.mxu0 0
        %4078 = vmatpush1.bf16.msra.mxu0 %v3605
        %4079 = vmatprep.subr.bf16.mxu0 0
        %4080 = vmatpush1.bf16.msra.mxu0 %v3606
        %4081 = vmatprep.subr.bf16.mxu0 0
        %4082 = vmatpush1.bf16.msra.mxu0 %v3607
        %4083 = vmatprep.subr.bf16.mxu0 0
        %4084 = vmatpush1.bf16.msra.mxu0 %v3608
        %4085 = vmatprep.subr.bf16.mxu0 0
        %4086 = vmatpush1.bf16.msra.mxu0 %v3609
        %4087 = vmatprep.subr.bf16.mxu0 0
        %4088 = vmatpush1.bf16.msra.mxu0 %v3610
        %4089 = vmatprep.subr.bf16.mxu0 0
        %4090 = vmatpush1.bf16.msra.mxu0 %v3611
        %4091 = vmatprep.subr.bf16.mxu0 0
        %4092 = vmatpush1.bf16.msra.mxu0 %v3612
        %4093 = vmatprep.subr.bf16.mxu0 0
        %4094 = vmatpush1.bf16.msra.mxu0 %v3613
        %4095 = vmatprep.subr.bf16.mxu0 0
        %4096 = vmatpush1.bf16.msra.mxu0 %v3614
        %4097 = vmatprep.subr.bf16.mxu0 0
        %4098 = vmatpush1.bf16.msra.mxu0 %v3615
        %4099 = vmatprep.subr.bf16.mxu0 0
        %4100 = vmatpush1.bf16.msra.mxu0 %v3616
        %4101 = vmatprep.mubr.bf16.mxu0 %v2358
        %4102 = vmatmul.mubr.bf16.gmra.mrb[0].mxu0 %v2357
        %v4103 = vpop.f32.mrb[0].mxu0
        %v4104 = vadd.f32 %v4064, %v4103
        %v4105 = vpop.f32.mrb[0].mxu0
        %v4106 = vpop.f32.mrb[0].mxu0
        %v4107 = vpop.f32.mrb[0].mxu0
        %4108 = vdwg.mxu0
        %4109 = vmatprep.subr.bf16.mxu0 0
        %4110 = vmatpush1.bf16.msra.mxu0 %v3617
        %4111 = vmatprep.subr.bf16.mxu0 0
        %4112 = vmatpush1.bf16.msra.mxu0 %v3618
        %4113 = vmatprep.subr.bf16.mxu0 0
        %4114 = vmatpush1.bf16.msra.mxu0 %v3619
        %4115 = vmatprep.subr.bf16.mxu0 0
        %4116 = vmatpush1.bf16.msra.mxu0 %v3620
        %4117 = vmatprep.subr.bf16.mxu0 0
        %4118 = vmatpush1.bf16.msra.mxu0 %v3621
        %4119 = vmatprep.subr.bf16.mxu0 0
        %4120 = vmatpush1.bf16.msra.mxu0 %v3622
        %4121 = vmatprep.subr.bf16.mxu0 0
        %4122 = vmatpush1.bf16.msra.mxu0 %v3623
        %4123 = vmatprep.subr.bf16.mxu0 0
        %4124 = vmatpush1.bf16.msra.mxu0 %v3624
        %4125 = vmatprep.subr.bf16.mxu0 0
        %4126 = vmatpush1.bf16.msra.mxu0 %v3625
        %4127 = vmatprep.subr.bf16.mxu0 0
        %4128 = vmatpush1.bf16.msra.mxu0 %v3626
        %4129 = vmatprep.subr.bf16.mxu0 0
        %4130 = vmatpush1.bf16.msra.mxu0 %v3627
        %4131 = vmatprep.subr.bf16.mxu0 0
        %4132 = vmatpush1.bf16.msra.mxu0 %v3628
        %4133 = vmatprep.subr.bf16.mxu0 0
        %4134 = vmatpush1.bf16.msra.mxu0 %v3629
        %4135 = vmatprep.subr.bf16.mxu0 0
        %4136 = vmatpush1.bf16.msra.mxu0 %v3630
        %4137 = vmatprep.subr.bf16.mxu0 0
        %4138 = vmatpush1.bf16.msra.mxu0 %v3631
        %4139 = vmatprep.subr.bf16.mxu0 0
        %4140 = vmatpush1.bf16.msra.mxu0 %v3632
        %4141 = vmatprep.mubr.bf16.mxu0 %v2360
        %4142 = vmatmul.mubr.bf16.gmra.mrb[0].mxu0 %v2359
        %v4143 = vpop.f32.mrb[0].mxu0
        %v4144 = vadd.f32 %v4104, %v4143
        %v4145 = vpop.f32.mrb[0].mxu0
        %v4146 = vpop.f32.mrb[0].mxu0
        %v4147 = vpop.f32.mrb[0].mxu0
        %4148 = vdwg.mxu0
        %4149 = vmatprep.subr.bf16.mxu0 0
        %4150 = vmatpush1.bf16.msra.mxu0 %v3633
        %4151 = vmatprep.subr.bf16.mxu0 0
        %4152 = vmatpush1.bf16.msra.mxu0 %v3634
        %4153 = vmatprep.subr.bf16.mxu0 0
        %4154 = vmatpush1.bf16.msra.mxu0 %v3635
        %4155 = vmatprep.subr.bf16.mxu0 0
        %4156 = vmatpush1.bf16.msra.mxu0 %v3636
        %4157 = vmatprep.subr.bf16.mxu0 0
        %4158 = vmatpush1.bf16.msra.mxu0 %v3637
        %4159 = vmatprep.subr.bf16.mxu0 0
        %4160 = vmatpush1.bf16.msra.mxu0 %v3638
        %4161 = vmatprep.subr.bf16.mxu0 0
        %4162 = vmatpush1.bf16.msra.mxu0 %v3639
        %4163 = vmatprep.subr.bf16.mxu0 0
        %4164 = vmatpush1.bf16.msra.mxu0 %v3640
        %4165 = vmatprep.subr.bf16.mxu0 0
        %4166 = vmatpush1.bf16.msra.mxu0 %v3641
        %4167 = vmatprep.subr.bf16.mxu0 0
        %4168 = vmatpush1.bf16.msra.mxu0 %v3642
        %4169 = vmatprep.subr.bf16.mxu0 0
        %4170 = vmatpush1.bf16.msra.mxu0 %v3643
        %4171 = vmatprep.subr.bf16.mxu0 0
        %4172 = vmatpush1.bf16.msra.mxu0 %v3644
        %4173 = vmatprep.subr.bf16.mxu0 0
        %4174 = vmatpush1.bf16.msra.mxu0 %v3645
        %4175 = vmatprep.subr.bf16.mxu0 0
        %4176 = vmatpush1.bf16.msra.mxu0 %v3646
        %4177 = vmatprep.subr.bf16.mxu0 0
        %4178 = vmatpush1.bf16.msra.mxu0 %v3647
        %4179 = vmatprep.subr.bf16.mxu0 0
        %4180 = vmatpush1.bf16.msra.mxu0 %v3648
        %4181 = vmatprep.mubr.bf16.mxu0 %v2362
        %4182 = vmatmul.mubr.bf16.gmra.mrb[0].mxu0 %v2361
        %v4183 = vpop.f32.mrb[0].mxu0
        %v4184 = vadd.f32 %v4144, %v4183
        %v4185 = vpop.f32.mrb[0].mxu0
        %v4186 = vpop.f32.mrb[0].mxu0
        %v4187 = vpop.f32.mrb[0].mxu0
        %4188 = vdwg.mxu0
        %4189 = vmatprep.subr.bf16.mxu0 0
        %4190 = vmatpush1.bf16.msra.mxu0 %v3649
        %4191 = vmatprep.subr.bf16.mxu0 0
        %4192 = vmatpush1.bf16.msra.mxu0 %v3650
        %4193 = vmatprep.subr.bf16.mxu0 0
        %4194 = vmatpush1.bf16.msra.mxu0 %v3651
        %4195 = vmatprep.subr.bf16.mxu0 0
        %4196 = vmatpush1.bf16.msra.mxu0 %v3652
        %4197 = vmatprep.subr.bf16.mxu0 0
        %4198 = vmatpush1.bf16.msra.mxu0 %v3653
        %4199 = vmatprep.subr.bf16.mxu0 0
        %4200 = vmatpush1.bf16.msra.mxu0 %v3654
        %4201 = vmatprep.subr.bf16.mxu0 0
        %4202 = vmatpush1.bf16.msra.mxu0 %v3655
        %4203 = vmatprep.subr.bf16.mxu0 0
        %4204 = vmatpush1.bf16.msra.mxu0 %v3656
        %4205 = vmatprep.subr.bf16.mxu0 0
        %4206 = vmatpush1.bf16.msra.mxu0 %v3657
        %4207 = vmatprep.subr.bf16.mxu0 0
        %4208 = vmatpush1.bf16.msra.mxu0 %v3658
        %4209 = vmatprep.subr.bf16.mxu0 0
        %4210 = vmatpush1.bf16.msra.mxu0 %v3659
        %4211 = vmatprep.subr.bf16.mxu0 0
        %4212 = vmatpush1.bf16.msra.mxu0 %v3660
        %4213 = vmatprep.subr.bf16.mxu0 0
        %4214 = vmatpush1.bf16.msra.mxu0 %v3661
        %4215 = vmatprep.subr.bf16.mxu0 0
        %4216 = vmatpush1.bf16.msra.mxu0 %v3662
        %4217 = vmatprep.subr.bf16.mxu0 0
        %4218 = vmatpush1.bf16.msra.mxu0 %v3663
        %4219 = vmatprep.subr.bf16.mxu0 0
        %4220 = vmatpush1.bf16.msra.mxu0 %v3664
        %4221 = vmatprep.mubr.bf16.mxu0 %v2364
        %4222 = vmatmul.mubr.bf16.gmra.mrb[0].mxu0 %v2363
        %v4223 = vpop.f32.mrb[0].mxu0
        %v4224 = vadd.f32 %v4184, %v4223
        %v4225 = vpop.f32.mrb[0].mxu0
        %v4226 = vpop.f32.mrb[0].mxu0
        %v4227 = vpop.f32.mrb[0].mxu0
        %4228 = vdwg.mxu0
        %4229 = vmatprep.subr.bf16.mxu0 0
        %4230 = vmatpush1.bf16.msra.mxu0 %v3665
        %4231 = vmatprep.subr.bf16.mxu0 0
        %4232 = vmatpush1.bf16.msra.mxu0 %v3666
        %4233 = vmatprep.subr.bf16.mxu0 0
        %4234 = vmatpush1.bf16.msra.mxu0 %v3667
        %4235 = vmatprep.subr.bf16.mxu0 0
        %4236 = vmatpush1.bf16.msra.mxu0 %v3668
        %4237 = vmatprep.subr.bf16.mxu0 0
        %4238 = vmatpush1.bf16.msra.mxu0 %v3669
        %4239 = vmatprep.subr.bf16.mxu0 0
        %4240 = vmatpush1.bf16.msra.mxu0 %v3670
        %4241 = vmatprep.subr.bf16.mxu0 0
        %4242 = vmatpush1.bf16.msra.mxu0 %v3671
        %4243 = vmatprep.subr.bf16.mxu0 0
        %4244 = vmatpush1.bf16.msra.mxu0 %v3672
        %4245 = vmatprep.subr.bf16.mxu0 0
        %4246 = vmatpush1.bf16.msra.mxu0 %v3673
        %4247 = vmatprep.subr.bf16.mxu0 0
        %4248 = vmatpush1.bf16.msra.mxu0 %v3674
        %4249 = vmatprep.subr.bf16.mxu0 0
        %4250 = vmatpush1.bf16.msra.mxu0 %v3675
        %4251 = vmatprep.subr.bf16.mxu0 0
        %4252 = vmatpush1.bf16.msra.mxu0 %v3676
        %4253 = vmatprep.subr.bf16.mxu0 0
        %4254 = vmatpush1.bf16.msra.mxu0 %v3677
        %4255 = vmatprep.subr.bf16.mxu0 0
        %4256 = vmatpush1.bf16.msra.mxu0 %v3678
        %4257 = vmatprep.subr.bf16.mxu0 0
        %4258 = vmatpush1.bf16.msra.mxu0 %v3679
        %4259 = vmatprep.subr.bf16.mxu0 0
        %4260 = vmatpush1.bf16.msra.mxu0 %v3680
        %4261 = vmatprep.mubr.bf16.mxu0 %v2366
        %4262 = vmatmul.mubr.bf16.gmra.mrb[0].mxu0 %v2365
        %v4263 = vpop.f32.mrb[0].mxu0
        %v4264 = vadd.f32 %v4224, %v4263
        %v4265 = vpop.f32.mrb[0].mxu0
        %v4266 = vpop.f32.mrb[0].mxu0
        %v4267 = vpop.f32.mrb[0].mxu0
        %4268 = vdwg.mxu0
        %4269 = vmatprep.subr.bf16.mxu0 0
        %4270 = vmatpush1.bf16.msra.mxu0 %v3681
        %4271 = vmatprep.subr.bf16.mxu0 0
        %4272 = vmatpush1.bf16.msra.mxu0 %v3682
        %4273 = vmatprep.subr.bf16.mxu0 0
        %4274 = vmatpush1.bf16.msra.mxu0 %v3683
        %4275 = vmatprep.subr.bf16.mxu0 0
        %4276 = vmatpush1.bf16.msra.mxu0 %v3684
        %4277 = vmatprep.subr.bf16.mxu0 0
        %4278 = vmatpush1.bf16.msra.mxu0 %v3685
        %4279 = vmatprep.subr.bf16.mxu0 0
        %4280 = vmatpush1.bf16.msra.mxu0 %v3686
        %4281 = vmatprep.subr.bf16.mxu0 0
        %4282 = vmatpush1.bf16.msra.mxu0 %v3687
        %4283 = vmatprep.subr.bf16.mxu0 0
        %4284 = vmatpush1.bf16.msra.mxu0 %v3688
        %4285 = vmatprep.subr.bf16.mxu0 0
        %4286 = vmatpush1.bf16.msra.mxu0 %v3689
        %4287 = vmatprep.subr.bf16.mxu0 0
        %4288 = vmatpush1.bf16.msra.mxu0 %v3690
        %4289 = vmatprep.subr.bf16.mxu0 0
        %4290 = vmatpush1.bf16.msra.mxu0 %v3691
        %4291 = vmatprep.subr.bf16.mxu0 0
        %4292 = vmatpush1.bf16.msra.mxu0 %v3692
        %4293 = vmatprep.subr.bf16.mxu0 0
        %4294 = vmatpush1.bf16.msra.mxu0 %v3693
        %4295 = vmatprep.subr.bf16.mxu0 0
        %4296 = vmatpush1.bf16.msra.mxu0 %v3694
        %4297 = vmatprep.subr.bf16.mxu0 0
        %4298 = vmatpush1.bf16.msra.mxu0 %v3695
        %4299 = vmatprep.subr.bf16.mxu0 0
        %4300 = vmatpush1.bf16.msra.mxu0 %v3696
        %4301 = vmatprep.mubr.bf16.mxu0 %v2368
        %4302 = vmatmul.mubr.bf16.gmra.mrb[0].mxu0 %v2367
        %v4303 = vpop.f32.mrb[0].mxu0
        %v4304 = vadd.f32 %v4264, %v4303
        %v4305 = vpop.f32.mrb[0].mxu0
        %v4306 = vpop.f32.mrb[0].mxu0
        %v4307 = vpop.f32.mrb[0].mxu0
        %4308 = vdwg.mxu0
        %4309 = vmatprep.subr.bf16.mxu0 0
        %4310 = vmatpush1.bf16.msra.mxu0 %v3697
        %4311 = vmatprep.subr.bf16.mxu0 0
        %4312 = vmatpush1.bf16.msra.mxu0 %v3698
        %4313 = vmatprep.subr.bf16.mxu0 0
        %4314 = vmatpush1.bf16.msra.mxu0 %v3699
        %4315 = vmatprep.subr.bf16.mxu0 0
        %4316 = vmatpush1.bf16.msra.mxu0 %v3700
        %4317 = vmatprep.subr.bf16.mxu0 0
        %4318 = vmatpush1.bf16.msra.mxu0 %v3701
        %4319 = vmatprep.subr.bf16.mxu0 0
        %4320 = vmatpush1.bf16.msra.mxu0 %v3702
        %4321 = vmatprep.subr.bf16.mxu0 0
        %4322 = vmatpush1.bf16.msra.mxu0 %v3703
        %4323 = vmatprep.subr.bf16.mxu0 0
        %4324 = vmatpush1.bf16.msra.mxu0 %v3704
        %4325 = vmatprep.subr.bf16.mxu0 0
        %4326 = vmatpush1.bf16.msra.mxu0 %v3705
        %4327 = vmatprep.subr.bf16.mxu0 0
        %4328 = vmatpush1.bf16.msra.mxu0 %v3706
        %4329 = vmatprep.subr.bf16.mxu0 0
        %4330 = vmatpush1.bf16.msra.mxu0 %v3707
        %4331 = vmatprep.subr.bf16.mxu0 0
        %4332 = vmatpush1.bf16.msra.mxu0 %v3708
        %4333 = vmatprep.subr.bf16.mxu0 0
        %4334 = vmatpush1.bf16.msra.mxu0 %v3709
        %4335 = vmatprep.subr.bf16.mxu0 0
        %4336 = vmatpush1.bf16.msra.mxu0 %v3710
        %4337 = vmatprep.subr.bf16.mxu0 0
        %4338 = vmatpush1.bf16.msra.mxu0 %v3711
        %4339 = vmatprep.subr.bf16.mxu0 0
        %4340 = vmatpush1.bf16.msra.mxu0 %v3712
        %4341 = vmatprep.mubr.bf16.mxu0 %v2370
        %4342 = vmatmul.mubr.bf16.gmra.mrb[0].mxu0 %v2369
        %v4343 = vpop.f32.mrb[0].mxu0
        %v4344 = vadd.f32 %v4304, %v4343
        %v4345 = vpop.f32.mrb[0].mxu0
        %v4346 = vpop.f32.mrb[0].mxu0
        %v4347 = vpop.f32.mrb[0].mxu0
        %4348 = vdwg.mxu0
        %4349 = vmatprep.subr.bf16.mxu0 0
        %4350 = vmatpush1.bf16.msra.mxu0 %v3713
        %4351 = vmatprep.subr.bf16.mxu0 0
        %4352 = vmatpush1.bf16.msra.mxu0 %v3714
        %4353 = vmatprep.subr.bf16.mxu0 0
        %4354 = vmatpush1.bf16.msra.mxu0 %v3715
        %4355 = vmatprep.subr.bf16.mxu0 0
        %4356 = vmatpush1.bf16.msra.mxu0 %v3716
        %4357 = vmatprep.subr.bf16.mxu0 0
        %4358 = vmatpush1.bf16.msra.mxu0 %v3717
        %4359 = vmatprep.subr.bf16.mxu0 0
        %4360 = vmatpush1.bf16.msra.mxu0 %v3718
        %4361 = vmatprep.subr.bf16.mxu0 0
        %4362 = vmatpush1.bf16.msra.mxu0 %v3719
        %4363 = vmatprep.subr.bf16.mxu0 0
        %4364 = vmatpush1.bf16.msra.mxu0 %v3720
        %4365 = vmatprep.subr.bf16.mxu0 0
        %4366 = vmatpush1.bf16.msra.mxu0 %v3721
        %4367 = vmatprep.subr.bf16.mxu0 0
        %4368 = vmatpush1.bf16.msra.mxu0 %v3722
        %4369 = vmatprep.subr.bf16.mxu0 0
        %4370 = vmatpush1.bf16.msra.mxu0 %v3723
        %4371 = vmatprep.subr.bf16.mxu0 0
        %4372 = vmatpush1.bf16.msra.mxu0 %v3724
        %4373 = vmatprep.subr.bf16.mxu0 0
        %4374 = vmatpush1.bf16.msra.mxu0 %v3725
        %4375 = vmatprep.subr.bf16.mxu0 0
        %4376 = vmatpush1.bf16.msra.mxu0 %v3726
        %4377 = vmatprep.subr.bf16.mxu0 0
        %4378 = vmatpush1.bf16.msra.mxu0 %v3727
        %4379 = vmatprep.subr.bf16.mxu0 0
        %4380 = vmatpush1.bf16.msra.mxu0 %v3728
        %4381 = vmatprep.mubr.bf16.mxu0 %v2372
        %4382 = vmatmul.mubr.bf16.gmra.mrb[0].mxu0 %v2371
        %v4383 = vpop.f32.mrb[0].mxu0
        %v4384 = vadd.f32 %v4344, %v4383
        %v4385 = vpop.f32.mrb[0].mxu0
        %v4386 = vpop.f32.mrb[0].mxu0
        %v4387 = vpop.f32.mrb[0].mxu0
        %4388 = vdwg.mxu0
        %4389 = vmatprep.subr.bf16.mxu0 0
        %4390 = vmatpush1.bf16.msra.mxu0 %v3729
        %4391 = vmatprep.subr.bf16.mxu0 0
        %4392 = vmatpush1.bf16.msra.mxu0 %v3730
        %4393 = vmatprep.subr.bf16.mxu0 0
        %4394 = vmatpush1.bf16.msra.mxu0 %v3731
        %4395 = vmatprep.subr.bf16.mxu0 0
        %4396 = vmatpush1.bf16.msra.mxu0 %v3732
        %4397 = vmatprep.subr.bf16.mxu0 0
        %4398 = vmatpush1.bf16.msra.mxu0 %v3733
        %4399 = vmatprep.subr.bf16.mxu0 0
        %4400 = vmatpush1.bf16.msra.mxu0 %v3734
        %4401 = vmatprep.subr.bf16.mxu0 0
        %4402 = vmatpush1.bf16.msra.mxu0 %v3735
        %4403 = vmatprep.subr.bf16.mxu0 0
        %4404 = vmatpush1.bf16.msra.mxu0 %v3736
        %4405 = vmatprep.subr.bf16.mxu0 0
        %4406 = vmatpush1.bf16.msra.mxu0 %v3737
        %4407 = vmatprep.subr.bf16.mxu0 0
        %4408 = vmatpush1.bf16.msra.mxu0 %v3738
        %4409 = vmatprep.subr.bf16.mxu0 0
        %4410 = vmatpush1.bf16.msra.mxu0 %v3739
        %4411 = vmatprep.subr.bf16.mxu0 0
        %4412 = vmatpush1.bf16.msra.mxu0 %v3740
        %4413 = vmatprep.subr.bf16.mxu0 0
        %4414 = vmatpush1.bf16.msra.mxu0 %v3741
        %4415 = vmatprep.subr.bf16.mxu0 0
        %4416 = vmatpush1.bf16.msra.mxu0 %v3742
        %4417 = vmatprep.subr.bf16.mxu0 0
        %4418 = vmatpush1.bf16.msra.mxu0 %v3743
        %4419 = vmatprep.subr.bf16.mxu0 0
        %4420 = vmatpush1.bf16.msra.mxu0 %v3744
        %4421 = vmatprep.mubr.bf16.mxu0 %v2374
        %4422 = vmatmul.mubr.bf16.gmra.mrb[0].mxu0 %v2373
        %v4423 = vpop.f32.mrb[0].mxu0
        %v4424 = vadd.f32 %v4384, %v4423
        %v4425 = vpop.f32.mrb[0].mxu0
        %v4426 = vpop.f32.mrb[0].mxu0
        %v4427 = vpop.f32.mrb[0].mxu0
        %4428 = vdwg.mxu0
        %4429 = vmatprep.subr.bf16.mxu0 0
        %4430 = vmatpush1.bf16.msra.mxu0 %v3745
        %4431 = vmatprep.subr.bf16.mxu0 0
        %4432 = vmatpush1.bf16.msra.mxu0 %v3746
        %4433 = vmatprep.subr.bf16.mxu0 0
        %4434 = vmatpush1.bf16.msra.mxu0 %v3747
        %4435 = vmatprep.subr.bf16.mxu0 0
        %4436 = vmatpush1.bf16.msra.mxu0 %v3748
        %4437 = vmatprep.subr.bf16.mxu0 0
        %4438 = vmatpush1.bf16.msra.mxu0 0
        %4439 = vmatprep.subr.bf16.mxu0 0
        %4440 = vmatpush1.bf16.msra.mxu0 0
        %4441 = vmatprep.subr.bf16.mxu0 0
        %4442 = vmatpush1.bf16.msra.mxu0 0
        %4443 = vmatprep.subr.bf16.mxu0 0
        %4444 = vmatpush1.bf16.msra.mxu0 0
        %4445 = vmatprep.subr.bf16.mxu0 0
        %4446 = vmatpush1.bf16.msra.mxu0 0
        %4447 = vmatprep.subr.bf16.mxu0 0
        %4448 = vmatpush1.bf16.msra.mxu0 0
        %4449 = vmatprep.subr.bf16.mxu0 0
        %4450 = vmatpush1.bf16.msra.mxu0 0
        %4451 = vmatprep.subr.bf16.mxu0 0
        %4452 = vmatpush1.bf16.msra.mxu0 0
        %4453 = vmatprep.subr.bf16.mxu0 0
        %4454 = vmatpush1.bf16.msra.mxu0 0
        %4455 = vmatprep.subr.bf16.mxu0 0
        %4456 = vmatpush1.bf16.msra.mxu0 0
        %4457 = vmatprep.subr.bf16.mxu0 0
        %4458 = vmatpush1.bf16.msra.mxu0 0
        %4459 = vmatprep.subr.bf16.mxu0 0
        %4460 = vmatpush1.bf16.msra.mxu0 0
        %4461 = vmatprep.mubr.bf16.mxu0 0
        %4462 = vmatmul.mubr.bf16.gmra.mrb[0].mxu0 %v3947
        %v4463 = vpop.f32.mrb[0].mxu0
        %v4464 = vadd.f32 %v4424, %v4463
        %v4465 = vpop.f32.mrb[0].mxu0
        %v4466 = vpop.f32.mrb[0].mxu0
        %v4467 = vpop.f32.mrb[0].mxu0
        %4468 = vdwg.mxu0
        %4469 = vst [vmem:[%s216] sm:$0x1] %v4464
        %s4470 = sand.u32 %s137, 1
        %s4471 = scalar_lea.sflag [#allocation8], %s4470
        %s4472 = sand.u32 %s137, 1
        %s4473 = scalar_lea.vmem [#allocation7], %s4472
        // Predicated region
        $region41: #{encoder_forward.1} parent=39 // pred_check
          %p4474 = pneg %p147
        $region42: #{encoder_forward.1} parent=39 // pred_check_branch
          %4476 = sbr.rel (%p4474) target = $region44
        $region43: #{encoder_forward.1} parent=39 // pred_region
          %s4478 = ssub.s32 16, 16
          %4479 = vsyncadd %s4471, %s4478
          %s4480 = smul.addr %s19, 16
          %s4481 = scalar_lea.hbm %s5, %s4480
          %s4483 = sshll.u32 %s4473, 4
          %s4484 = int_to_ptr.vmem [resolvable:$true] %s4483
          %4486 = dma.vmem_to_hbm [thread:$0]  %s4484, 16, %s4481, %s4471
        $region44: #{encoder_forward.1} parent=39 // pred_fallthru
          _
      $region40: #{encoder_forward.1} parent=5 // pred_fallthru
        _
      %p4487 = scmp.le.s32.totalorder 2, %s14
      // Predicated region
      $region45: #{encoder_forward.1} parent=5 // pred_check
        %p4488 = pneg %p4487
      $region46: #{encoder_forward.1} parent=5 // pred_check_branch
        %4490 = sbr.rel (%p4488) target = $region48
      $region47: #{encoder_forward.1} parent=5 // pred_region
        %s4491 = ssub.s32 %s14, 2
        // Predicated region
        $region49: #{encoder_forward.1} parent=47 // pred_check
          %p4492 = pneg %p153
        $region50: #{encoder_forward.1} parent=47 // pred_check_branch
          %4494 = sbr.rel (%p4492) target = $region52
        $region51: #{encoder_forward.1} parent=47 // pred_region
          %s4495 = sand.u32 %s138, 1
          %s4496 = scalar_lea.sflag [#allocation8], %s4495
          %s4497 = sand.u32 %s138, 1
          %s4498 = scalar_lea.vmem [#allocation7], %s4497
          %4499 = dma.done %s4496, 16
        $region52: #{encoder_forward.1} parent=47 // pred_fallthru
          _
      $region48: #{encoder_forward.1} parent=5 // pred_fallthru
        _
    $region6: #{encoder_forward.1} parent=1 // loop_footer
      %s18 = sadd.s32 1, %s14
    $region7: #{encoder_forward.1} parent=1 // loop_footer_branch
      %13 = sbr.rel target = $region3
    $region8: #{encoder_forward.1} parent=1 // loop_exit
      _
    %4500 = vsyncpa [#allocation8], 1
    %s4501 = scalar_lea.sflag [#allocation8], 1
    %4502 = vsyncpa %s4501, 1

</llo_original>
